<compile_context>
chip_gen: v7x
topology: tpu7x:2x2x1
jax: 0.10.0
libtpu: 0.0.40
codegen_flags: <defaults>
</compile_context>

<pallas_src>
import functools

import jax
import jax.numpy as jnp
from jax import lax
from jax.experimental import pallas as pl
from jax.experimental.pallas import tpu as pltpu


def _round_up(x, m):
    return ((x + m - 1) // m) * m


def _kd_kernel(qs_ref, qt_ref, kst_ref, ktt_ref, out_ref,
               qn_ref, qts_ref, mt_ref, zt_ref, a_ref, ms_ref, zs_ref,
               *, inv_temp_s, inv_temp_t, n_valid, tile_n, mask_cols):
    n_idx = pl.program_id(1)
    n_last = pl.num_programs(1) - 1

    # ---- init (first N tile of this B tile) --------------------------------
    @pl.when(n_idx == 0)
    def _init():
        qs = qs_ref[...].astype(jnp.float32)
        # torch.normalize: x / max(||x||, eps) == x * rsqrt(max(||x||^2, eps^2));
        # fold 1/temp_student into the same factor (free).
        inv_qnorm = lax.rsqrt(
            jnp.maximum(jnp.sum(qs * qs, axis=-1, keepdims=True), jnp.float32(1e-24)))
        qn_ref[...] = qs * (inv_qnorm * jnp.float32(inv_temp_s))
        # fold 1/temp_teacher into the teacher queries once per B tile.
        qts_ref[...] = qt_ref[...].astype(jnp.float32) * jnp.float32(inv_temp_t)
        mt_ref[...] = jnp.full_like(mt_ref, -jnp.inf)
        zt_ref[...] = jnp.zeros_like(zt_ref)
        a_ref[...] = jnp.zeros_like(a_ref)
        ms_ref[...] = jnp.full_like(ms_ref, -jnp.inf)
        zs_ref[...] = jnp.zeros_like(zs_ref)

    # ---- per (B tile, N tile) work ------------------------------------------
    ktt = ktt_ref[...].astype(jnp.float32)   # teacher keys^T, layout [D, TILE_N]
    kst = kst_ref[...].astype(jnp.float32)   # student keys^T (pre-normalized), [D, TILE_N]

    # keys are pre-transposed and temps pre-folded -> plain MXU matmuls, no extra VPU mul
    sim_t = jnp.dot(qts_ref[...], ktt, preferred_element_type=jnp.float32)
    sim_s = jnp.dot(qn_ref[...], kst, preferred_element_type=jnp.float32)

    if mask_cols:  # static: emitted only when N was padded to a multiple of TILE_N
        col = n_idx * tile_n + lax.broadcasted_iota(jnp.int32, sim_t.shape, 1)
        valid = col < n_valid
        neg = jnp.float32(-1e30)
        sim_t = jnp.where(valid, sim_t, neg)
        sim_s = jnp.where(valid, sim_s, neg)

    # online teacher softmax stats + p_t-weighted (sim_t - sim_s) accumulator
    mt_old = mt_ref[...]
    mt_new = jnp.maximum(mt_old, jnp.max(sim_t, axis=-1, keepdims=True))
    alpha_t = jnp.exp(mt_old - mt_new)
    e_t = jnp.exp(sim_t - mt_new)            # single teacher exp pass, reused for Z_t and A
    zt_ref[...] = alpha_t * zt_ref[...] + jnp.sum(e_t, axis=-1, keepdims=True)
    a_ref[...] = alpha_t * a_ref[...] + jnp.sum(e_t * (sim_t - sim_s),
                                                axis=-1, keepdims=True)
    mt_ref[...] = mt_new

    # online student log-sum-exp
    ms_old = ms_ref[...]
    ms_new = jnp.maximum(ms_old, jnp.max(sim_s, axis=-1, keepdims=True))
    zs_ref[...] = (jnp.exp(ms_old - ms_new) * zs_ref[...]
                   + jnp.sum(jnp.exp(sim_s - ms_new), axis=-1, keepdims=True))
    ms_ref[...] = ms_new

    # ---- finalize (last N tile): per-row KL ---------------------------------
    @pl.when(n_idx == n_last)
    def _fin():
        zt = zt_ref[...]
        # sum_j p_t (lp_t - lp_s) = A/Z_t - (m_t + log Z_t) + (m_s + log Z_s)
        out_ref[...] = (a_ref[...] / zt
                        - (mt_ref[...] + jnp.log(zt))
                        + (ms_ref[...] + jnp.log(zs_ref[...])))


def kd_loss_naive(queries_student, keys_student, queries_teacher, keys_teacher,
                  index=None, *, temp_student=1.0, temp_teacher=1.0,
                  tile_b=128, tile_n=512, interpret=False):
    del index  # unused in forward()
    B, D = queries_student.shape
    N = keys_student.shape[0]
    f32 = jnp.float32

    tile_b = min(tile_b, _round_up(B, 8))
    tile_n = min(tile_n, _round_up(N, 128))
    Bp = _round_up(B, tile_b)
    Np = _round_up(N, tile_n)
    Dp = _round_up(D, 128)

    def pad2(x, rows, cols):
        x = x.astype(f32)
        return jnp.pad(x, ((0, rows - x.shape[0]), (0, cols - x.shape[1])))

    qs = pad2(queries_student, Bp, Dp)
    qt = pad2(queries_teacher, Bp, Dp)

    # Student keys: normalize once here (torch eps semantics), then lay both key
    # matrices out as [D, N] so the kernel never transposes.
    ks = keys_student.astype(f32)
    ks = ks * lax.rsqrt(jnp.maximum(jnp.sum(ks * ks, axis=-1, keepdims=True),
                                    f32(1e-24)))
    kst = pad2(ks, Np, Dp).T                 # [Dp, Np]
    ktt = pad2(keys_teacher, Np, Dp).T       # [Dp, Np]

    grid = (Bp // tile_b, Np // tile_n)
    kernel = functools.partial(
        _kd_kernel,
        inv_temp_s=1.0 / float(temp_student),
        inv_temp_t=1.0 / float(temp_teacher),
        n_valid=N, tile_n=tile_n, mask_cols=(Np != N))

    row_loss = pl.pallas_call(
        kernel,
        out_shape=jax.ShapeDtypeStruct((Bp, 1), f32),
        grid_spec=pltpu.PrefetchScalarGridSpec(
            num_scalar_prefetch=0,
            grid=grid,
            in_specs=[
                pl.BlockSpec((tile_b, Dp), lambda i, n: (i, 0)),   # student queries
                pl.BlockSpec((tile_b, Dp), lambda i, n: (i, 0)),   # teacher queries
                pl.BlockSpec((Dp, tile_n), lambda i, n: (0, n)),   # student keys^T (normalized)
                pl.BlockSpec((Dp, tile_n), lambda i, n: (0, n)),   # teacher keys^T
            ],
            out_specs=pl.BlockSpec((tile_b, 1), lambda i, n: (i, 0)),
            scratch_shapes=[
                pltpu.VMEM((tile_b, Dp), f32),   # normalized student query tile (x 1/temp_s)
                pltpu.VMEM((tile_b, Dp), f32),   # teacher query tile (x 1/temp_t)
                pltpu.VMEM((tile_b, 1), f32),    # m_t  (running teacher max)
                pltpu.VMEM((tile_b, 1), f32),    # Z_t  (running teacher sum-exp)
                pltpu.VMEM((tile_b, 1), f32),    # A    (running sum e_t*(sim_t-sim_s))
                pltpu.VMEM((tile_b, 1), f32),    # m_s  (running student max)
                pltpu.VMEM((tile_b, 1), f32),    # Z_s  (running student sum-exp)
            ],
        ),
        compiler_params=pltpu.CompilerParams(
            dimension_semantics=("parallel", "arbitrary"),
            vmem_limit_bytes=32 * 1024 * 1024),
        interpret=interpret,
    )(qs, qt, kst, ktt)

    # Padded rows contribute exactly 0; 'batchmean' divides by the true batch size.
    return jnp.sum(row_loss) / f32(B)


def kd_loss_ref(qs, ks, qt, kt, *, temp_student=1.0, temp_teacher=1.0):
    # pure-JAX reference matching the PyTorch module
    eps = 1e-12
    qs_n = qs / jnp.maximum(jnp.linalg.norm(qs, axis=-1, keepdims=True), eps)
    ks_n = ks / jnp.maximum(jnp.linalg.norm(ks, axis=-1, keepdims=True), eps)
    lp_t = jax.nn.log_softmax((qt @ kt.T) / temp_teacher, axis=-1)
    lp_s = jax.nn.log_softmax((qs_n @ ks_n.T) / temp_student, axis=-1)
    return jnp.sum(jnp.exp(lp_t) * (lp_t - lp_s)) / qs.shape[0]


if __name__ == "__main__":
    key = jax.random.PRNGKey(0)
    k1, k2, k3, k4 = jax.random.split(key, 4)

    # ragged on purpose: exercises D padding (48->128), N padding/masking (300->384)
    # and B padding (160->256, 2 parallel B tiles); non-unit temps exercise folding.
    B, N, D = 160, 300, 48
    queries_student = jax.random.normal(k1, (B, D), dtype=jnp.float32)
    keys_student = jax.random.normal(k2, (N, D), dtype=jnp.float32)
    queries_teacher = jax.random.normal(k3, (B, D), dtype=jnp.float32)
    keys_teacher = jax.random.normal(k4, (N, D), dtype=jnp.float32)

    loss = kd_loss_naive(queries_student, keys_student,
                         queries_teacher, keys_teacher,
                         temp_student=0.5, temp_teacher=2.0)
    jax.block_until_ready(loss)

    ref = kd_loss_ref(queries_student, keys_student,
                      queries_teacher, keys_teacher,
                      temp_student=0.5, temp_teacher=2.0)
    assert jnp.allclose(loss, ref, rtol=1e-4, atol=1e-4), (loss, ref)

    print("KERNEL_OK")
</pallas_src>

<mosaic_0001>
module attributes {stable_mosaic.version = 11 : i64} {
  func.func @_kd_kernel(%arg0: i32, %arg1: i32, %arg2: memref<128x128xf32, #tpu.memory_space<vmem>>, %arg3: memref<128x128xf32, #tpu.memory_space<vmem>>, %arg4: memref<128x384xf32, #tpu.memory_space<vmem>>, %arg5: memref<128x384xf32, #tpu.memory_space<vmem>>, %arg6: memref<128x1xf32, #tpu.memory_space<vmem>>, %arg7: memref<128x128xf32, #tpu.memory_space<vmem>>, %arg8: memref<128x128xf32, #tpu.memory_space<vmem>>, %arg9: memref<128x1xf32, #tpu.memory_space<vmem>>, %arg10: memref<128x1xf32, #tpu.memory_space<vmem>>, %arg11: memref<128x1xf32, #tpu.memory_space<vmem>>, %arg12: memref<128x1xf32, #tpu.memory_space<vmem>>, %arg13: memref<128x1xf32, #tpu.memory_space<vmem>>) attributes {dimension_semantics = [#tpu.dimension_semantics<parallel>, #tpu.dimension_semantics<arbitrary>], iteration_bounds = array<i64: 2, 1>, scalar_prefetch = 0 : i64, scratch_operands = 7 : i64, tpu.core_type = #tpu.core_type<tc>, window_params = [{transform_indices = @transform_0, window_bounds = array<i64: 128, 128>}, {transform_indices = @transform_1, window_bounds = array<i64: 128, 128>}, {transform_indices = @transform_2, window_bounds = array<i64: 128, 384>}, {transform_indices = @transform_3, window_bounds = array<i64: 128, 384>}, {transform_indices = @transform_4, window_bounds = array<i64: 128, 1>}]} {
    %c0_i32 = arith.constant 0 : i32
    %0 = arith.cmpi eq, %arg1, %c0_i32 : i32
    %1 = arith.extui %0 : i1 to i32
    %c0_i32_0 = arith.constant 0 : i32
    %2 = arith.cmpi ne, %1, %c0_i32_0 : i32
    scf.if %2 {
      %c0_38 = arith.constant 0 : index
      %c0_39 = arith.constant 0 : index
      %62 = vector.load %arg2[%c0_38, %c0_39] : memref<128x128xf32, #tpu.memory_space<vmem>>, vector<128x128xf32>
      %63 = arith.mulf %62, %62 : vector<128x128xf32>
      %cst_40 = arith.constant dense<0.000000e+00> : vector<128xf32>
      %64 = vector.multi_reduction <add>, %63, %cst_40 [1] : vector<128x128xf32> to vector<128xf32>
      %65 = vector.shape_cast %64 : vector<128xf32> to vector<128x1xf32>
      %cst_41 = arith.constant 1.000000e-24 : f32
      %66 = vector.broadcast %cst_41 : f32 to vector<128x1xf32>
      %67 = arith.maximumf %65, %66 : vector<128x1xf32>
      %68 = math.rsqrt %67 : vector<128x1xf32>
      %cst_42 = arith.constant 2.000000e+00 : f32
      %69 = vector.broadcast %cst_42 : f32 to vector<128x1xf32>
      %70 = arith.mulf %68, %69 : vector<128x1xf32>
      %71 = vector.broadcast %70 : vector<128x1xf32> to vector<128x128xf32>
      %72 = arith.mulf %62, %71 : vector<128x128xf32>
      %c0_43 = arith.constant 0 : index
      %c0_44 = arith.constant 0 : index
      %73 = vector.load %arg7[%c0_43, %c0_44] : memref<128x128xf32, #tpu.memory_space<vmem>>, vector<128x128xf32>
      tpu.vector_store %arg7[%c0_43, %c0_44], %72 {strides = array<i32>} : memref<128x128xf32, #tpu.memory_space<vmem>>, vector<128x128xf32>,
      %c0_45 = arith.constant 0 : index
      %c0_46 = arith.constant 0 : index
      %74 = vector.load %arg3[%c0_45, %c0_46] : memref<128x128xf32, #tpu.memory_space<vmem>>, vector<128x128xf32>
      %cst_47 = arith.constant 5.000000e-01 : f32
      %75 = vector.broadcast %cst_47 : f32 to vector<128x128xf32>
      %76 = arith.mulf %74, %75 : vector<128x128xf32>
      %c0_48 = arith.constant 0 : index
      %c0_49 = arith.constant 0 : index
      %77 = vector.load %arg8[%c0_48, %c0_49] : memref<128x128xf32, #tpu.memory_space<vmem>>, vector<128x128xf32>
      tpu.vector_store %arg8[%c0_48, %c0_49], %76 {strides = array<i32>} : memref<128x128xf32, #tpu.memory_space<vmem>>, vector<128x128xf32>,
      %cst_50 = arith.constant 0xFF800000 : f32
      %78 = vector.broadcast %cst_50 : f32 to vector<128x1xf32>
      %c0_51 = arith.constant 0 : index
      %c0_52 = arith.constant 0 : index
      %79 = vector.load %arg9[%c0_51, %c0_52] : memref<128x1xf32, #tpu.memory_space<vmem>>, vector<128x1xf32>
      tpu.vector_store %arg9[%c0_51, %c0_52], %78 {strides = array<i32>} : memref<128x1xf32, #tpu.memory_space<vmem>>, vector<128x1xf32>,
      %cst_53 = arith.constant 0.000000e+00 : f32
      %80 = vector.broadcast %cst_53 : f32 to vector<128x1xf32>
      %c0_54 = arith.constant 0 : index
      %c0_55 = arith.constant 0 : index
      %81 = vector.load %arg10[%c0_54, %c0_55] : memref<128x1xf32, #tpu.memory_space<vmem>>, vector<128x1xf32>
      tpu.vector_store %arg10[%c0_54, %c0_55], %80 {strides = array<i32>} : memref<128x1xf32, #tpu.memory_space<vmem>>, vector<128x1xf32>,
      %cst_56 = arith.constant 0.000000e+00 : f32
      %82 = vector.broadcast %cst_56 : f32 to vector<128x1xf32>
      %c0_57 = arith.constant 0 : index
      %c0_58 = arith.constant 0 : index
      %83 = vector.load %arg11[%c0_57, %c0_58] : memref<128x1xf32, #tpu.memory_space<vmem>>, vector<128x1xf32>
      tpu.vector_store %arg11[%c0_57, %c0_58], %82 {strides = array<i32>} : memref<128x1xf32, #tpu.memory_space<vmem>>, vector<128x1xf32>,
      %cst_59 = arith.constant 0xFF800000 : f32
      %84 = vector.broadcast %cst_59 : f32 to vector<128x1xf32>
      %c0_60 = arith.constant 0 : index
      %c0_61 = arith.constant 0 : index
      %85 = vector.load %arg12[%c0_60, %c0_61] : memref<128x1xf32, #tpu.memory_space<vmem>>, vector<128x1xf32>
      tpu.vector_store %arg12[%c0_60, %c0_61], %84 {strides = array<i32>} : memref<128x1xf32, #tpu.memory_space<vmem>>, vector<128x1xf32>,
      %cst_62 = arith.constant 0.000000e+00 : f32
      %86 = vector.broadcast %cst_62 : f32 to vector<128x1xf32>
      %c0_63 = arith.constant 0 : index
      %c0_64 = arith.constant 0 : index
      %87 = vector.load %arg13[%c0_63, %c0_64] : memref<128x1xf32, #tpu.memory_space<vmem>>, vector<128x1xf32>
      tpu.vector_store %arg13[%c0_63, %c0_64], %86 {strides = array<i32>} : memref<128x1xf32, #tpu.memory_space<vmem>>, vector<128x1xf32>,
    } else {
    }
    %c0 = arith.constant 0 : index
    %c0_1 = arith.constant 0 : index
    %3 = vector.load %arg5[%c0, %c0_1] : memref<128x384xf32, #tpu.memory_space<vmem>>, vector<128x384xf32>
    %c0_2 = arith.constant 0 : index
    %c0_3 = arith.constant 0 : index
    %4 = vector.load %arg4[%c0_2, %c0_3] : memref<128x384xf32, #tpu.memory_space<vmem>>, vector<128x384xf32>
    %c0_4 = arith.constant 0 : index
    %c0_5 = arith.constant 0 : index
    %5 = vector.load %arg8[%c0_4, %c0_5] : memref<128x128xf32, #tpu.memory_space<vmem>>, vector<128x128xf32>
    %cst = arith.constant dense<0.000000e+00> : vector<128x384xf32>
    %6 = tpu.matmul %5, %3, %cst {dimension_numbers = #tpu.dot_dimension_numbers<[1], [0], [0], [1], [0, 0, 1, 1], [], []>} : vector<128x128xf32>, vector<128x384xf32>, vector<128x384xf32> -> vector<128x384xf32>
    %c0_6 = arith.constant 0 : index
    %c0_7 = arith.constant 0 : index
    %7 = vector.load %arg7[%c0_6, %c0_7] : memref<128x128xf32, #tpu.memory_space<vmem>>, vector<128x128xf32>
    %cst_8 = arith.constant dense<0.000000e+00> : vector<128x384xf32>
    %8 = tpu.matmul %7, %4, %cst_8 {dimension_numbers = #tpu.dot_dimension_numbers<[1], [0], [0], [1], [0, 0, 1, 1], [], []>} : vector<128x128xf32>, vector<128x384xf32>, vector<128x384xf32> -> vector<128x384xf32>
    %c384_i32 = arith.constant 384 : i32
    %9 = arith.muli %arg1, %c384_i32 : i32
    %10 = tpu.iota {dimensions = array<i32: 1>} : vector<128x384xi32>
    %11 = vector.broadcast %9 : i32 to vector<128x384xi32>
    %12 = arith.addi %11, %10 : vector<128x384xi32>
    %c300_i32 = arith.constant 300 : i32
    %13 = vector.broadcast %c300_i32 : i32 to vector<128x384xi32>
    %14 = arith.cmpi slt, %12, %13 : vector<128x384xi32>
    %cst_9 = arith.constant -1.000000e+30 : f32
    %15 = vector.broadcast %cst_9 : f32 to vector<128x384xf32>
    %16 = arith.select %14, %6, %15 : vector<128x384xi1>, vector<128x384xf32>
    %cst_10 = arith.constant -1.000000e+30 : f32
    %17 = vector.broadcast %cst_10 : f32 to vector<128x384xf32>
    %18 = arith.select %14, %8, %17 : vector<128x384xi1>, vector<128x384xf32>
    %c0_11 = arith.constant 0 : index
    %c0_12 = arith.constant 0 : index
    %19 = vector.load %arg9[%c0_11, %c0_12] : memref<128x1xf32, #tpu.memory_space<vmem>>, vector<128x1xf32>
    %cst_13 = arith.constant dense<0xFF800000> : vector<128xf32>
    %20 = vector.multi_reduction <maximumf>, %16, %cst_13 [1] : vector<128x384xf32> to vector<128xf32>
    %21 = vector.shape_cast %20 : vector<128xf32> to vector<128x1xf32>
    %22 = arith.maximumf %19, %21 : vector<128x1xf32>
    %23 = arith.subf %19, %22 : vector<128x1xf32>
    %24 = math.exp %23 : vector<128x1xf32>
    %25 = vector.broadcast %22 : vector<128x1xf32> to vector<128x384xf32>
    %26 = arith.subf %16, %25 : vector<128x384xf32>
    %27 = math.exp %26 : vector<128x384xf32>
    %c0_14 = arith.constant 0 : index
    %c0_15 = arith.constant 0 : index
    %28 = vector.load %arg10[%c0_14, %c0_15] : memref<128x1xf32, #tpu.memory_space<vmem>>, vector<128x1xf32>
    %29 = arith.mulf %24, %28 : vector<128x1xf32>
    %cst_16 = arith.constant dense<0.000000e+00> : vector<128xf32>
    %30 = vector.multi_reduction <add>, %27, %cst_16 [1] : vector<128x384xf32> to vector<128xf32>
    %31 = vector.shape_cast %30 : vector<128xf32> to vector<128x1xf32>
    %32 = arith.addf %29, %31 : vector<128x1xf32>
    %c0_17 = arith.constant 0 : index
    %c0_18 = arith.constant 0 : index
    %33 = vector.load %arg10[%c0_17, %c0_18] : memref<128x1xf32, #tpu.memory_space<vmem>>, vector<128x1xf32>
    tpu.vector_store %arg10[%c0_17, %c0_18], %32 {strides = array<i32>} : memref<128x1xf32, #tpu.memory_space<vmem>>, vector<128x1xf32>,
    %c0_19 = arith.constant 0 : index
    %c0_20 = arith.constant 0 : index
    %34 = vector.load %arg11[%c0_19, %c0_20] : memref<128x1xf32, #tpu.memory_space<vmem>>, vector<128x1xf32>
    %35 = arith.mulf %24, %34 : vector<128x1xf32>
    %36 = arith.subf %16, %18 : vector<128x384xf32>
    %37 = arith.mulf %27, %36 : vector<128x384xf32>
    %cst_21 = arith.constant dense<0.000000e+00> : vector<128xf32>
    %38 = vector.multi_reduction <add>, %37, %cst_21 [1] : vector<128x384xf32> to vector<128xf32>
    %39 = vector.shape_cast %38 : vector<128xf32> to vector<128x1xf32>
    %40 = arith.addf %35, %39 : vector<128x1xf32>
    %c0_22 = arith.constant 0 : index
    %c0_23 = arith.constant 0 : index
    %41 = vector.load %arg11[%c0_22, %c0_23] : memref<128x1xf32, #tpu.memory_space<vmem>>, vector<128x1xf32>
    tpu.vector_store %arg11[%c0_22, %c0_23], %40 {strides = array<i32>} : memref<128x1xf32, #tpu.memory_space<vmem>>, vector<128x1xf32>,
    %c0_24 = arith.constant 0 : index
    %c0_25 = arith.constant 0 : index
    %42 = vector.load %arg9[%c0_24, %c0_25] : memref<128x1xf32, #tpu.memory_space<vmem>>, vector<128x1xf32>
    tpu.vector_store %arg9[%c0_24, %c0_25], %22 {strides = array<i32>} : memref<128x1xf32, #tpu.memory_space<vmem>>, vector<128x1xf32>,
    %c0_26 = arith.constant 0 : index
    %c0_27 = arith.constant 0 : index
    %43 = vector.load %arg12[%c0_26, %c0_27] : memref<128x1xf32, #tpu.memory_space<vmem>>, vector<128x1xf32>
    %cst_28 = arith.constant dense<0xFF800000> : vector<128xf32>
    %44 = vector.multi_reduction <maximumf>, %18, %cst_28 [1] : vector<128x384xf32> to vector<128xf32>
    %45 = vector.shape_cast %44 : vector<128xf32> to vector<128x1xf32>
    %46 = arith.maximumf %43, %45 : vector<128x1xf32>
    %47 = arith.subf %43, %46 : vector<128x1xf32>
    %48 = math.exp %47 : vector<128x1xf32>
    %c0_29 = arith.constant 0 : index
    %c0_30 = arith.constant 0 : index
    %49 = vector.load %arg13[%c0_29, %c0_30] : memref<128x1xf32, #tpu.memory_space<vmem>>, vector<128x1xf32>
    %50 = arith.mulf %48, %49 : vector<128x1xf32>
    %51 = vector.broadcast %46 : vector<128x1xf32> to vector<128x384xf32>
    %52 = arith.subf %18, %51 : vector<128x384xf32>
    %53 = math.exp %52 : vector<128x384xf32>
    %cst_31 = arith.constant dense<0.000000e+00> : vector<128xf32>
    %54 = vector.multi_reduction <add>, %53, %cst_31 [1] : vector<128x384xf32> to vector<128xf32>
    %55 = vector.shape_cast %54 : vector<128xf32> to vector<128x1xf32>
    %56 = arith.addf %50, %55 : vector<128x1xf32>
    %c0_32 = arith.constant 0 : index
    %c0_33 = arith.constant 0 : index
    %57 = vector.load %arg13[%c0_32, %c0_33] : memref<128x1xf32, #tpu.memory_space<vmem>>, vector<128x1xf32>
    tpu.vector_store %arg13[%c0_32, %c0_33], %56 {strides = array<i32>} : memref<128x1xf32, #tpu.memory_space<vmem>>, vector<128x1xf32>,
    %c0_34 = arith.constant 0 : index
    %c0_35 = arith.constant 0 : index
    %58 = vector.load %arg12[%c0_34, %c0_35] : memref<128x1xf32, #tpu.memory_space<vmem>>, vector<128x1xf32>
    tpu.vector_store %arg12[%c0_34, %c0_35], %46 {strides = array<i32>} : memref<128x1xf32, #tpu.memory_space<vmem>>, vector<128x1xf32>,
    %c0_i32_36 = arith.constant 0 : i32
    %59 = arith.cmpi eq, %arg1, %c0_i32_36 : i32
    %60 = arith.extui %59 : i1 to i32
    %c0_i32_37 = arith.constant 0 : i32
    %61 = arith.cmpi ne, %60, %c0_i32_37 : i32
    scf.if %61 {
      %c0_38 = arith.constant 0 : index
      %c0_39 = arith.constant 0 : index
      %62 = vector.load %arg10[%c0_38, %c0_39] : memref<128x1xf32, #tpu.memory_space<vmem>>, vector<128x1xf32>
      %c0_40 = arith.constant 0 : index
      %c0_41 = arith.constant 0 : index
      %63 = vector.load %arg11[%c0_40, %c0_41] : memref<128x1xf32, #tpu.memory_space<vmem>>, vector<128x1xf32>
      %64 = arith.divf %63, %62 : vector<128x1xf32>
      %c0_42 = arith.constant 0 : index
      %c0_43 = arith.constant 0 : index
      %65 = vector.load %arg9[%c0_42, %c0_43] : memref<128x1xf32, #tpu.memory_space<vmem>>, vector<128x1xf32>
      %66 = math.log %62 : vector<128x1xf32>
      %67 = arith.addf %65, %66 : vector<128x1xf32>
      %68 = arith.subf %64, %67 : vector<128x1xf32>
      %c0_44 = arith.constant 0 : index
      %c0_45 = arith.constant 0 : index
      %69 = vector.load %arg12[%c0_44, %c0_45] : memref<128x1xf32, #tpu.memory_space<vmem>>, vector<128x1xf32>
      %c0_46 = arith.constant 0 : index
      %c0_47 = arith.constant 0 : index
      %70 = vector.load %arg13[%c0_46, %c0_47] : memref<128x1xf32, #tpu.memory_space<vmem>>, vector<128x1xf32>
      %71 = math.log %70 : vector<128x1xf32>
      %72 = arith.addf %69, %71 : vector<128x1xf32>
      %73 = arith.addf %68, %72 : vector<128x1xf32>
      %c0_48 = arith.constant 0 : index
      %c0_49 = arith.constant 0 : index
      %74 = vector.load %arg6[%c0_48, %c0_49] : memref<128x1xf32, #tpu.memory_space<vmem>>, vector<128x1xf32>
      tpu.vector_store %arg6[%c0_48, %c0_49], %73 {strides = array<i32>} : memref<128x1xf32, #tpu.memory_space<vmem>>, vector<128x1xf32>,
    } else {
    }
    return
  }
  func.func @transform_0(%arg0: i32, %arg1: i32) -> (i32, i32) {
    %c0_i32 = arith.constant 0 : i32
    %c0_i32_0 = arith.constant 0 : i32
    return %arg0, %c0_i32 : i32, i32
  }
  func.func @transform_1(%arg0: i32, %arg1: i32) -> (i32, i32) {
    %c0_i32 = arith.constant 0 : i32
    %c0_i32_0 = arith.constant 0 : i32
    return %arg0, %c0_i32 : i32, i32
  }
  func.func @transform_2(%arg0: i32, %arg1: i32) -> (i32, i32) {
    %c0_i32 = arith.constant 0 : i32
    %c0_i32_0 = arith.constant 0 : i32
    return %c0_i32, %arg1 : i32, i32
  }
  func.func @transform_3(%arg0: i32, %arg1: i32) -> (i32, i32) {
    %c0_i32 = arith.constant 0 : i32
    %c0_i32_0 = arith.constant 0 : i32
    return %c0_i32, %arg1 : i32, i32
  }
  func.func @transform_4(%arg0: i32, %arg1: i32) -> (i32, i32) {
    %c0_i32 = arith.constant 0 : i32
    %c0_i32_0 = arith.constant 0 : i32
    return %arg0, %c0_i32 : i32, i32
  }
}

</mosaic_0001>

<llo_original>
// kernel: tpu_custom_call.1
$region0: #{tpu_custom_call.1}
  #allocation0 [shape = 'u32[]', space=smem, size = 0x4, offset = 0x4, fixed_abs, tag = 'smem constant byte address 0x4 - core index']
  #allocation1 [shape = 'u32[144,128]{1,0:T(1,128)}', space=vmem, size = 0x12000, scoped, tag = 'internal scratch']
  #allocation2 [shape = 'f32[128,128]{1,0:T(8,128)}', space=vmem, size = 0x10000, scoped, tag = 'scratch operand']
  #allocation3 [shape = 'f32[128,128]{1,0:T(8,128)}', space=vmem, size = 0x10000, scoped, tag = 'scratch operand']
  #allocation4 [shape = 'f32[128,1]{1,0:T(8,128)}', space=vmem, size = 0x10000, scoped, tag = 'scratch operand']
  #allocation5 [shape = 'f32[128,1]{1,0:T(8,128)}', space=vmem, size = 0x10000, scoped, tag = 'scratch operand']
  #allocation6 [shape = 'f32[128,1]{1,0:T(8,128)}', space=vmem, size = 0x10000, scoped, tag = 'scratch operand']
  #allocation7 [shape = 'f32[128,1]{1,0:T(8,128)}', space=vmem, size = 0x10000, scoped, tag = 'scratch operand']
  #allocation8 [shape = 'f32[128,1]{1,0:T(8,128)}', space=vmem, size = 0x10000, scoped, tag = 'scratch operand']
  %s0 = inlined_call_operand.hbm [shape: f32[256,128], index: 0, kind: input, shape index: {}]
  %s1 = inlined_call_operand.hbm [shape: f32[256,128], index: 1, kind: input, shape index: {}]
  %s2 = inlined_call_operand.hbm [shape: f32[128,384], index: 2, kind: input, shape index: {}]
  %s3 = inlined_call_operand.hbm [shape: f32[128,384], index: 3, kind: input, shape index: {}]
  %s4 = inlined_call_operand.vmem [shape: f32[256,1], index: 4, kind: output, shape index: {}]
  %s5 = sld [smem:[#allocation0]]
  $region73: #{tpu_custom_call.1} parent=0
    _
  %s7 = ssub.s32 1, %s5
  %s8 = scalar_select 0, %s7, %s5
  $region1: #{tpu_custom_call.1} parent=0
    #allocation9 [shape = 'u8[131072]{0}', space=vmem, size = 0x20000, scoped, tag = 'input window, operand 0']
    #allocation10 [shape = 's32[2]{0}', space=sflag, size = 0x8, scoped, tag = 'scoped memory for tpu_custom_call.1']
    #allocation11 [shape = 'u8[131072]{0}', space=vmem, size = 0x20000, scoped, tag = 'input window, operand 1']
    #allocation12 [shape = 's32[2]{0}', space=sflag, size = 0x8, scoped, tag = 'scoped memory for tpu_custom_call.1']
    #allocation13 [shape = 'u8[196608]{0}', space=vmem, size = 0x30000, scoped, tag = 'input window, operand 2, single buffered']
    #allocation14 [shape = 'u8[196608]{0}', space=vmem, size = 0x30000, scoped, tag = 'input window, operand 3, single buffered']
    #allocation15 [shape = 's32[1]{0}', space=sflag, size = 0x4, scoped, tag = 'scoped memory for tpu_custom_call.1']
    %9 = vsyncpa [#allocation10], 0
    %s10 = scalar_lea.sflag [#allocation10], 1
    %11 = vsyncpa %s10, 0
    %12 = vsyncpa [#allocation12], 0
    %s13 = scalar_lea.sflag [#allocation12], 1
    %14 = vsyncpa %s13, 0
    %15 = vsyncpa [#allocation15], 0
    loop: start=0, step=1, limit=4
    $region2: #{tpu_custom_call.1} parent=1 // loop_pre_header
      _
    $region3: #{tpu_custom_call.1} parent=1 // loop_header
      %s17 = sphi 0, %s21
      %p18 = scmp.ge.s32.totalorder %s17, 4
      %s24 = sphi 0, %s36
      %s25 = sphi 0, %s32
      %s26 = sphi 0, %s24
      %s27 = sphi 0, %s25
      %s28 = sphi 0, %s26
      %s29 = sphi 0, %s27
      %s39 = sphi 0, %s41
      %s42 = sphi 0, %s39
      %s43 = sphi 0, %s42
      %s59 = sphi 0, %s43
      %s65 = sphi 0, %s67
      %s68 = sphi 0, %s65
      %s69 = sphi 0, %s68
      %s85 = sphi 0, %s69
      %s91 = sphi 0, %s93
      %s94 = sphi 0, %s91
      %s95 = sphi 0, %s94
      %s111 = sphi 0, %s95
      %s117 = sphi 0, %s119
      %s120 = sphi 0, %s117
      %s121 = sphi 0, %s120
      %s137 = sphi 0, %s121
      %s143 = sphi 0, %s145
      %s146 = sphi 0, %s143
      %s147 = sphi 0, %s146
      %s163 = sphi 0, %s147
    $region4: #{tpu_custom_call.1} parent=1 // loop_header_branch
      %20 = sbr.rel (%p18) target = $region8
    $region5: #{tpu_custom_call.1} parent=1 // loop_body
      %s22 = ssub.s32 %s17, 1
      %s23 = ssub.s32 %s17, 2
      %s30 = sadd.s32 1, %s25
      %p31 = scmp.ge.s32.totalorder %s30, 1
      %s32 = scalar_select %p31, 0, %s30
      %s33 = sadd.s32 1, %s24
      %s34 = scalar_select %p31, %s33, %s24
      %p35 = scmp.ge.s32.totalorder %s34, 2
      %s36 = scalar_select %p35, 0, %s34
      %s37 = ssub.s32 %s24, %s36
      %p38 = scmp.eq.s32.totalorder %s37, 0
      %s40 = sadd.s32 %s39, 1
      %s41 = scalar_select %p38, %s39, %s40
      %p44 = pneg %p38
      %p45 = scmp.eq.s32.totalorder %s17, 1
      %p46 = por %p44, %p45
      %p47 = scmp.ne.s32.totalorder %s39, %s42
      %p48 = scmp.eq.s32.totalorder %s17, 0
      %p49 = por %p47, %p48
      %p50 = scmp.ne.s32.totalorder %s39, %s42
      %p51 = scmp.eq.s32.totalorder %s22, 1
      %p52 = por %p50, %p51
      %p53 = scmp.ne.s32.totalorder %s42, %s43
      %p54 = scmp.eq.s32.totalorder %s22, 0
      %p55 = por %p53, %p54
      %p56 = scmp.ne.s32.totalorder %s42, %s43
      %p57 = scmp.eq.s32.totalorder %s23, 1
      %p58 = por %p56, %p57
      %p60 = scmp.ne.s32.totalorder %s43, %s59
      %p61 = scmp.eq.s32.totalorder %s23, 0
      %p62 = por %p60, %p61
      %s63 = ssub.s32 %s24, %s36
      %p64 = scmp.eq.s32.totalorder %s63, 0
      %s66 = sadd.s32 %s65, 1
      %s67 = scalar_select %p64, %s65, %s66
      %p70 = pneg %p64
      %p71 = scmp.eq.s32.totalorder %s17, 1
      %p72 = por %p70, %p71
      %p73 = scmp.ne.s32.totalorder %s65, %s68
      %p74 = scmp.eq.s32.totalorder %s17, 0
      %p75 = por %p73, %p74
      %p76 = scmp.ne.s32.totalorder %s65, %s68
      %p77 = scmp.eq.s32.totalorder %s22, 1
      %p78 = por %p76, %p77
      %p79 = scmp.ne.s32.totalorder %s68, %s69
      %p80 = scmp.eq.s32.totalorder %s22, 0
      %p81 = por %p79, %p80
      %p82 = scmp.ne.s32.totalorder %s68, %s69
      %p83 = scmp.eq.s32.totalorder %s23, 1
      %p84 = por %p82, %p83
      %p86 = scmp.ne.s32.totalorder %s69, %s85
      %p87 = scmp.eq.s32.totalorder %s23, 0
      %p88 = por %p86, %p87
      %s89 = ssub.s32 %s25, %s32
      %p90 = scmp.eq.s32.totalorder %s89, 0
      %s92 = sadd.s32 %s91, 1
      %s93 = scalar_select %p90, %s91, %s92
      %p96 = pneg %p90
      %p97 = scmp.eq.s32.totalorder %s17, 1
      %p98 = por %p96, %p97
      %p99 = scmp.ne.s32.totalorder %s91, %s94
      %p100 = scmp.eq.s32.totalorder %s17, 0
      %p101 = por %p99, %p100
      %p102 = scmp.ne.s32.totalorder %s91, %s94
      %p103 = scmp.eq.s32.totalorder %s22, 1
      %p104 = por %p102, %p103
      %p105 = scmp.ne.s32.totalorder %s94, %s95
      %p106 = scmp.eq.s32.totalorder %s22, 0
      %p107 = por %p105, %p106
      %p108 = scmp.ne.s32.totalorder %s94, %s95
      %p109 = scmp.eq.s32.totalorder %s23, 1
      %p110 = por %p108, %p109
      %p112 = scmp.ne.s32.totalorder %s95, %s111
      %p113 = scmp.eq.s32.totalorder %s23, 0
      %p114 = por %p112, %p113
      %s115 = ssub.s32 %s25, %s32
      %p116 = scmp.eq.s32.totalorder %s115, 0
      %s118 = sadd.s32 %s117, 1
      %s119 = scalar_select %p116, %s117, %s118
      %p122 = pneg %p116
      %p123 = scmp.eq.s32.totalorder %s17, 1
      %p124 = por %p122, %p123
      %p125 = scmp.ne.s32.totalorder %s117, %s120
      %p126 = scmp.eq.s32.totalorder %s17, 0
      %p127 = por %p125, %p126
      %p128 = scmp.ne.s32.totalorder %s117, %s120
      %p129 = scmp.eq.s32.totalorder %s22, 1
      %p130 = por %p128, %p129
      %p131 = scmp.ne.s32.totalorder %s120, %s121
      %p132 = scmp.eq.s32.totalorder %s22, 0
      %p133 = por %p131, %p132
      %p134 = scmp.ne.s32.totalorder %s120, %s121
      %p135 = scmp.eq.s32.totalorder %s23, 1
      %p136 = por %p134, %p135
      %p138 = scmp.ne.s32.totalorder %s121, %s137
      %p139 = scmp.eq.s32.totalorder %s23, 0
      %p140 = por %p138, %p139
      %s141 = ssub.s32 %s24, %s36
      %p142 = scmp.eq.s32.totalorder %s141, 0
      %s144 = sadd.s32 %s143, 1
      %s145 = scalar_select %p142, %s143, %s144
      %p148 = pneg %p142
      %p149 = scmp.eq.s32.totalorder %s17, 1
      %p150 = por %p148, %p149
      %p151 = scmp.ne.s32.totalorder %s143, %s146
      %p152 = scmp.eq.s32.totalorder %s17, 0
      %p153 = por %p151, %p152
      %p154 = scmp.ne.s32.totalorder %s143, %s146
      %p155 = scmp.eq.s32.totalorder %s22, 1
      %p156 = por %p154, %p155
      %p157 = scmp.ne.s32.totalorder %s146, %s147
      %p158 = scmp.eq.s32.totalorder %s22, 0
      %p159 = por %p157, %p158
      %p160 = scmp.ne.s32.totalorder %s146, %s147
      %p161 = scmp.eq.s32.totalorder %s23, 1
      %p162 = por %p160, %p161
      %p164 = scmp.ne.s32.totalorder %s147, %s163
      %p165 = scmp.eq.s32.totalorder %s23, 0
      %p166 = por %p164, %p165
      %p167 = scmp.le.s32.totalorder 1, %s17
      %p168 = scmp.lt.s32.totalorder %s17, 3
      %p169 = pnand %p167, %p168
      %p170 = pneg %p169
      // Predicated region
      $region9: #{tpu_custom_call.1} parent=5 // pred_check
        _
      $region10: #{tpu_custom_call.1} parent=5 // pred_check_branch
        %172 = sbr.rel (%p169) target = $region12
      $region11: #{tpu_custom_call.1} parent=5 // pred_region
        %s173 = ssub.s32 %s17, 1
        // Predicated region
        $region13: #{tpu_custom_call.1} parent=11 // pred_check
          %p174 = pneg %p107
        $region14: #{tpu_custom_call.1} parent=11 // pred_check_branch
          %176 = sbr.rel (%p174) target = $region16
        $region15: #{tpu_custom_call.1} parent=11 // pred_region
          %s177 = smul.u32 3, %s27
          %s179 = ssub.s32 6144, 6144
          %180 = vsyncadd [#allocation12], %s179
          %s181 = smul.addr %s177, 128
          %s182 = scalar_lea.hbm %s2, %s181
          %s183 = sshll.u32 [#allocation13], 4
          %s184 = int_to_ptr.vmem [resolvable:$true] %s183
          %189 = dma.hbm_to_vmem [thread:$0]  %s182, 6144, %s184, [#allocation12], 384, 384, 24
        $region16: #{tpu_custom_call.1} parent=11 // pred_fallthru
          _
        // Predicated region
        $region17: #{tpu_custom_call.1} parent=11 // pred_check
          %p190 = pneg %p133
        $region18: #{tpu_custom_call.1} parent=11 // pred_check_branch
          %192 = sbr.rel (%p190) target = $region20
        $region19: #{tpu_custom_call.1} parent=11 // pred_region
          %s193 = smul.u32 3, %s27
          %s195 = ssub.s32 6144, 6144
          %196 = vsyncadd [#allocation15], %s195
          %s197 = smul.addr %s193, 128
          %s198 = scalar_lea.hbm %s3, %s197
          %s199 = sshll.u32 [#allocation14], 4
          %s200 = int_to_ptr.vmem [resolvable:$true] %s199
          %205 = dma.hbm_to_vmem [thread:$0]  %s198, 6144, %s200, [#allocation15], 384, 384, 24
        $region20: #{tpu_custom_call.1} parent=11 // pred_fallthru
          _
      $region12: #{tpu_custom_call.1} parent=5 // pred_fallthru
        _
      %p206 = scmp.lt.s32.totalorder %s17, 2
      // Predicated region
      $region21: #{tpu_custom_call.1} parent=5 // pred_check
        %p207 = pneg %p206
      $region22: #{tpu_custom_call.1} parent=5 // pred_check_branch
        %209 = sbr.rel (%p207) target = $region24
      $region23: #{tpu_custom_call.1} parent=5 // pred_region
        // Predicated region
        $region25: #{tpu_custom_call.1} parent=23 // pred_check
          %p210 = pneg %p49
        $region26: #{tpu_custom_call.1} parent=23 // pred_check_branch
          %212 = sbr.rel (%p210) target = $region28
        $region27: #{tpu_custom_call.1} parent=23 // pred_region
          %s213 = sand.u32 %s39, 1
          %s214 = scalar_lea.sflag [#allocation10], %s213
          %s215 = sand.u32 %s39, 1
          %s216 = smul.addr %s215, 128
          %s217 = scalar_lea.vmem [#allocation9], %s216
          %s218 = smul.u32 16, %s24
          %s220 = ssub.s32 2048, 2048
          %221 = vsyncadd %s214, %s220
          %s222 = smul.addr %s218, 128
          %s223 = scalar_lea.hbm %s0, %s222
          %s224 = sshll.u32 %s217, 4
          %s225 = int_to_ptr.vmem [resolvable:$true] %s224
          %230 = dma.hbm_to_vmem [thread:$0]  %s223, 2048, %s225, %s214, 128, 128, 8
        $region28: #{tpu_custom_call.1} parent=23 // pred_fallthru
          _
        // Predicated region
        $region29: #{tpu_custom_call.1} parent=23 // pred_check
          %p231 = pneg %p75
        $region30: #{tpu_custom_call.1} parent=23 // pred_check_branch
          %233 = sbr.rel (%p231) target = $region32
        $region31: #{tpu_custom_call.1} parent=23 // pred_region
          %s234 = sand.u32 %s17, 1
          %s235 = scalar_lea.sflag [#allocation12], %s234
          %s236 = sand.u32 %s65, 1
          %s237 = smul.addr %s236, 128
          %s238 = scalar_lea.vmem [#allocation11], %s237
          %s239 = smul.u32 16, %s24
          %s241 = ssub.s32 2048, 2048
          %242 = vsyncadd %s235, %s241
          %s243 = smul.addr %s239, 128
          %s244 = scalar_lea.hbm %s1, %s243
          %s245 = sshll.u32 %s238, 4
          %s246 = int_to_ptr.vmem [resolvable:$true] %s245
          %251 = dma.hbm_to_vmem [thread:$0]  %s244, 2048, %s246, %s235, 128, 128, 8
        $region32: #{tpu_custom_call.1} parent=23 // pred_fallthru
          _
      $region24: #{tpu_custom_call.1} parent=5 // pred_fallthru
        _
      %p252 = scmp.le.s32.totalorder 1, %s17
      %p253 = scmp.lt.s32.totalorder %s17, 3
      %p254 = pnand %p252, %p253
      %p255 = pneg %p254
      // Predicated region
      $region33: #{tpu_custom_call.1} parent=5 // pred_check
        _
      $region34: #{tpu_custom_call.1} parent=5 // pred_check_branch
        %257 = sbr.rel (%p254) target = $region36
      $region35: #{tpu_custom_call.1} parent=5 // pred_region
        %s258 = ssub.s32 %s17, 1
        %s259 = sand.u32 %s42, 1
        %s260 = scalar_lea.sflag [#allocation10], %s259
        %s261 = sand.u32 %s42, 1
        %s262 = smul.addr %s261, 128
        %s263 = scalar_lea.vmem [#allocation9], %s262
        // Predicated region
        $region37: #{tpu_custom_call.1} parent=35 // pred_check
          %p264 = pneg %p55
        $region38: #{tpu_custom_call.1} parent=35 // pred_check_branch
          %266 = sbr.rel (%p264) target = $region40
        $region39: #{tpu_custom_call.1} parent=35 // pred_region
          %267 = dma.done %s260, 2048
        $region40: #{tpu_custom_call.1} parent=35 // pred_fallthru
          _
        %s268 = sand.u32 %s22, 1
        %s269 = scalar_lea.sflag [#allocation12], %s268
        %s270 = sand.u32 %s68, 1
        %s271 = smul.addr %s270, 128
        %s272 = scalar_lea.vmem [#allocation11], %s271
        // Predicated region
        $region41: #{tpu_custom_call.1} parent=35 // pred_check
          %p273 = pneg %p81
        $region42: #{tpu_custom_call.1} parent=35 // pred_check_branch
          %275 = sbr.rel (%p273) target = $region44
        $region43: #{tpu_custom_call.1} parent=35 // pred_region
          %276 = dma.done %s269, 2048
        $region44: #{tpu_custom_call.1} parent=35 // pred_fallthru
          _
        // Predicated region
        $region45: #{tpu_custom_call.1} parent=35 // pred_check
          %p277 = pneg %p107
        $region46: #{tpu_custom_call.1} parent=35 // pred_check_branch
          %279 = sbr.rel (%p277) target = $region48
        $region47: #{tpu_custom_call.1} parent=35 // pred_region
          %280 = dma.done [#allocation12], 6144
        $region48: #{tpu_custom_call.1} parent=35 // pred_fallthru
          _
        // Predicated region
        $region49: #{tpu_custom_call.1} parent=35 // pred_check
          %p281 = pneg %p133
        $region50: #{tpu_custom_call.1} parent=35 // pred_check_branch
          %283 = sbr.rel (%p281) target = $region52
        $region51: #{tpu_custom_call.1} parent=35 // pred_region
          %284 = dma.done [#allocation15], 6144
        $region52: #{tpu_custom_call.1} parent=35 // pred_fallthru
          _
        %s285 = sand.u32 %s42, 1
        %s286 = scalar_lea.sflag [#allocation10], %s285
        %s287 = sand.u32 %s42, 1
        %s288 = smul.addr %s287, 128
        %s289 = scalar_lea.vmem [#allocation9], %s288
        %p290 = pneg %p55
        %p291 = pneg %p52
        %s292 = sand.u32 %s22, 1
        %s293 = scalar_lea.sflag [#allocation12], %s292
        %s294 = sand.u32 %s68, 1
        %s295 = smul.addr %s294, 128
        %s296 = scalar_lea.vmem [#allocation11], %s295
        %p297 = pneg %p81
        %p298 = pneg %p78
        %p299 = pneg %p107
        %p300 = pneg %p104
        %p301 = pneg %p133
        %p302 = pneg %p130
        %p303 = pneg %p159
        %p304 = pneg %p156
        %s305 = smul.u32 16, %s26
        %p306 = scmp.lt.s32.totalorder %s305, 31
        %s307 = scalar_select %p306, %s305, 31
        %s308 = smul.addr %s307, 8
        %s309 = scalar_lea.vmem %s4, %s308
        %s310 = smul.u32 16, %s26
        %s311 = smul.u32 16, %s26
        %s312 = smul.u32 3, %s27
        %s313 = smul.u32 3, %s27
        %s314 = smul.u32 16, %s26
        %p315 = scmp.lt.s32.totalorder %s314, 31
        %s316 = scalar_select %p315, %s314, 31
        %s317 = smul.addr %s316, 8
        %s318 = scalar_lea.vmem %s4, %s317
        %s319 = smul.u32 16, %s26
        %p320 = scmp.eq.s32.totalorder %s27, 0
        // Predicated region
        $region53: #{tpu_custom_call.1} parent=35 // pred_check
          %p321 = pneg %p320
        $region54: #{tpu_custom_call.1} parent=35 // pred_check_branch
          %323 = sbr.rel (%p321) target = $region56
        $region55: #{tpu_custom_call.1} parent=35 // pred_region
          %v324 = vld [vmem:[%s263] sm:$0xff]
          %v325 = vld [vmem:[%s263 + $0x8] sm:$0xff]
          %v326 = vld [vmem:[%s263 + $0x10] sm:$0xff]
          %v327 = vld [vmem:[%s263 + $0x18] sm:$0xff]
          %v328 = vld [vmem:[%s263 + $0x20] sm:$0xff]
          %v329 = vld [vmem:[%s263 + $0x28] sm:$0xff]
          %v330 = vld [vmem:[%s263 + $0x30] sm:$0xff]
          %v331 = vld [vmem:[%s263 + $0x38] sm:$0xff]
          %v332 = vld [vmem:[%s263 + $0x40] sm:$0xff]
          %v333 = vld [vmem:[%s263 + $0x48] sm:$0xff]
          %v334 = vld [vmem:[%s263 + $0x50] sm:$0xff]
          %v335 = vld [vmem:[%s263 + $0x58] sm:$0xff]
          %v336 = vld [vmem:[%s263 + $0x60] sm:$0xff]
          %v337 = vld [vmem:[%s263 + $0x68] sm:$0xff]
          %v338 = vld [vmem:[%s263 + $0x70] sm:$0xff]
          %v339 = vld [vmem:[%s263 + $0x78] sm:$0xff]
          %v340 = vmul.f32 %v324, %v324
          %v341 = vmul.f32 %v325, %v325
          %v342 = vmul.f32 %v326, %v326
          %v343 = vmul.f32 %v327, %v327
          %v344 = vmul.f32 %v328, %v328
          %v345 = vmul.f32 %v329, %v329
          %v346 = vmul.f32 %v330, %v330
          %v347 = vmul.f32 %v331, %v331
          %v348 = vmul.f32 %v332, %v332
          %v349 = vmul.f32 %v333, %v333
          %v350 = vmul.f32 %v334, %v334
          %v351 = vmul.f32 %v335, %v335
          %v352 = vmul.f32 %v336, %v336
          %v353 = vmul.f32 %v337, %v337
          %v354 = vmul.f32 %v338, %v338
          %v355 = vmul.f32 %v339, %v339
          %356 = vadd.xlane.f32.xlu0 %v340
          %v357 = vpop.xlane.xlu0 %356
          %358 = vadd.xlane.f32.xlu0 %v341
          %v359 = vpop.xlane.xlu0 %358
          %360 = vadd.xlane.f32.xlu0 %v342
          %v361 = vpop.xlane.xlu0 %360
          %362 = vadd.xlane.f32.xlu0 %v343
          %v363 = vpop.xlane.xlu0 %362
          %364 = vadd.xlane.f32.xlu0 %v344
          %v365 = vpop.xlane.xlu0 %364
          %366 = vadd.xlane.f32.xlu0 %v345
          %v367 = vpop.xlane.xlu0 %366
          %368 = vadd.xlane.f32.xlu0 %v346
          %v369 = vpop.xlane.xlu0 %368
          %370 = vadd.xlane.f32.xlu0 %v347
          %v371 = vpop.xlane.xlu0 %370
          %372 = vadd.xlane.f32.xlu0 %v348
          %v373 = vpop.xlane.xlu0 %372
          %374 = vadd.xlane.f32.xlu0 %v349
          %v375 = vpop.xlane.xlu0 %374
          %376 = vadd.xlane.f32.xlu0 %v350
          %v377 = vpop.xlane.xlu0 %376
          %378 = vadd.xlane.f32.xlu0 %v351
          %v379 = vpop.xlane.xlu0 %378
          %380 = vadd.xlane.f32.xlu0 %v352
          %v381 = vpop.xlane.xlu0 %380
          %382 = vadd.xlane.f32.xlu0 %v353
          %v383 = vpop.xlane.xlu0 %382
          %384 = vadd.xlane.f32.xlu0 %v354
          %v385 = vpop.xlane.xlu0 %384
          %386 = vadd.xlane.f32.xlu0 %v355
          %v387 = vpop.xlane.xlu0 %386
          %v388 = vmax.f32 %v357, 1e-24
          %v389 = vmax.f32 %v359, 1e-24
          %v390 = vmax.f32 %v361, 1e-24
          %v391 = vmax.f32 %v363, 1e-24
          %v392 = vmax.f32 %v365, 1e-24
          %v393 = vmax.f32 %v367, 1e-24
          %v394 = vmax.f32 %v369, 1e-24
          %v395 = vmax.f32 %v371, 1e-24
          %v396 = vmax.f32 %v373, 1e-24
          %v397 = vmax.f32 %v375, 1e-24
          %v398 = vmax.f32 %v377, 1e-24
          %v399 = vmax.f32 %v379, 1e-24
          %v400 = vmax.f32 %v381, 1e-24
          %v401 = vmax.f32 %v383, 1e-24
          %v402 = vmax.f32 %v385, 1e-24
          %v403 = vmax.f32 %v387, 1e-24
          %v404 = vrsqrt.pop %v388
          %v405 = vrsqrt.pop %v389
          %v406 = vrsqrt.pop %v390
          %v407 = vrsqrt.pop %v391
          %v408 = vrsqrt.pop %v392
          %v409 = vrsqrt.pop %v393
          %v410 = vrsqrt.pop %v394
          %v411 = vrsqrt.pop %v395
          %v412 = vrsqrt.pop %v396
          %v413 = vrsqrt.pop %v397
          %v414 = vrsqrt.pop %v398
          %v415 = vrsqrt.pop %v399
          %v416 = vrsqrt.pop %v400
          %v417 = vrsqrt.pop %v401
          %v418 = vrsqrt.pop %v402
          %v419 = vrsqrt.pop %v403
          %v420 = vmul.f32 %v404, 2.0
          %v421 = vmul.f32 %v405, 2.0
          %v422 = vmul.f32 %v406, 2.0
          %v423 = vmul.f32 %v407, 2.0
          %v424 = vmul.f32 %v408, 2.0
          %v425 = vmul.f32 %v409, 2.0
          %v426 = vmul.f32 %v410, 2.0
          %v427 = vmul.f32 %v411, 2.0
          %v428 = vmul.f32 %v412, 2.0
          %v429 = vmul.f32 %v413, 2.0
          %v430 = vmul.f32 %v414, 2.0
          %v431 = vmul.f32 %v415, 2.0
          %v432 = vmul.f32 %v416, 2.0
          %v433 = vmul.f32 %v417, 2.0
          %v434 = vmul.f32 %v418, 2.0
          %v435 = vmul.f32 %v419, 2.0
          %v436 = vmul.f32 %v324, %v420
          %v437 = vmul.f32 %v325, %v421
          %v438 = vmul.f32 %v326, %v422
          %v439 = vmul.f32 %v327, %v423
          %v440 = vmul.f32 %v328, %v424
          %v441 = vmul.f32 %v329, %v425
          %v442 = vmul.f32 %v330, %v426
          %v443 = vmul.f32 %v331, %v427
          %v444 = vmul.f32 %v332, %v428
          %v445 = vmul.f32 %v333, %v429
          %v446 = vmul.f32 %v334, %v430
          %v447 = vmul.f32 %v335, %v431
          %v448 = vmul.f32 %v336, %v432
          %v449 = vmul.f32 %v337, %v433
          %v450 = vmul.f32 %v338, %v434
          %v451 = vmul.f32 %v339, %v435
          %452 = vst [vmem:[#allocation2] sm:$0xff] %v436
          %453 = vst [vmem:[#allocation2 + $0x8] sm:$0xff] %v437
          %454 = vst [vmem:[#allocation2 + $0x10] sm:$0xff] %v438
          %455 = vst [vmem:[#allocation2 + $0x18] sm:$0xff] %v439
          %456 = vst [vmem:[#allocation2 + $0x20] sm:$0xff] %v440
          %457 = vst [vmem:[#allocation2 + $0x28] sm:$0xff] %v441
          %458 = vst [vmem:[#allocation2 + $0x30] sm:$0xff] %v442
          %459 = vst [vmem:[#allocation2 + $0x38] sm:$0xff] %v443
          %460 = vst [vmem:[#allocation2 + $0x40] sm:$0xff] %v444
          %461 = vst [vmem:[#allocation2 + $0x48] sm:$0xff] %v445
          %462 = vst [vmem:[#allocation2 + $0x50] sm:$0xff] %v446
          %463 = vst [vmem:[#allocation2 + $0x58] sm:$0xff] %v447
          %464 = vst [vmem:[#allocation2 + $0x60] sm:$0xff] %v448
          %465 = vst [vmem:[#allocation2 + $0x68] sm:$0xff] %v449
          %466 = vst [vmem:[#allocation2 + $0x70] sm:$0xff] %v450
          %467 = vst [vmem:[#allocation2 + $0x78] sm:$0xff] %v451
          %v468 = vld [vmem:[%s272] sm:$0xff]
          %v469 = vld [vmem:[%s272 + $0x8] sm:$0xff]
          %v470 = vld [vmem:[%s272 + $0x10] sm:$0xff]
          %v471 = vld [vmem:[%s272 + $0x18] sm:$0xff]
          %v472 = vld [vmem:[%s272 + $0x20] sm:$0xff]
          %v473 = vld [vmem:[%s272 + $0x28] sm:$0xff]
          %v474 = vld [vmem:[%s272 + $0x30] sm:$0xff]
          %v475 = vld [vmem:[%s272 + $0x38] sm:$0xff]
          %v476 = vld [vmem:[%s272 + $0x40] sm:$0xff]
          %v477 = vld [vmem:[%s272 + $0x48] sm:$0xff]
          %v478 = vld [vmem:[%s272 + $0x50] sm:$0xff]
          %v479 = vld [vmem:[%s272 + $0x58] sm:$0xff]
          %v480 = vld [vmem:[%s272 + $0x60] sm:$0xff]
          %v481 = vld [vmem:[%s272 + $0x68] sm:$0xff]
          %v482 = vld [vmem:[%s272 + $0x70] sm:$0xff]
          %v483 = vld [vmem:[%s272 + $0x78] sm:$0xff]
          %v484 = vmul.f32 %v468, 0.5
          %v485 = vmul.f32 %v469, 0.5
          %v486 = vmul.f32 %v470, 0.5
          %v487 = vmul.f32 %v471, 0.5
          %v488 = vmul.f32 %v472, 0.5
          %v489 = vmul.f32 %v473, 0.5
          %v490 = vmul.f32 %v474, 0.5
          %v491 = vmul.f32 %v475, 0.5
          %v492 = vmul.f32 %v476, 0.5
          %v493 = vmul.f32 %v477, 0.5
          %v494 = vmul.f32 %v478, 0.5
          %v495 = vmul.f32 %v479, 0.5
          %v496 = vmul.f32 %v480, 0.5
          %v497 = vmul.f32 %v481, 0.5
          %v498 = vmul.f32 %v482, 0.5
          %v499 = vmul.f32 %v483, 0.5
          %500 = vst [vmem:[#allocation3] sm:$0xff] %v484
          %501 = vst [vmem:[#allocation3 + $0x8] sm:$0xff] %v485
          %502 = vst [vmem:[#allocation3 + $0x10] sm:$0xff] %v486
          %503 = vst [vmem:[#allocation3 + $0x18] sm:$0xff] %v487
          %504 = vst [vmem:[#allocation3 + $0x20] sm:$0xff] %v488
          %505 = vst [vmem:[#allocation3 + $0x28] sm:$0xff] %v489
          %506 = vst [vmem:[#allocation3 + $0x30] sm:$0xff] %v490
          %507 = vst [vmem:[#allocation3 + $0x38] sm:$0xff] %v491
          %508 = vst [vmem:[#allocation3 + $0x40] sm:$0xff] %v492
          %509 = vst [vmem:[#allocation3 + $0x48] sm:$0xff] %v493
          %510 = vst [vmem:[#allocation3 + $0x50] sm:$0xff] %v494
          %511 = vst [vmem:[#allocation3 + $0x58] sm:$0xff] %v495
          %512 = vst [vmem:[#allocation3 + $0x60] sm:$0xff] %v496
          %513 = vst [vmem:[#allocation3 + $0x68] sm:$0xff] %v497
          %514 = vst [vmem:[#allocation3 + $0x70] sm:$0xff] %v498
          %515 = vst [vmem:[#allocation3 + $0x78] sm:$0xff] %v499
          %vm516 = vcmask 7168
          %517 = vst.msk [vmem:[#allocation4] sm:$0xff] %vm516, -inf
          %518 = vst.msk [vmem:[#allocation4 + $0x8] sm:$0xff] %vm516, -inf
          %519 = vst.msk [vmem:[#allocation4 + $0x10] sm:$0xff] %vm516, -inf
          %520 = vst.msk [vmem:[#allocation4 + $0x18] sm:$0xff] %vm516, -inf
          %521 = vst.msk [vmem:[#allocation4 + $0x20] sm:$0xff] %vm516, -inf
          %522 = vst.msk [vmem:[#allocation4 + $0x28] sm:$0xff] %vm516, -inf
          %523 = vst.msk [vmem:[#allocation4 + $0x30] sm:$0xff] %vm516, -inf
          %524 = vst.msk [vmem:[#allocation4 + $0x38] sm:$0xff] %vm516, -inf
          %525 = vst.msk [vmem:[#allocation4 + $0x40] sm:$0xff] %vm516, -inf
          %526 = vst.msk [vmem:[#allocation4 + $0x48] sm:$0xff] %vm516, -inf
          %527 = vst.msk [vmem:[#allocation4 + $0x50] sm:$0xff] %vm516, -inf
          %528 = vst.msk [vmem:[#allocation4 + $0x58] sm:$0xff] %vm516, -inf
          %529 = vst.msk [vmem:[#allocation4 + $0x60] sm:$0xff] %vm516, -inf
          %530 = vst.msk [vmem:[#allocation4 + $0x68] sm:$0xff] %vm516, -inf
          %531 = vst.msk [vmem:[#allocation4 + $0x70] sm:$0xff] %vm516, -inf
          %532 = vst.msk [vmem:[#allocation4 + $0x78] sm:$0xff] %vm516, -inf
          %533 = vst.msk [vmem:[#allocation5] sm:$0xff] %vm516, 0.0
          %534 = vst.msk [vmem:[#allocation5 + $0x8] sm:$0xff] %vm516, 0.0
          %535 = vst.msk [vmem:[#allocation5 + $0x10] sm:$0xff] %vm516, 0.0
          %536 = vst.msk [vmem:[#allocation5 + $0x18] sm:$0xff] %vm516, 0.0
          %537 = vst.msk [vmem:[#allocation5 + $0x20] sm:$0xff] %vm516, 0.0
          %538 = vst.msk [vmem:[#allocation5 + $0x28] sm:$0xff] %vm516, 0.0
          %539 = vst.msk [vmem:[#allocation5 + $0x30] sm:$0xff] %vm516, 0.0
          %540 = vst.msk [vmem:[#allocation5 + $0x38] sm:$0xff] %vm516, 0.0
          %541 = vst.msk [vmem:[#allocation5 + $0x40] sm:$0xff] %vm516, 0.0
          %542 = vst.msk [vmem:[#allocation5 + $0x48] sm:$0xff] %vm516, 0.0
          %543 = vst.msk [vmem:[#allocation5 + $0x50] sm:$0xff] %vm516, 0.0
          %544 = vst.msk [vmem:[#allocation5 + $0x58] sm:$0xff] %vm516, 0.0
          %545 = vst.msk [vmem:[#allocation5 + $0x60] sm:$0xff] %vm516, 0.0
          %546 = vst.msk [vmem:[#allocation5 + $0x68] sm:$0xff] %vm516, 0.0
          %547 = vst.msk [vmem:[#allocation5 + $0x70] sm:$0xff] %vm516, 0.0
          %548 = vst.msk [vmem:[#allocation5 + $0x78] sm:$0xff] %vm516, 0.0
          %549 = vst.msk [vmem:[#allocation6] sm:$0xff] %vm516, 0.0
          %550 = vst.msk [vmem:[#allocation6 + $0x8] sm:$0xff] %vm516, 0.0
          %551 = vst.msk [vmem:[#allocation6 + $0x10] sm:$0xff] %vm516, 0.0
          %552 = vst.msk [vmem:[#allocation6 + $0x18] sm:$0xff] %vm516, 0.0
          %553 = vst.msk [vmem:[#allocation6 + $0x20] sm:$0xff] %vm516, 0.0
          %554 = vst.msk [vmem:[#allocation6 + $0x28] sm:$0xff] %vm516, 0.0
          %555 = vst.msk [vmem:[#allocation6 + $0x30] sm:$0xff] %vm516, 0.0
          %556 = vst.msk [vmem:[#allocation6 + $0x38] sm:$0xff] %vm516, 0.0
          %557 = vst.msk [vmem:[#allocation6 + $0x40] sm:$0xff] %vm516, 0.0
          %558 = vst.msk [vmem:[#allocation6 + $0x48] sm:$0xff] %vm516, 0.0
          %559 = vst.msk [vmem:[#allocation6 + $0x50] sm:$0xff] %vm516, 0.0
          %560 = vst.msk [vmem:[#allocation6 + $0x58] sm:$0xff] %vm516, 0.0
          %561 = vst.msk [vmem:[#allocation6 + $0x60] sm:$0xff] %vm516, 0.0
          %562 = vst.msk [vmem:[#allocation6 + $0x68] sm:$0xff] %vm516, 0.0
          %563 = vst.msk [vmem:[#allocation6 + $0x70] sm:$0xff] %vm516, 0.0
          %564 = vst.msk [vmem:[#allocation6 + $0x78] sm:$0xff] %vm516, 0.0
          %565 = vst.msk [vmem:[#allocation7] sm:$0xff] %vm516, -inf
          %566 = vst.msk [vmem:[#allocation7 + $0x8] sm:$0xff] %vm516, -inf
          %567 = vst.msk [vmem:[#allocation7 + $0x10] sm:$0xff] %vm516, -inf
          %568 = vst.msk [vmem:[#allocation7 + $0x18] sm:$0xff] %vm516, -inf
          %569 = vst.msk [vmem:[#allocation7 + $0x20] sm:$0xff] %vm516, -inf
          %570 = vst.msk [vmem:[#allocation7 + $0x28] sm:$0xff] %vm516, -inf
          %571 = vst.msk [vmem:[#allocation7 + $0x30] sm:$0xff] %vm516, -inf
          %572 = vst.msk [vmem:[#allocation7 + $0x38] sm:$0xff] %vm516, -inf
          %573 = vst.msk [vmem:[#allocation7 + $0x40] sm:$0xff] %vm516, -inf
          %574 = vst.msk [vmem:[#allocation7 + $0x48] sm:$0xff] %vm516, -inf
          %575 = vst.msk [vmem:[#allocation7 + $0x50] sm:$0xff] %vm516, -inf
          %576 = vst.msk [vmem:[#allocation7 + $0x58] sm:$0xff] %vm516, -inf
          %577 = vst.msk [vmem:[#allocation7 + $0x60] sm:$0xff] %vm516, -inf
          %578 = vst.msk [vmem:[#allocation7 + $0x68] sm:$0xff] %vm516, -inf
          %579 = vst.msk [vmem:[#allocation7 + $0x70] sm:$0xff] %vm516, -inf
          %580 = vst.msk [vmem:[#allocation7 + $0x78] sm:$0xff] %vm516, -inf
          %581 = vst.msk [vmem:[#allocation8] sm:$0xff] %vm516, 0.0
          %582 = vst.msk [vmem:[#allocation8 + $0x8] sm:$0xff] %vm516, 0.0
          %583 = vst.msk [vmem:[#allocation8 + $0x10] sm:$0xff] %vm516, 0.0
          %584 = vst.msk [vmem:[#allocation8 + $0x18] sm:$0xff] %vm516, 0.0
          %585 = vst.msk [vmem:[#allocation8 + $0x20] sm:$0xff] %vm516, 0.0
          %586 = vst.msk [vmem:[#allocation8 + $0x28] sm:$0xff] %vm516, 0.0
          %587 = vst.msk [vmem:[#allocation8 + $0x30] sm:$0xff] %vm516, 0.0
          %588 = vst.msk [vmem:[#allocation8 + $0x38] sm:$0xff] %vm516, 0.0
          %589 = vst.msk [vmem:[#allocation8 + $0x40] sm:$0xff] %vm516, 0.0
          %590 = vst.msk [vmem:[#allocation8 + $0x48] sm:$0xff] %vm516, 0.0
          %591 = vst.msk [vmem:[#allocation8 + $0x50] sm:$0xff] %vm516, 0.0
          %592 = vst.msk [vmem:[#allocation8 + $0x58] sm:$0xff] %vm516, 0.0
          %593 = vst.msk [vmem:[#allocation8 + $0x60] sm:$0xff] %vm516, 0.0
          %594 = vst.msk [vmem:[#allocation8 + $0x68] sm:$0xff] %vm516, 0.0
          %595 = vst.msk [vmem:[#allocation8 + $0x70] sm:$0xff] %vm516, 0.0
          %596 = vst.msk [vmem:[#allocation8 + $0x78] sm:$0xff] %vm516, 0.0
        $region56: #{tpu_custom_call.1} parent=35 // pred_fallthru
          _
        %v597 = vld [vmem:[#allocation14] sm:$0xff]
        %v598 = vld [vmem:[#allocation14 + $0x8] sm:$0xff]
        %v599 = vld [vmem:[#allocation14 + $0x10] sm:$0xff]
        %v600 = vld [vmem:[#allocation14 + $0x18] sm:$0xff]
        %v601 = vld [vmem:[#allocation14 + $0x20] sm:$0xff]
        %v602 = vld [vmem:[#allocation14 + $0x28] sm:$0xff]
        %v603 = vld [vmem:[#allocation14 + $0x30] sm:$0xff]
        %v604 = vld [vmem:[#allocation14 + $0x38] sm:$0xff]
        %v605 = vld [vmem:[#allocation14 + $0x40] sm:$0xff]
        %v606 = vld [vmem:[#allocation14 + $0x48] sm:$0xff]
        %v607 = vld [vmem:[#allocation14 + $0x50] sm:$0xff]
        %v608 = vld [vmem:[#allocation14 + $0x58] sm:$0xff]
        %v609 = vld [vmem:[#allocation14 + $0x60] sm:$0xff]
        %v610 = vld [vmem:[#allocation14 + $0x68] sm:$0xff]
        %v611 = vld [vmem:[#allocation14 + $0x70] sm:$0xff]
        %v612 = vld [vmem:[#allocation14 + $0x78] sm:$0xff]
        %v613 = vld [vmem:[#allocation14 + $0x80] sm:$0xff]
        %v614 = vld [vmem:[#allocation14 + $0x88] sm:$0xff]
        %v615 = vld [vmem:[#allocation14 + $0x90] sm:$0xff]
        %v616 = vld [vmem:[#allocation14 + $0x98] sm:$0xff]
        %v617 = vld [vmem:[#allocation14 + $0xa0] sm:$0xff]
        %v618 = vld [vmem:[#allocation14 + $0xa8] sm:$0xff]
        %v619 = vld [vmem:[#allocation14 + $0xb0] sm:$0xff]
        %v620 = vld [vmem:[#allocation14 + $0xb8] sm:$0xff]
        %v621 = vld [vmem:[#allocation14 + $0xc0] sm:$0xff]
        %v622 = vld [vmem:[#allocation14 + $0xc8] sm:$0xff]
        %v623 = vld [vmem:[#allocation14 + $0xd0] sm:$0xff]
        %v624 = vld [vmem:[#allocation14 + $0xd8] sm:$0xff]
        %v625 = vld [vmem:[#allocation14 + $0xe0] sm:$0xff]
        %v626 = vld [vmem:[#allocation14 + $0xe8] sm:$0xff]
        %v627 = vld [vmem:[#allocation14 + $0xf0] sm:$0xff]
        %v628 = vld [vmem:[#allocation14 + $0xf8] sm:$0xff]
        %v629 = vld [vmem:[#allocation14 + $0x100] sm:$0xff]
        %v630 = vld [vmem:[#allocation14 + $0x108] sm:$0xff]
        %v631 = vld [vmem:[#allocation14 + $0x110] sm:$0xff]
        %v632 = vld [vmem:[#allocation14 + $0x118] sm:$0xff]
        %v633 = vld [vmem:[#allocation14 + $0x120] sm:$0xff]
        %v634 = vld [vmem:[#allocation14 + $0x128] sm:$0xff]
        %v635 = vld [vmem:[#allocation14 + $0x130] sm:$0xff]
        %v636 = vld [vmem:[#allocation14 + $0x138] sm:$0xff]
        %v637 = vld [vmem:[#allocation14 + $0x140] sm:$0xff]
        %v638 = vld [vmem:[#allocation14 + $0x148] sm:$0xff]
        %v639 = vld [vmem:[#allocation14 + $0x150] sm:$0xff]
        %v640 = vld [vmem:[#allocation14 + $0x158] sm:$0xff]
        %v641 = vld [vmem:[#allocation14 + $0x160] sm:$0xff]
        %v642 = vld [vmem:[#allocation14 + $0x168] sm:$0xff]
        %v643 = vld [vmem:[#allocation14 + $0x170] sm:$0xff]
        %v644 = vld [vmem:[#allocation14 + $0x178] sm:$0xff]
        %v645 = vld [vmem:[#allocation13] sm:$0xff]
        %v646 = vld [vmem:[#allocation13 + $0x8] sm:$0xff]
        %v647 = vld [vmem:[#allocation13 + $0x10] sm:$0xff]
        %v648 = vld [vmem:[#allocation13 + $0x18] sm:$0xff]
        %v649 = vld [vmem:[#allocation13 + $0x20] sm:$0xff]
        %v650 = vld [vmem:[#allocation13 + $0x28] sm:$0xff]
        %v651 = vld [vmem:[#allocation13 + $0x30] sm:$0xff]
        %v652 = vld [vmem:[#allocation13 + $0x38] sm:$0xff]
        %v653 = vld [vmem:[#allocation13 + $0x40] sm:$0xff]
        %v654 = vld [vmem:[#allocation13 + $0x48] sm:$0xff]
        %v655 = vld [vmem:[#allocation13 + $0x50] sm:$0xff]
        %v656 = vld [vmem:[#allocation13 + $0x58] sm:$0xff]
        %v657 = vld [vmem:[#allocation13 + $0x60] sm:$0xff]
        %v658 = vld [vmem:[#allocation13 + $0x68] sm:$0xff]
        %v659 = vld [vmem:[#allocation13 + $0x70] sm:$0xff]
        %v660 = vld [vmem:[#allocation13 + $0x78] sm:$0xff]
        %v661 = vld [vmem:[#allocation13 + $0x80] sm:$0xff]
        %v662 = vld [vmem:[#allocation13 + $0x88] sm:$0xff]
        %v663 = vld [vmem:[#allocation13 + $0x90] sm:$0xff]
        %v664 = vld [vmem:[#allocation13 + $0x98] sm:$0xff]
        %v665 = vld [vmem:[#allocation13 + $0xa0] sm:$0xff]
        %v666 = vld [vmem:[#allocation13 + $0xa8] sm:$0xff]
        %v667 = vld [vmem:[#allocation13 + $0xb0] sm:$0xff]
        %v668 = vld [vmem:[#allocation13 + $0xb8] sm:$0xff]
        %v669 = vld [vmem:[#allocation13 + $0xc0] sm:$0xff]
        %v670 = vld [vmem:[#allocation13 + $0xc8] sm:$0xff]
        %v671 = vld [vmem:[#allocation13 + $0xd0] sm:$0xff]
        %v672 = vld [vmem:[#allocation13 + $0xd8] sm:$0xff]
        %v673 = vld [vmem:[#allocation13 + $0xe0] sm:$0xff]
        %v674 = vld [vmem:[#allocation13 + $0xe8] sm:$0xff]
        %v675 = vld [vmem:[#allocation13 + $0xf0] sm:$0xff]
        %v676 = vld [vmem:[#allocation13 + $0xf8] sm:$0xff]
        %v677 = vld [vmem:[#allocation13 + $0x100] sm:$0xff]
        %v678 = vld [vmem:[#allocation13 + $0x108] sm:$0xff]
        %v679 = vld [vmem:[#allocation13 + $0x110] sm:$0xff]
        %v680 = vld [vmem:[#allocation13 + $0x118] sm:$0xff]
        %v681 = vld [vmem:[#allocation13 + $0x120] sm:$0xff]
        %v682 = vld [vmem:[#allocation13 + $0x128] sm:$0xff]
        %v683 = vld [vmem:[#allocation13 + $0x130] sm:$0xff]
        %v684 = vld [vmem:[#allocation13 + $0x138] sm:$0xff]
        %v685 = vld [vmem:[#allocation13 + $0x140] sm:$0xff]
        %v686 = vld [vmem:[#allocation13 + $0x148] sm:$0xff]
        %v687 = vld [vmem:[#allocation13 + $0x150] sm:$0xff]
        %v688 = vld [vmem:[#allocation13 + $0x158] sm:$0xff]
        %v689 = vld [vmem:[#allocation13 + $0x160] sm:$0xff]
        %v690 = vld [vmem:[#allocation13 + $0x168] sm:$0xff]
        %v691 = vld [vmem:[#allocation13 + $0x170] sm:$0xff]
        %v692 = vld [vmem:[#allocation13 + $0x178] sm:$0xff]
        %v693 = vld [vmem:[#allocation3] sm:$0xff]
        %v694 = vld [vmem:[#allocation3 + $0x8] sm:$0xff]
        %v695 = vld [vmem:[#allocation3 + $0x10] sm:$0xff]
        %v696 = vld [vmem:[#allocation3 + $0x18] sm:$0xff]
        %v697 = vld [vmem:[#allocation3 + $0x20] sm:$0xff]
        %v698 = vld [vmem:[#allocation3 + $0x28] sm:$0xff]
        %v699 = vld [vmem:[#allocation3 + $0x30] sm:$0xff]
        %v700 = vld [vmem:[#allocation3 + $0x38] sm:$0xff]
        %v701 = vld [vmem:[#allocation3 + $0x40] sm:$0xff]
        %v702 = vld [vmem:[#allocation3 + $0x48] sm:$0xff]
        %v703 = vld [vmem:[#allocation3 + $0x50] sm:$0xff]
        %v704 = vld [vmem:[#allocation3 + $0x58] sm:$0xff]
        %v705 = vld [vmem:[#allocation3 + $0x60] sm:$0xff]
        %v706 = vld [vmem:[#allocation3 + $0x68] sm:$0xff]
        %v707 = vld [vmem:[#allocation3 + $0x70] sm:$0xff]
        %v708 = vld [vmem:[#allocation3 + $0x78] sm:$0xff]
        %709 = vmatprep.subr.mxu0 %v598
        %710 = vmatpush1.msra.mxu0 %v597
        %711 = vmatprep.subr.mxu0 %v601
        %712 = vmatpush1.msra.mxu0 %v600
        %713 = vmatprep.subr.mxu0 %v604
        %714 = vmatpush1.msra.mxu0 %v603
        %715 = vmatprep.subr.mxu0 %v607
        %716 = vmatpush1.msra.mxu0 %v606
        %717 = vmatprep.subr.mxu0 %v610
        %718 = vmatpush1.msra.mxu0 %v609
        %719 = vmatprep.subr.mxu0 %v613
        %720 = vmatpush1.msra.mxu0 %v612
        %721 = vmatprep.subr.mxu0 %v616
        %722 = vmatpush1.msra.mxu0 %v615
        %723 = vmatprep.subr.mxu0 %v619
        %724 = vmatpush1.msra.mxu0 %v618
        %725 = vmatprep.subr.mxu0 %v622
        %726 = vmatpush1.msra.mxu0 %v621
        %727 = vmatprep.subr.mxu0 %v625
        %728 = vmatpush1.msra.mxu0 %v624
        %729 = vmatprep.subr.mxu0 %v628
        %730 = vmatpush1.msra.mxu0 %v627
        %731 = vmatprep.subr.mxu0 %v631
        %732 = vmatpush1.msra.mxu0 %v630
        %733 = vmatprep.subr.mxu0 %v634
        %734 = vmatpush1.msra.mxu0 %v633
        %735 = vmatprep.subr.mxu0 %v637
        %736 = vmatpush1.msra.mxu0 %v636
        %737 = vmatprep.subr.mxu0 %v640
        %738 = vmatpush1.msra.mxu0 %v639
        %739 = vmatprep.subr.mxu0 %v643
        %740 = vmatpush1.msra.mxu0 %v642
        %741 = vmatprep.subr.mxu0 0.0
        %742 = vmatpush1.msra.mxu0 0.0
        %743 = vmatprep.subr.mxu0 0.0
        %744 = vmatpush1.msra.mxu0 0.0
        %745 = vmatprep.subr.mxu0 0.0
        %746 = vmatpush1.msra.mxu0 0.0
        %747 = vmatprep.subr.mxu0 0.0
        %748 = vmatpush1.msra.mxu0 0.0
        %749 = vmatprep.subr.mxu0 0.0
        %750 = vmatpush1.msra.mxu0 0.0
        %751 = vmatprep.subr.mxu0 0.0
        %752 = vmatpush1.msra.mxu0 0.0
        %753 = vmatprep.subr.mxu0 0.0
        %754 = vmatpush1.msra.mxu0 0.0
        %755 = vmatprep.subr.mxu0 0.0
        %756 = vmatpush1.msra.mxu0 0.0
        %757 = vmatprep.subr.mxu0 0.0
        %758 = vmatpush1.msra.mxu0 0.0
        %759 = vmatprep.subr.mxu0 0.0
        %760 = vmatpush1.msra.mxu0 0.0
        %761 = vmatprep.subr.mxu0 0.0
        %762 = vmatpush1.msra.mxu0 0.0
        %763 = vmatprep.subr.mxu0 0.0
        %764 = vmatpush1.msra.mxu0 0.0
        %765 = vmatprep.subr.mxu0 0.0
        %766 = vmatpush1.msra.mxu0 0.0
        %767 = vmatprep.subr.mxu0 0.0
        %768 = vmatpush1.msra.mxu0 0.0
        %769 = vmatprep.subr.mxu0 0.0
        %770 = vmatpush1.msra.mxu0 0.0
        %771 = vmatprep.subr.mxu0 0.0
        %772 = vmatpush1.msra.mxu0 0.0
        %773 = vmatprep.mubr.f32.mxu0 0.0
        %774 = vmatmul.mubr.f32.gmra.mrb[0].mxu0 %v693
        %v775 = vpop.f32.mrb[0].mxu0
        %v776 = vadd.f32 0.0, %v775
        %v777 = vpop.f32.mrb[0].mxu0
        %v778 = vadd.f32 0.0, %v777
        %779 = vmatprep.mubr.f32.mxu0 0.0
        %780 = vmatmul.mubr.f32.gmra.mrb[0].mxu0 %v694
        %v781 = vpop.f32.mrb[0].mxu0
        %v782 = vadd.f32 0.0, %v781
        %v783 = vpop.f32.mrb[0].mxu0
        %v784 = vadd.f32 0.0, %v783
        %785 = vmatprep.mubr.f32.mxu0 0.0
        %786 = vmatmul.mubr.f32.gmra.mrb[0].mxu0 %v695
        %v787 = vpop.f32.mrb[0].mxu0
        %v788 = vadd.f32 0.0, %v787
        %v789 = vpop.f32.mrb[0].mxu0
        %v790 = vadd.f32 0.0, %v789
        %791 = vmatprep.mubr.f32.mxu0 0.0
        %792 = vmatmul.mubr.f32.gmra.mrb[0].mxu0 %v696
        %v793 = vpop.f32.mrb[0].mxu0
        %v794 = vadd.f32 0.0, %v793
        %v795 = vpop.f32.mrb[0].mxu0
        %v796 = vadd.f32 0.0, %v795
        %797 = vmatprep.mubr.f32.mxu0 0.0
        %798 = vmatmul.mubr.f32.gmra.mrb[0].mxu0 %v697
        %v799 = vpop.f32.mrb[0].mxu0
        %v800 = vadd.f32 0.0, %v799
        %v801 = vpop.f32.mrb[0].mxu0
        %v802 = vadd.f32 0.0, %v801
        %803 = vmatprep.mubr.f32.mxu0 0.0
        %804 = vmatmul.mubr.f32.gmra.mrb[0].mxu0 %v698
        %v805 = vpop.f32.mrb[0].mxu0
        %v806 = vadd.f32 0.0, %v805
        %v807 = vpop.f32.mrb[0].mxu0
        %v808 = vadd.f32 0.0, %v807
        %809 = vmatprep.mubr.f32.mxu0 0.0
        %810 = vmatmul.mubr.f32.gmra.mrb[0].mxu0 %v699
        %v811 = vpop.f32.mrb[0].mxu0
        %v812 = vadd.f32 0.0, %v811
        %v813 = vpop.f32.mrb[0].mxu0
        %v814 = vadd.f32 0.0, %v813
        %815 = vmatprep.mubr.f32.mxu0 0.0
        %816 = vmatmul.mubr.f32.gmra.mrb[0].mxu0 %v700
        %v817 = vpop.f32.mrb[0].mxu0
        %v818 = vadd.f32 0.0, %v817
        %v819 = vpop.f32.mrb[0].mxu0
        %v820 = vadd.f32 0.0, %v819
        %821 = vmatprep.mubr.f32.mxu0 0.0
        %822 = vmatmul.mubr.f32.gmra.mrb[0].mxu0 %v701
        %v823 = vpop.f32.mrb[0].mxu0
        %v824 = vadd.f32 0.0, %v823
        %v825 = vpop.f32.mrb[0].mxu0
        %v826 = vadd.f32 0.0, %v825
        %827 = vmatprep.mubr.f32.mxu0 0.0
        %828 = vmatmul.mubr.f32.gmra.mrb[0].mxu0 %v702
        %v829 = vpop.f32.mrb[0].mxu0
        %v830 = vadd.f32 0.0, %v829
        %v831 = vpop.f32.mrb[0].mxu0
        %v832 = vadd.f32 0.0, %v831
        %833 = vmatprep.mubr.f32.mxu0 0.0
        %834 = vmatmul.mubr.f32.gmra.mrb[0].mxu0 %v703
        %v835 = vpop.f32.mrb[0].mxu0
        %v836 = vadd.f32 0.0, %v835
        %v837 = vpop.f32.mrb[0].mxu0
        %v838 = vadd.f32 0.0, %v837
        %839 = vmatprep.mubr.f32.mxu0 0.0
        %840 = vmatmul.mubr.f32.gmra.mrb[0].mxu0 %v704
        %v841 = vpop.f32.mrb[0].mxu0
        %v842 = vadd.f32 0.0, %v841
        %v843 = vpop.f32.mrb[0].mxu0
        %v844 = vadd.f32 0.0, %v843
        %845 = vmatprep.mubr.f32.mxu0 0.0
        %846 = vmatmul.mubr.f32.gmra.mrb[0].mxu0 %v705
        %v847 = vpop.f32.mrb[0].mxu0
        %v848 = vadd.f32 0.0, %v847
        %v849 = vpop.f32.mrb[0].mxu0
        %v850 = vadd.f32 0.0, %v849
        %851 = vmatprep.mubr.f32.mxu0 0.0
        %852 = vmatmul.mubr.f32.gmra.mrb[0].mxu0 %v706
        %v853 = vpop.f32.mrb[0].mxu0
        %v854 = vadd.f32 0.0, %v853
        %v855 = vpop.f32.mrb[0].mxu0
        %v856 = vadd.f32 0.0, %v855
        %857 = vmatprep.mubr.f32.mxu0 0.0
        %858 = vmatmul.mubr.f32.gmra.mrb[0].mxu0 %v707
        %v859 = vpop.f32.mrb[0].mxu0
        %v860 = vadd.f32 0.0, %v859
        %v861 = vpop.f32.mrb[0].mxu0
        %v862 = vadd.f32 0.0, %v861
        %863 = vmatprep.mubr.f32.mxu0 0.0
        %864 = vmatmul.mubr.f32.gmra.mrb[0].mxu0 %v708
        %v865 = vpop.f32.mrb[0].mxu0
        %v866 = vadd.f32 0.0, %v865
        %v867 = vpop.f32.mrb[0].mxu0
        %v868 = vadd.f32 0.0, %v867
        %869 = vdwg.mxu0
        %870 = vmatprep.subr.mxu0 0.0
        %871 = vmatpush1.msra.mxu0 %v599
        %872 = vmatprep.subr.mxu0 0.0
        %873 = vmatpush1.msra.mxu0 %v602
        %874 = vmatprep.subr.mxu0 0.0
        %875 = vmatpush1.msra.mxu0 %v605
        %876 = vmatprep.subr.mxu0 0.0
        %877 = vmatpush1.msra.mxu0 %v608
        %878 = vmatprep.subr.mxu0 0.0
        %879 = vmatpush1.msra.mxu0 %v611
        %880 = vmatprep.subr.mxu0 0.0
        %881 = vmatpush1.msra.mxu0 %v614
        %882 = vmatprep.subr.mxu0 0.0
        %883 = vmatpush1.msra.mxu0 %v617
        %884 = vmatprep.subr.mxu0 0.0
        %885 = vmatpush1.msra.mxu0 %v620
        %886 = vmatprep.subr.mxu0 0.0
        %887 = vmatpush1.msra.mxu0 %v623
        %888 = vmatprep.subr.mxu0 0.0
        %889 = vmatpush1.msra.mxu0 %v626
        %890 = vmatprep.subr.mxu0 0.0
        %891 = vmatpush1.msra.mxu0 %v629
        %892 = vmatprep.subr.mxu0 0.0
        %893 = vmatpush1.msra.mxu0 %v632
        %894 = vmatprep.subr.mxu0 0.0
        %895 = vmatpush1.msra.mxu0 %v635
        %896 = vmatprep.subr.mxu0 0.0
        %897 = vmatpush1.msra.mxu0 %v638
        %898 = vmatprep.subr.mxu0 0.0
        %899 = vmatpush1.msra.mxu0 %v641
        %900 = vmatprep.subr.mxu0 0.0
        %901 = vmatpush1.msra.mxu0 %v644
        %902 = vmatprep.subr.mxu0 0.0
        %903 = vmatpush1.msra.mxu0 0.0
        %904 = vmatprep.subr.mxu0 0.0
        %905 = vmatpush1.msra.mxu0 0.0
        %906 = vmatprep.subr.mxu0 0.0
        %907 = vmatpush1.msra.mxu0 0.0
        %908 = vmatprep.subr.mxu0 0.0
        %909 = vmatpush1.msra.mxu0 0.0
        %910 = vmatprep.subr.mxu0 0.0
        %911 = vmatpush1.msra.mxu0 0.0
        %912 = vmatprep.subr.mxu0 0.0
        %913 = vmatpush1.msra.mxu0 0.0
        %914 = vmatprep.subr.mxu0 0.0
        %915 = vmatpush1.msra.mxu0 0.0
        %916 = vmatprep.subr.mxu0 0.0
        %917 = vmatpush1.msra.mxu0 0.0
        %918 = vmatprep.subr.mxu0 0.0
        %919 = vmatpush1.msra.mxu0 0.0
        %920 = vmatprep.subr.mxu0 0.0
        %921 = vmatpush1.msra.mxu0 0.0
        %922 = vmatprep.subr.mxu0 0.0
        %923 = vmatpush1.msra.mxu0 0.0
        %924 = vmatprep.subr.mxu0 0.0
        %925 = vmatpush1.msra.mxu0 0.0
        %926 = vmatprep.subr.mxu0 0.0
        %927 = vmatpush1.msra.mxu0 0.0
        %928 = vmatprep.subr.mxu0 0.0
        %929 = vmatpush1.msra.mxu0 0.0
        %930 = vmatprep.subr.mxu0 0.0
        %931 = vmatpush1.msra.mxu0 0.0
        %932 = vmatprep.subr.mxu0 0.0
        %933 = vmatpush1.msra.mxu0 0.0
        %934 = vmatprep.mubr.f32.mxu0 0.0
        %935 = vmatmul.mubr.f32.gmra.mrb[0].mxu0 %v693
        %v936 = vpop.f32.mrb[0].mxu0
        %v937 = vadd.f32 0.0, %v936
        %v938 = vpop.f32.mrb[0].mxu0
        %939 = vmatprep.mubr.f32.mxu0 0.0
        %940 = vmatmul.mubr.f32.gmra.mrb[0].mxu0 %v694
        %v941 = vpop.f32.mrb[0].mxu0
        %v942 = vadd.f32 0.0, %v941
        %v943 = vpop.f32.mrb[0].mxu0
        %944 = vmatprep.mubr.f32.mxu0 0.0
        %945 = vmatmul.mubr.f32.gmra.mrb[0].mxu0 %v695
        %v946 = vpop.f32.mrb[0].mxu0
        %v947 = vadd.f32 0.0, %v946
        %v948 = vpop.f32.mrb[0].mxu0
        %949 = vmatprep.mubr.f32.mxu0 0.0
        %950 = vmatmul.mubr.f32.gmra.mrb[0].mxu0 %v696
        %v951 = vpop.f32.mrb[0].mxu0
        %v952 = vadd.f32 0.0, %v951
        %v953 = vpop.f32.mrb[0].mxu0
        %954 = vmatprep.mubr.f32.mxu0 0.0
        %955 = vmatmul.mubr.f32.gmra.mrb[0].mxu0 %v697
        %v956 = vpop.f32.mrb[0].mxu0
        %v957 = vadd.f32 0.0, %v956
        %v958 = vpop.f32.mrb[0].mxu0
        %959 = vmatprep.mubr.f32.mxu0 0.0
        %960 = vmatmul.mubr.f32.gmra.mrb[0].mxu0 %v698
        %v961 = vpop.f32.mrb[0].mxu0
        %v962 = vadd.f32 0.0, %v961
        %v963 = vpop.f32.mrb[0].mxu0
        %964 = vmatprep.mubr.f32.mxu0 0.0
        %965 = vmatmul.mubr.f32.gmra.mrb[0].mxu0 %v699
        %v966 = vpop.f32.mrb[0].mxu0
        %v967 = vadd.f32 0.0, %v966
        %v968 = vpop.f32.mrb[0].mxu0
        %969 = vmatprep.mubr.f32.mxu0 0.0
        %970 = vmatmul.mubr.f32.gmra.mrb[0].mxu0 %v700
        %v971 = vpop.f32.mrb[0].mxu0
        %v972 = vadd.f32 0.0, %v971
        %v973 = vpop.f32.mrb[0].mxu0
        %974 = vmatprep.mubr.f32.mxu0 0.0
        %975 = vmatmul.mubr.f32.gmra.mrb[0].mxu0 %v701
        %v976 = vpop.f32.mrb[0].mxu0
        %v977 = vadd.f32 0.0, %v976
        %v978 = vpop.f32.mrb[0].mxu0
        %979 = vmatprep.mubr.f32.mxu0 0.0
        %980 = vmatmul.mubr.f32.gmra.mrb[0].mxu0 %v702
        %v981 = vpop.f32.mrb[0].mxu0
        %v982 = vadd.f32 0.0, %v981
        %v983 = vpop.f32.mrb[0].mxu0
        %984 = vmatprep.mubr.f32.mxu0 0.0
        %985 = vmatmul.mubr.f32.gmra.mrb[0].mxu0 %v703
        %v986 = vpop.f32.mrb[0].mxu0
        %v987 = vadd.f32 0.0, %v986
        %v988 = vpop.f32.mrb[0].mxu0
        %989 = vmatprep.mubr.f32.mxu0 0.0
        %990 = vmatmul.mubr.f32.gmra.mrb[0].mxu0 %v704
        %v991 = vpop.f32.mrb[0].mxu0
        %v992 = vadd.f32 0.0, %v991
        %v993 = vpop.f32.mrb[0].mxu0
        %994 = vmatprep.mubr.f32.mxu0 0.0
        %995 = vmatmul.mubr.f32.gmra.mrb[0].mxu0 %v705
        %v996 = vpop.f32.mrb[0].mxu0
        %v997 = vadd.f32 0.0, %v996
        %v998 = vpop.f32.mrb[0].mxu0
        %999 = vmatprep.mubr.f32.mxu0 0.0
        %1000 = vmatmul.mubr.f32.gmra.mrb[0].mxu0 %v706
        %v1001 = vpop.f32.mrb[0].mxu0
        %v1002 = vadd.f32 0.0, %v1001
        %v1003 = vpop.f32.mrb[0].mxu0
        %1004 = vmatprep.mubr.f32.mxu0 0.0
        %1005 = vmatmul.mubr.f32.gmra.mrb[0].mxu0 %v707
        %v1006 = vpop.f32.mrb[0].mxu0
        %v1007 = vadd.f32 0.0, %v1006
        %v1008 = vpop.f32.mrb[0].mxu0
        %1009 = vmatprep.mubr.f32.mxu0 0.0
        %1010 = vmatmul.mubr.f32.gmra.mrb[0].mxu0 %v708
        %v1011 = vpop.f32.mrb[0].mxu0
        %v1012 = vadd.f32 0.0, %v1011
        %v1013 = vpop.f32.mrb[0].mxu0
        %1014 = vdwg.mxu0
        %v1015 = vld [vmem:[#allocation2] sm:$0xff]
        %v1016 = vld [vmem:[#allocation2 + $0x8] sm:$0xff]
        %v1017 = vld [vmem:[#allocation2 + $0x10] sm:$0xff]
        %v1018 = vld [vmem:[#allocation2 + $0x18] sm:$0xff]
        %v1019 = vld [vmem:[#allocation2 + $0x20] sm:$0xff]
        %v1020 = vld [vmem:[#allocation2 + $0x28] sm:$0xff]
        %v1021 = vld [vmem:[#allocation2 + $0x30] sm:$0xff]
        %v1022 = vld [vmem:[#allocation2 + $0x38] sm:$0xff]
        %v1023 = vld [vmem:[#allocation2 + $0x40] sm:$0xff]
        %v1024 = vld [vmem:[#allocation2 + $0x48] sm:$0xff]
        %v1025 = vld [vmem:[#allocation2 + $0x50] sm:$0xff]
        %v1026 = vld [vmem:[#allocation2 + $0x58] sm:$0xff]
        %v1027 = vld [vmem:[#allocation2 + $0x60] sm:$0xff]
        %v1028 = vld [vmem:[#allocation2 + $0x68] sm:$0xff]
        %v1029 = vld [vmem:[#allocation2 + $0x70] sm:$0xff]
        %v1030 = vld [vmem:[#allocation2 + $0x78] sm:$0xff]
        %1031 = vmatprep.subr.mxu0 %v646
        %1032 = vmatpush1.msra.mxu0 %v645
        %1033 = vmatprep.subr.mxu0 %v649
        %1034 = vmatpush1.msra.mxu0 %v648
        %1035 = vmatprep.subr.mxu0 %v652
        %1036 = vmatpush1.msra.mxu0 %v651
        %1037 = vmatprep.subr.mxu0 %v655
        %1038 = vmatpush1.msra.mxu0 %v654
        %1039 = vmatprep.subr.mxu0 %v658
        %1040 = vmatpush1.msra.mxu0 %v657
        %1041 = vmatprep.subr.mxu0 %v661
        %1042 = vmatpush1.msra.mxu0 %v660
        %1043 = vmatprep.subr.mxu0 %v664
        %1044 = vmatpush1.msra.mxu0 %v663
        %1045 = vmatprep.subr.mxu0 %v667
        %1046 = vmatpush1.msra.mxu0 %v666
        %1047 = vmatprep.subr.mxu0 %v670
        %1048 = vmatpush1.msra.mxu0 %v669
        %1049 = vmatprep.subr.mxu0 %v673
        %1050 = vmatpush1.msra.mxu0 %v672
        %1051 = vmatprep.subr.mxu0 %v676
        %1052 = vmatpush1.msra.mxu0 %v675
        %1053 = vmatprep.subr.mxu0 %v679
        %1054 = vmatpush1.msra.mxu0 %v678
        %1055 = vmatprep.subr.mxu0 %v682
        %1056 = vmatpush1.msra.mxu0 %v681
        %1057 = vmatprep.subr.mxu0 %v685
        %1058 = vmatpush1.msra.mxu0 %v684
        %1059 = vmatprep.subr.mxu0 %v688
        %1060 = vmatpush1.msra.mxu0 %v687
        %1061 = vmatprep.subr.mxu0 %v691
        %1062 = vmatpush1.msra.mxu0 %v690
        %1063 = vmatprep.subr.mxu0 0.0
        %1064 = vmatpush1.msra.mxu0 0.0
        %1065 = vmatprep.subr.mxu0 0.0
        %1066 = vmatpush1.msra.mxu0 0.0
        %1067 = vmatprep.subr.mxu0 0.0
        %1068 = vmatpush1.msra.mxu0 0.0
        %1069 = vmatprep.subr.mxu0 0.0
        %1070 = vmatpush1.msra.mxu0 0.0
        %1071 = vmatprep.subr.mxu0 0.0
        %1072 = vmatpush1.msra.mxu0 0.0
        %1073 = vmatprep.subr.mxu0 0.0
        %1074 = vmatpush1.msra.mxu0 0.0
        %1075 = vmatprep.subr.mxu0 0.0
        %1076 = vmatpush1.msra.mxu0 0.0
        %1077 = vmatprep.subr.mxu0 0.0
        %1078 = vmatpush1.msra.mxu0 0.0
        %1079 = vmatprep.subr.mxu0 0.0
        %1080 = vmatpush1.msra.mxu0 0.0
        %1081 = vmatprep.subr.mxu0 0.0
        %1082 = vmatpush1.msra.mxu0 0.0
        %1083 = vmatprep.subr.mxu0 0.0
        %1084 = vmatpush1.msra.mxu0 0.0
        %1085 = vmatprep.subr.mxu0 0.0
        %1086 = vmatpush1.msra.mxu0 0.0
        %1087 = vmatprep.subr.mxu0 0.0
        %1088 = vmatpush1.msra.mxu0 0.0
        %1089 = vmatprep.subr.mxu0 0.0
        %1090 = vmatpush1.msra.mxu0 0.0
        %1091 = vmatprep.subr.mxu0 0.0
        %1092 = vmatpush1.msra.mxu0 0.0
        %1093 = vmatprep.subr.mxu0 0.0
        %1094 = vmatpush1.msra.mxu0 0.0
        %1095 = vmatprep.mubr.f32.mxu0 0.0
        %1096 = vmatmul.mubr.f32.gmra.mrb[0].mxu0 %v1015
        %v1097 = vpop.f32.mrb[0].mxu0
        %v1098 = vadd.f32 0.0, %v1097
        %v1099 = vpop.f32.mrb[0].mxu0
        %v1100 = vadd.f32 0.0, %v1099
        %1101 = vmatprep.mubr.f32.mxu0 0.0
        %1102 = vmatmul.mubr.f32.gmra.mrb[0].mxu0 %v1016
        %v1103 = vpop.f32.mrb[0].mxu0
        %v1104 = vadd.f32 0.0, %v1103
        %v1105 = vpop.f32.mrb[0].mxu0
        %v1106 = vadd.f32 0.0, %v1105
        %1107 = vmatprep.mubr.f32.mxu0 0.0
        %1108 = vmatmul.mubr.f32.gmra.mrb[0].mxu0 %v1017
        %v1109 = vpop.f32.mrb[0].mxu0
        %v1110 = vadd.f32 0.0, %v1109
        %v1111 = vpop.f32.mrb[0].mxu0
        %v1112 = vadd.f32 0.0, %v1111
        %1113 = vmatprep.mubr.f32.mxu0 0.0
        %1114 = vmatmul.mubr.f32.gmra.mrb[0].mxu0 %v1018
        %v1115 = vpop.f32.mrb[0].mxu0
        %v1116 = vadd.f32 0.0, %v1115
        %v1117 = vpop.f32.mrb[0].mxu0
        %v1118 = vadd.f32 0.0, %v1117
        %1119 = vmatprep.mubr.f32.mxu0 0.0
        %1120 = vmatmul.mubr.f32.gmra.mrb[0].mxu0 %v1019
        %v1121 = vpop.f32.mrb[0].mxu0
        %v1122 = vadd.f32 0.0, %v1121
        %v1123 = vpop.f32.mrb[0].mxu0
        %v1124 = vadd.f32 0.0, %v1123
        %1125 = vmatprep.mubr.f32.mxu0 0.0
        %1126 = vmatmul.mubr.f32.gmra.mrb[0].mxu0 %v1020
        %v1127 = vpop.f32.mrb[0].mxu0
        %v1128 = vadd.f32 0.0, %v1127
        %v1129 = vpop.f32.mrb[0].mxu0
        %v1130 = vadd.f32 0.0, %v1129
        %1131 = vmatprep.mubr.f32.mxu0 0.0
        %1132 = vmatmul.mubr.f32.gmra.mrb[0].mxu0 %v1021
        %v1133 = vpop.f32.mrb[0].mxu0
        %v1134 = vadd.f32 0.0, %v1133
        %v1135 = vpop.f32.mrb[0].mxu0
        %v1136 = vadd.f32 0.0, %v1135
        %1137 = vmatprep.mubr.f32.mxu0 0.0
        %1138 = vmatmul.mubr.f32.gmra.mrb[0].mxu0 %v1022
        %v1139 = vpop.f32.mrb[0].mxu0
        %v1140 = vadd.f32 0.0, %v1139
        %v1141 = vpop.f32.mrb[0].mxu0
        %v1142 = vadd.f32 0.0, %v1141
        %1143 = vmatprep.mubr.f32.mxu0 0.0
        %1144 = vmatmul.mubr.f32.gmra.mrb[0].mxu0 %v1023
        %v1145 = vpop.f32.mrb[0].mxu0
        %v1146 = vadd.f32 0.0, %v1145
        %v1147 = vpop.f32.mrb[0].mxu0
        %v1148 = vadd.f32 0.0, %v1147
        %1149 = vmatprep.mubr.f32.mxu0 0.0
        %1150 = vmatmul.mubr.f32.gmra.mrb[0].mxu0 %v1024
        %v1151 = vpop.f32.mrb[0].mxu0
        %v1152 = vadd.f32 0.0, %v1151
        %v1153 = vpop.f32.mrb[0].mxu0
        %v1154 = vadd.f32 0.0, %v1153
        %1155 = vmatprep.mubr.f32.mxu0 0.0
        %1156 = vmatmul.mubr.f32.gmra.mrb[0].mxu0 %v1025
        %v1157 = vpop.f32.mrb[0].mxu0
        %v1158 = vadd.f32 0.0, %v1157
        %v1159 = vpop.f32.mrb[0].mxu0
        %v1160 = vadd.f32 0.0, %v1159
        %1161 = vmatprep.mubr.f32.mxu0 0.0
        %1162 = vmatmul.mubr.f32.gmra.mrb[0].mxu0 %v1026
        %v1163 = vpop.f32.mrb[0].mxu0
        %v1164 = vadd.f32 0.0, %v1163
        %v1165 = vpop.f32.mrb[0].mxu0
        %v1166 = vadd.f32 0.0, %v1165
        %1167 = vmatprep.mubr.f32.mxu0 0.0
        %1168 = vmatmul.mubr.f32.gmra.mrb[0].mxu0 %v1027
        %v1169 = vpop.f32.mrb[0].mxu0
        %v1170 = vadd.f32 0.0, %v1169
        %v1171 = vpop.f32.mrb[0].mxu0
        %v1172 = vadd.f32 0.0, %v1171
        %1173 = vmatprep.mubr.f32.mxu0 0.0
        %1174 = vmatmul.mubr.f32.gmra.mrb[0].mxu0 %v1028
        %v1175 = vpop.f32.mrb[0].mxu0
        %v1176 = vadd.f32 0.0, %v1175
        %v1177 = vpop.f32.mrb[0].mxu0
        %v1178 = vadd.f32 0.0, %v1177
        %1179 = vmatprep.mubr.f32.mxu0 0.0
        %1180 = vmatmul.mubr.f32.gmra.mrb[0].mxu0 %v1029
        %v1181 = vpop.f32.mrb[0].mxu0
        %v1182 = vadd.f32 0.0, %v1181
        %v1183 = vpop.f32.mrb[0].mxu0
        %v1184 = vadd.f32 0.0, %v1183
        %1185 = vmatprep.mubr.f32.mxu0 0.0
        %1186 = vmatmul.mubr.f32.gmra.mrb[0].mxu0 %v1030
        %v1187 = vpop.f32.mrb[0].mxu0
        %v1188 = vadd.f32 0.0, %v1187
        %v1189 = vpop.f32.mrb[0].mxu0
        %v1190 = vadd.f32 0.0, %v1189
        %1191 = vdwg.mxu0
        %1192 = vmatprep.subr.mxu0 0.0
        %1193 = vmatpush1.msra.mxu0 %v647
        %1194 = vmatprep.subr.mxu0 0.0
        %1195 = vmatpush1.msra.mxu0 %v650
        %1196 = vmatprep.subr.mxu0 0.0
        %1197 = vmatpush1.msra.mxu0 %v653
        %1198 = vmatprep.subr.mxu0 0.0
        %1199 = vmatpush1.msra.mxu0 %v656
        %1200 = vmatprep.subr.mxu0 0.0
        %1201 = vmatpush1.msra.mxu0 %v659
        %1202 = vmatprep.subr.mxu0 0.0
        %1203 = vmatpush1.msra.mxu0 %v662
        %1204 = vmatprep.subr.mxu0 0.0
        %1205 = vmatpush1.msra.mxu0 %v665
        %1206 = vmatprep.subr.mxu0 0.0
        %1207 = vmatpush1.msra.mxu0 %v668
        %1208 = vmatprep.subr.mxu0 0.0
        %1209 = vmatpush1.msra.mxu0 %v671
        %1210 = vmatprep.subr.mxu0 0.0
        %1211 = vmatpush1.msra.mxu0 %v674
        %1212 = vmatprep.subr.mxu0 0.0
        %1213 = vmatpush1.msra.mxu0 %v677
        %1214 = vmatprep.subr.mxu0 0.0
        %1215 = vmatpush1.msra.mxu0 %v680
        %1216 = vmatprep.subr.mxu0 0.0
        %1217 = vmatpush1.msra.mxu0 %v683
        %1218 = vmatprep.subr.mxu0 0.0
        %1219 = vmatpush1.msra.mxu0 %v686
        %1220 = vmatprep.subr.mxu0 0.0
        %1221 = vmatpush1.msra.mxu0 %v689
        %1222 = vmatprep.subr.mxu0 0.0
        %1223 = vmatpush1.msra.mxu0 %v692
        %1224 = vmatprep.subr.mxu0 0.0
        %1225 = vmatpush1.msra.mxu0 0.0
        %1226 = vmatprep.subr.mxu0 0.0
        %1227 = vmatpush1.msra.mxu0 0.0
        %1228 = vmatprep.subr.mxu0 0.0
        %1229 = vmatpush1.msra.mxu0 0.0
        %1230 = vmatprep.subr.mxu0 0.0
        %1231 = vmatpush1.msra.mxu0 0.0
        %1232 = vmatprep.subr.mxu0 0.0
        %1233 = vmatpush1.msra.mxu0 0.0
        %1234 = vmatprep.subr.mxu0 0.0
        %1235 = vmatpush1.msra.mxu0 0.0
        %1236 = vmatprep.subr.mxu0 0.0
        %1237 = vmatpush1.msra.mxu0 0.0
        %1238 = vmatprep.subr.mxu0 0.0
        %1239 = vmatpush1.msra.mxu0 0.0
        %1240 = vmatprep.subr.mxu0 0.0
        %1241 = vmatpush1.msra.mxu0 0.0
        %1242 = vmatprep.subr.mxu0 0.0
        %1243 = vmatpush1.msra.mxu0 0.0
        %1244 = vmatprep.subr.mxu0 0.0
        %1245 = vmatpush1.msra.mxu0 0.0
        %1246 = vmatprep.subr.mxu0 0.0
        %1247 = vmatpush1.msra.mxu0 0.0
        %1248 = vmatprep.subr.mxu0 0.0
        %1249 = vmatpush1.msra.mxu0 0.0
        %1250 = vmatprep.subr.mxu0 0.0
        %1251 = vmatpush1.msra.mxu0 0.0
        %1252 = vmatprep.subr.mxu0 0.0
        %1253 = vmatpush1.msra.mxu0 0.0
        %1254 = vmatprep.subr.mxu0 0.0
        %1255 = vmatpush1.msra.mxu0 0.0
        %1256 = vmatprep.mubr.f32.mxu0 0.0
        %1257 = vmatmul.mubr.f32.gmra.mrb[0].mxu0 %v1015
        %v1258 = vpop.f32.mrb[0].mxu0
        %v1259 = vadd.f32 0.0, %v1258
        %v1260 = vpop.f32.mrb[0].mxu0
        %1261 = vmatprep.mubr.f32.mxu0 0.0
        %1262 = vmatmul.mubr.f32.gmra.mrb[0].mxu0 %v1016
        %v1263 = vpop.f32.mrb[0].mxu0
        %v1264 = vadd.f32 0.0, %v1263
        %v1265 = vpop.f32.mrb[0].mxu0
        %1266 = vmatprep.mubr.f32.mxu0 0.0
        %1267 = vmatmul.mubr.f32.gmra.mrb[0].mxu0 %v1017
        %v1268 = vpop.f32.mrb[0].mxu0
        %v1269 = vadd.f32 0.0, %v1268
        %v1270 = vpop.f32.mrb[0].mxu0
        %1271 = vmatprep.mubr.f32.mxu0 0.0
        %1272 = vmatmul.mubr.f32.gmra.mrb[0].mxu0 %v1018
        %v1273 = vpop.f32.mrb[0].mxu0
        %v1274 = vadd.f32 0.0, %v1273
        %v1275 = vpop.f32.mrb[0].mxu0
        %1276 = vmatprep.mubr.f32.mxu0 0.0
        %1277 = vmatmul.mubr.f32.gmra.mrb[0].mxu0 %v1019
        %v1278 = vpop.f32.mrb[0].mxu0
        %v1279 = vadd.f32 0.0, %v1278
        %v1280 = vpop.f32.mrb[0].mxu0
        %1281 = vmatprep.mubr.f32.mxu0 0.0
        %1282 = vmatmul.mubr.f32.gmra.mrb[0].mxu0 %v1020
        %v1283 = vpop.f32.mrb[0].mxu0
        %v1284 = vadd.f32 0.0, %v1283
        %v1285 = vpop.f32.mrb[0].mxu0
        %1286 = vmatprep.mubr.f32.mxu0 0.0
        %1287 = vmatmul.mubr.f32.gmra.mrb[0].mxu0 %v1021
        %v1288 = vpop.f32.mrb[0].mxu0
        %v1289 = vadd.f32 0.0, %v1288
        %v1290 = vpop.f32.mrb[0].mxu0
        %1291 = vmatprep.mubr.f32.mxu0 0.0
        %1292 = vmatmul.mubr.f32.gmra.mrb[0].mxu0 %v1022
        %v1293 = vpop.f32.mrb[0].mxu0
        %v1294 = vadd.f32 0.0, %v1293
        %v1295 = vpop.f32.mrb[0].mxu0
        %1296 = vmatprep.mubr.f32.mxu0 0.0
        %1297 = vmatmul.mubr.f32.gmra.mrb[0].mxu0 %v1023
        %v1298 = vpop.f32.mrb[0].mxu0
        %v1299 = vadd.f32 0.0, %v1298
        %v1300 = vpop.f32.mrb[0].mxu0
        %1301 = vmatprep.mubr.f32.mxu0 0.0
        %1302 = vmatmul.mubr.f32.gmra.mrb[0].mxu0 %v1024
        %v1303 = vpop.f32.mrb[0].mxu0
        %v1304 = vadd.f32 0.0, %v1303
        %v1305 = vpop.f32.mrb[0].mxu0
        %1306 = vmatprep.mubr.f32.mxu0 0.0
        %1307 = vmatmul.mubr.f32.gmra.mrb[0].mxu0 %v1025
        %v1308 = vpop.f32.mrb[0].mxu0
        %v1309 = vadd.f32 0.0, %v1308
        %v1310 = vpop.f32.mrb[0].mxu0
        %1311 = vmatprep.mubr.f32.mxu0 0.0
        %1312 = vmatmul.mubr.f32.gmra.mrb[0].mxu0 %v1026
        %v1313 = vpop.f32.mrb[0].mxu0
        %v1314 = vadd.f32 0.0, %v1313
        %v1315 = vpop.f32.mrb[0].mxu0
        %1316 = vmatprep.mubr.f32.mxu0 0.0
        %1317 = vmatmul.mubr.f32.gmra.mrb[0].mxu0 %v1027
        %v1318 = vpop.f32.mrb[0].mxu0
        %v1319 = vadd.f32 0.0, %v1318
        %v1320 = vpop.f32.mrb[0].mxu0
        %1321 = vmatprep.mubr.f32.mxu0 0.0
        %1322 = vmatmul.mubr.f32.gmra.mrb[0].mxu0 %v1028
        %v1323 = vpop.f32.mrb[0].mxu0
        %v1324 = vadd.f32 0.0, %v1323
        %v1325 = vpop.f32.mrb[0].mxu0
        %1326 = vmatprep.mubr.f32.mxu0 0.0
        %1327 = vmatmul.mubr.f32.gmra.mrb[0].mxu0 %v1029
        %v1328 = vpop.f32.mrb[0].mxu0
        %v1329 = vadd.f32 0.0, %v1328
        %v1330 = vpop.f32.mrb[0].mxu0
        %1331 = vmatprep.mubr.f32.mxu0 0.0
        %1332 = vmatmul.mubr.f32.gmra.mrb[0].mxu0 %v1030
        %v1333 = vpop.f32.mrb[0].mxu0
        %v1334 = vadd.f32 0.0, %v1333
        %v1335 = vpop.f32.mrb[0].mxu0
        %1336 = vdwg.mxu0
        %s1337 = smul.u32 %s27, 384
        %v1338 = vlaneseq
        %v1339 = vand.u32 %v1338, 127
        %v1340 = vadd.s32 %v1339, 128
        %v1341 = vadd.s32 %v1339, 256
        %v1342 = vstv %s1337
        %v1343 = vadd.s32 %v1342, %v1339
        %v1344 = vadd.s32 %v1342, %v1340
        %v1345 = vadd.s32 %v1342, %v1341
        %vm1346 = vcmp.lt.s32.totalorder %v1343, 300
        %vm1347 = vcmp.lt.s32.totalorder %v1344, 300
        %vm1348 = vcmp.lt.s32.totalorder %v1345, 300
        %v1349 = vsel %vm1346, %v776, -1e+30
        %v1350 = vsel %vm1347, %v778, -1e+30
        %v1351 = vsel %vm1348, %v937, -1e+30
        %v1352 = vsel %vm1346, %v782, -1e+30
        %v1353 = vsel %vm1347, %v784, -1e+30
        %v1354 = vsel %vm1348, %v942, -1e+30
        %v1355 = vsel %vm1346, %v788, -1e+30
        %v1356 = vsel %vm1347, %v790, -1e+30
        %v1357 = vsel %vm1348, %v947, -1e+30
        %v1358 = vsel %vm1346, %v794, -1e+30
        %v1359 = vsel %vm1347, %v796, -1e+30
        %v1360 = vsel %vm1348, %v952, -1e+30
        %v1361 = vsel %vm1346, %v800, -1e+30
        %v1362 = vsel %vm1347, %v802, -1e+30
        %v1363 = vsel %vm1348, %v957, -1e+30
        %v1364 = vsel %vm1346, %v806, -1e+30
        %v1365 = vsel %vm1347, %v808, -1e+30
        %v1366 = vsel %vm1348, %v962, -1e+30
        %v1367 = vsel %vm1346, %v812, -1e+30
        %v1368 = vsel %vm1347, %v814, -1e+30
        %v1369 = vsel %vm1348, %v967, -1e+30
        %v1370 = vsel %vm1346, %v818, -1e+30
        %v1371 = vsel %vm1347, %v820, -1e+30
        %v1372 = vsel %vm1348, %v972, -1e+30
        %v1373 = vsel %vm1346, %v824, -1e+30
        %v1374 = vsel %vm1347, %v826, -1e+30
        %v1375 = vsel %vm1348, %v977, -1e+30
        %v1376 = vsel %vm1346, %v830, -1e+30
        %v1377 = vsel %vm1347, %v832, -1e+30
        %v1378 = vsel %vm1348, %v982, -1e+30
        %v1379 = vsel %vm1346, %v836, -1e+30
        %v1380 = vsel %vm1347, %v838, -1e+30
        %v1381 = vsel %vm1348, %v987, -1e+30
        %v1382 = vsel %vm1346, %v842, -1e+30
        %v1383 = vsel %vm1347, %v844, -1e+30
        %v1384 = vsel %vm1348, %v992, -1e+30
        %v1385 = vsel %vm1346, %v848, -1e+30
        %v1386 = vsel %vm1347, %v850, -1e+30
        %v1387 = vsel %vm1348, %v997, -1e+30
        %v1388 = vsel %vm1346, %v854, -1e+30
        %v1389 = vsel %vm1347, %v856, -1e+30
        %v1390 = vsel %vm1348, %v1002, -1e+30
        %v1391 = vsel %vm1346, %v860, -1e+30
        %v1392 = vsel %vm1347, %v862, -1e+30
        %v1393 = vsel %vm1348, %v1007, -1e+30
        %v1394 = vsel %vm1346, %v866, -1e+30
        %v1395 = vsel %vm1347, %v868, -1e+30
        %v1396 = vsel %vm1348, %v1012, -1e+30
        %v1397 = vsel %vm1346, %v1098, -1e+30
        %v1398 = vsel %vm1347, %v1100, -1e+30
        %v1399 = vsel %vm1348, %v1259, -1e+30
        %v1400 = vsel %vm1346, %v1104, -1e+30
        %v1401 = vsel %vm1347, %v1106, -1e+30
        %v1402 = vsel %vm1348, %v1264, -1e+30
        %v1403 = vsel %vm1346, %v1110, -1e+30
        %v1404 = vsel %vm1347, %v1112, -1e+30
        %v1405 = vsel %vm1348, %v1269, -1e+30
        %v1406 = vsel %vm1346, %v1116, -1e+30
        %v1407 = vsel %vm1347, %v1118, -1e+30
        %v1408 = vsel %vm1348, %v1274, -1e+30
        %v1409 = vsel %vm1346, %v1122, -1e+30
        %v1410 = vsel %vm1347, %v1124, -1e+30
        %v1411 = vsel %vm1348, %v1279, -1e+30
        %v1412 = vsel %vm1346, %v1128, -1e+30
        %v1413 = vsel %vm1347, %v1130, -1e+30
        %v1414 = vsel %vm1348, %v1284, -1e+30
        %v1415 = vsel %vm1346, %v1134, -1e+30
        %v1416 = vsel %vm1347, %v1136, -1e+30
        %v1417 = vsel %vm1348, %v1289, -1e+30
        %v1418 = vsel %vm1346, %v1140, -1e+30
        %v1419 = vsel %vm1347, %v1142, -1e+30
        %v1420 = vsel %vm1348, %v1294, -1e+30
        %v1421 = vsel %vm1346, %v1146, -1e+30
        %v1422 = vsel %vm1347, %v1148, -1e+30
        %v1423 = vsel %vm1348, %v1299, -1e+30
        %v1424 = vsel %vm1346, %v1152, -1e+30
        %v1425 = vsel %vm1347, %v1154, -1e+30
        %v1426 = vsel %vm1348, %v1304, -1e+30
        %v1427 = vsel %vm1346, %v1158, -1e+30
        %v1428 = vsel %vm1347, %v1160, -1e+30
        %v1429 = vsel %vm1348, %v1309, -1e+30
        %v1430 = vsel %vm1346, %v1164, -1e+30
        %v1431 = vsel %vm1347, %v1166, -1e+30
        %v1432 = vsel %vm1348, %v1314, -1e+30
        %v1433 = vsel %vm1346, %v1170, -1e+30
        %v1434 = vsel %vm1347, %v1172, -1e+30
        %v1435 = vsel %vm1348, %v1319, -1e+30
        %v1436 = vsel %vm1346, %v1176, -1e+30
        %v1437 = vsel %vm1347, %v1178, -1e+30
        %v1438 = vsel %vm1348, %v1324, -1e+30
        %v1439 = vsel %vm1346, %v1182, -1e+30
        %v1440 = vsel %vm1347, %v1184, -1e+30
        %v1441 = vsel %vm1348, %v1329, -1e+30
        %v1442 = vsel %vm1346, %v1188, -1e+30
        %v1443 = vsel %vm1347, %v1190, -1e+30
        %v1444 = vsel %vm1348, %v1334, -1e+30
        %v1445 = vld [vmem:[#allocation4] sm:$0xff]
        %v1446 = vld [vmem:[#allocation4 + $0x8] sm:$0xff]
        %v1447 = vld [vmem:[#allocation4 + $0x10] sm:$0xff]
        %v1448 = vld [vmem:[#allocation4 + $0x18] sm:$0xff]
        %v1449 = vld [vmem:[#allocation4 + $0x20] sm:$0xff]
        %v1450 = vld [vmem:[#allocation4 + $0x28] sm:$0xff]
        %v1451 = vld [vmem:[#allocation4 + $0x30] sm:$0xff]
        %v1452 = vld [vmem:[#allocation4 + $0x38] sm:$0xff]
        %v1453 = vld [vmem:[#allocation4 + $0x40] sm:$0xff]
        %v1454 = vld [vmem:[#allocation4 + $0x48] sm:$0xff]
        %v1455 = vld [vmem:[#allocation4 + $0x50] sm:$0xff]
        %v1456 = vld [vmem:[#allocation4 + $0x58] sm:$0xff]
        %v1457 = vld [vmem:[#allocation4 + $0x60] sm:$0xff]
        %v1458 = vld [vmem:[#allocation4 + $0x68] sm:$0xff]
        %v1459 = vld [vmem:[#allocation4 + $0x70] sm:$0xff]
        %v1460 = vld [vmem:[#allocation4 + $0x78] sm:$0xff]
        %v1461 = vmax.f32 %v1349, %v1350
        %v1462 = vmax.f32 %v1461, %v1351
        %1463 = vmax.xlane.f32.xlu0 %v1462
        %v1464 = vpop.xlane.xlu0 %1463
        %v1465 = vmax.f32 %v1352, %v1353
        %v1466 = vmax.f32 %v1465, %v1354
        %1467 = vmax.xlane.f32.xlu0 %v1466
        %v1468 = vpop.xlane.xlu0 %1467
        %v1469 = vmax.f32 %v1355, %v1356
        %v1470 = vmax.f32 %v1469, %v1357
        %1471 = vmax.xlane.f32.xlu0 %v1470
        %v1472 = vpop.xlane.xlu0 %1471
        %v1473 = vmax.f32 %v1358, %v1359
        %v1474 = vmax.f32 %v1473, %v1360
        %1475 = vmax.xlane.f32.xlu0 %v1474
        %v1476 = vpop.xlane.xlu0 %1475
        %v1477 = vmax.f32 %v1361, %v1362
        %v1478 = vmax.f32 %v1477, %v1363
        %1479 = vmax.xlane.f32.xlu0 %v1478
        %v1480 = vpop.xlane.xlu0 %1479
        %v1481 = vmax.f32 %v1364, %v1365
        %v1482 = vmax.f32 %v1481, %v1366
        %1483 = vmax.xlane.f32.xlu0 %v1482
        %v1484 = vpop.xlane.xlu0 %1483
        %v1485 = vmax.f32 %v1367, %v1368
        %v1486 = vmax.f32 %v1485, %v1369
        %1487 = vmax.xlane.f32.xlu0 %v1486
        %v1488 = vpop.xlane.xlu0 %1487
        %v1489 = vmax.f32 %v1370, %v1371
        %v1490 = vmax.f32 %v1489, %v1372
        %1491 = vmax.xlane.f32.xlu0 %v1490
        %v1492 = vpop.xlane.xlu0 %1491
        %v1493 = vmax.f32 %v1373, %v1374
        %v1494 = vmax.f32 %v1493, %v1375
        %1495 = vmax.xlane.f32.xlu0 %v1494
        %v1496 = vpop.xlane.xlu0 %1495
        %v1497 = vmax.f32 %v1376, %v1377
        %v1498 = vmax.f32 %v1497, %v1378
        %1499 = vmax.xlane.f32.xlu0 %v1498
        %v1500 = vpop.xlane.xlu0 %1499
        %v1501 = vmax.f32 %v1379, %v1380
        %v1502 = vmax.f32 %v1501, %v1381
        %1503 = vmax.xlane.f32.xlu0 %v1502
        %v1504 = vpop.xlane.xlu0 %1503
        %v1505 = vmax.f32 %v1382, %v1383
        %v1506 = vmax.f32 %v1505, %v1384
        %1507 = vmax.xlane.f32.xlu0 %v1506
        %v1508 = vpop.xlane.xlu0 %1507
        %v1509 = vmax.f32 %v1385, %v1386
        %v1510 = vmax.f32 %v1509, %v1387
        %1511 = vmax.xlane.f32.xlu0 %v1510
        %v1512 = vpop.xlane.xlu0 %1511
        %v1513 = vmax.f32 %v1388, %v1389
        %v1514 = vmax.f32 %v1513, %v1390
        %1515 = vmax.xlane.f32.xlu0 %v1514
        %v1516 = vpop.xlane.xlu0 %1515
        %v1517 = vmax.f32 %v1391, %v1392
        %v1518 = vmax.f32 %v1517, %v1393
        %1519 = vmax.xlane.f32.xlu0 %v1518
        %v1520 = vpop.xlane.xlu0 %1519
        %v1521 = vmax.f32 %v1394, %v1395
        %v1522 = vmax.f32 %v1521, %v1396
        %1523 = vmax.xlane.f32.xlu0 %v1522
        %v1524 = vpop.xlane.xlu0 %1523
        %v1525 = vmax.f32 %v1445, %v1464
        %v1526 = vmax.f32 %v1446, %v1468
        %v1527 = vmax.f32 %v1447, %v1472
        %v1528 = vmax.f32 %v1448, %v1476
        %v1529 = vmax.f32 %v1449, %v1480
        %v1530 = vmax.f32 %v1450, %v1484
        %v1531 = vmax.f32 %v1451, %v1488
        %v1532 = vmax.f32 %v1452, %v1492
        %v1533 = vmax.f32 %v1453, %v1496
        %v1534 = vmax.f32 %v1454, %v1500
        %v1535 = vmax.f32 %v1455, %v1504
        %v1536 = vmax.f32 %v1456, %v1508
        %v1537 = vmax.f32 %v1457, %v1512
        %v1538 = vmax.f32 %v1458, %v1516
        %v1539 = vmax.f32 %v1459, %v1520
        %v1540 = vmax.f32 %v1460, %v1524
        %v1541 = vsub.f32 %v1445, %v1525
        %v1542 = vsub.f32 %v1446, %v1526
        %v1543 = vsub.f32 %v1447, %v1527
        %v1544 = vsub.f32 %v1448, %v1528
        %v1545 = vsub.f32 %v1449, %v1529
        %v1546 = vsub.f32 %v1450, %v1530
        %v1547 = vsub.f32 %v1451, %v1531
        %v1548 = vsub.f32 %v1452, %v1532
        %v1549 = vsub.f32 %v1453, %v1533
        %v1550 = vsub.f32 %v1454, %v1534
        %v1551 = vsub.f32 %v1455, %v1535
        %v1552 = vsub.f32 %v1456, %v1536
        %v1553 = vsub.f32 %v1457, %v1537
        %v1554 = vsub.f32 %v1458, %v1538
        %v1555 = vsub.f32 %v1459, %v1539
        %v1556 = vsub.f32 %v1460, %v1540
        %v1557 = vmul.f32 %v1541, 1.442695
        %v1558 = vpow.pop %v1557
        %v1559 = vmul.f32 %v1542, 1.442695
        %v1560 = vpow.pop %v1559
        %v1561 = vmul.f32 %v1543, 1.442695
        %v1562 = vpow.pop %v1561
        %v1563 = vmul.f32 %v1544, 1.442695
        %v1564 = vpow.pop %v1563
        %v1565 = vmul.f32 %v1545, 1.442695
        %v1566 = vpow.pop %v1565
        %v1567 = vmul.f32 %v1546, 1.442695
        %v1568 = vpow.pop %v1567
        %v1569 = vmul.f32 %v1547, 1.442695
        %v1570 = vpow.pop %v1569
        %v1571 = vmul.f32 %v1548, 1.442695
        %v1572 = vpow.pop %v1571
        %v1573 = vmul.f32 %v1549, 1.442695
        %v1574 = vpow.pop %v1573
        %v1575 = vmul.f32 %v1550, 1.442695
        %v1576 = vpow.pop %v1575
        %v1577 = vmul.f32 %v1551, 1.442695
        %v1578 = vpow.pop %v1577
        %v1579 = vmul.f32 %v1552, 1.442695
        %v1580 = vpow.pop %v1579
        %v1581 = vmul.f32 %v1553, 1.442695
        %v1582 = vpow.pop %v1581
        %v1583 = vmul.f32 %v1554, 1.442695
        %v1584 = vpow.pop %v1583
        %v1585 = vmul.f32 %v1555, 1.442695
        %v1586 = vpow.pop %v1585
        %v1587 = vmul.f32 %v1556, 1.442695
        %v1588 = vpow.pop %v1587
        %1590 = vset.pattern.permute.xlu0 0
        %1591 = vperm.xlu0 %1590, %v1525
        %v1592 = vpop.permute.xlu0 %1591
        %1595 = vset.pattern.permute.xlu0 0
        %1596 = vperm.xlu0 %1595, %v1526
        %v1597 = vpop.permute.xlu0 %1596
        %1600 = vset.pattern.permute.xlu0 0
        %1601 = vperm.xlu0 %1600, %v1527
        %v1602 = vpop.permute.xlu0 %1601
        %1605 = vset.pattern.permute.xlu0 0
        %1606 = vperm.xlu0 %1605, %v1528
        %v1607 = vpop.permute.xlu0 %1606
        %1610 = vset.pattern.permute.xlu0 0
        %1611 = vperm.xlu0 %1610, %v1529
        %v1612 = vpop.permute.xlu0 %1611
        %1615 = vset.pattern.permute.xlu0 0
        %1616 = vperm.xlu0 %1615, %v1530
        %v1617 = vpop.permute.xlu0 %1616
        %1620 = vset.pattern.permute.xlu0 0
        %1621 = vperm.xlu0 %1620, %v1531
        %v1622 = vpop.permute.xlu0 %1621
        %1625 = vset.pattern.permute.xlu0 0
        %1626 = vperm.xlu0 %1625, %v1532
        %v1627 = vpop.permute.xlu0 %1626
        %1630 = vset.pattern.permute.xlu0 0
        %1631 = vperm.xlu0 %1630, %v1533
        %v1632 = vpop.permute.xlu0 %1631
        %1635 = vset.pattern.permute.xlu0 0
        %1636 = vperm.xlu0 %1635, %v1534
        %v1637 = vpop.permute.xlu0 %1636
        %1640 = vset.pattern.permute.xlu0 0
        %1641 = vperm.xlu0 %1640, %v1535
        %v1642 = vpop.permute.xlu0 %1641
        %1645 = vset.pattern.permute.xlu0 0
        %1646 = vperm.xlu0 %1645, %v1536
        %v1647 = vpop.permute.xlu0 %1646
        %1650 = vset.pattern.permute.xlu0 0
        %1651 = vperm.xlu0 %1650, %v1537
        %v1652 = vpop.permute.xlu0 %1651
        %1655 = vset.pattern.permute.xlu0 0
        %1656 = vperm.xlu0 %1655, %v1538
        %v1657 = vpop.permute.xlu0 %1656
        %1660 = vset.pattern.permute.xlu0 0
        %1661 = vperm.xlu0 %1660, %v1539
        %v1662 = vpop.permute.xlu0 %1661
        %1665 = vset.pattern.permute.xlu0 0
        %1666 = vperm.xlu0 %1665, %v1540
        %v1667 = vpop.permute.xlu0 %1666
        %v1669 = vsub.f32 %v1349, %v1592
        %v1670 = vsub.f32 %v1350, %v1592
        %v1671 = vsub.f32 %v1351, %v1592
        %v1672 = vsub.f32 %v1352, %v1597
        %v1673 = vsub.f32 %v1353, %v1597
        %v1674 = vsub.f32 %v1354, %v1597
        %v1675 = vsub.f32 %v1355, %v1602
        %v1676 = vsub.f32 %v1356, %v1602
        %v1677 = vsub.f32 %v1357, %v1602
        %v1678 = vsub.f32 %v1358, %v1607
        %v1679 = vsub.f32 %v1359, %v1607
        %v1680 = vsub.f32 %v1360, %v1607
        %v1681 = vsub.f32 %v1361, %v1612
        %v1682 = vsub.f32 %v1362, %v1612
        %v1683 = vsub.f32 %v1363, %v1612
        %v1684 = vsub.f32 %v1364, %v1617
        %v1685 = vsub.f32 %v1365, %v1617
        %v1686 = vsub.f32 %v1366, %v1617
        %v1687 = vsub.f32 %v1367, %v1622
        %v1688 = vsub.f32 %v1368, %v1622
        %v1689 = vsub.f32 %v1369, %v1622
        %v1690 = vsub.f32 %v1370, %v1627
        %v1691 = vsub.f32 %v1371, %v1627
        %v1692 = vsub.f32 %v1372, %v1627
        %v1693 = vsub.f32 %v1373, %v1632
        %v1694 = vsub.f32 %v1374, %v1632
        %v1695 = vsub.f32 %v1375, %v1632
        %v1696 = vsub.f32 %v1376, %v1637
        %v1697 = vsub.f32 %v1377, %v1637
        %v1698 = vsub.f32 %v1378, %v1637
        %v1699 = vsub.f32 %v1379, %v1642
        %v1700 = vsub.f32 %v1380, %v1642
        %v1701 = vsub.f32 %v1381, %v1642
        %v1702 = vsub.f32 %v1382, %v1647
        %v1703 = vsub.f32 %v1383, %v1647
        %v1704 = vsub.f32 %v1384, %v1647
        %v1705 = vsub.f32 %v1385, %v1652
        %v1706 = vsub.f32 %v1386, %v1652
        %v1707 = vsub.f32 %v1387, %v1652
        %v1708 = vsub.f32 %v1388, %v1657
        %v1709 = vsub.f32 %v1389, %v1657
        %v1710 = vsub.f32 %v1390, %v1657
        %v1711 = vsub.f32 %v1391, %v1662
        %v1712 = vsub.f32 %v1392, %v1662
        %v1713 = vsub.f32 %v1393, %v1662
        %v1714 = vsub.f32 %v1394, %v1667
        %v1715 = vsub.f32 %v1395, %v1667
        %v1716 = vsub.f32 %v1396, %v1667
        %v1717 = vmul.f32 %v1669, 1.442695
        %v1718 = vpow.pop %v1717
        %v1719 = vmul.f32 %v1670, 1.442695
        %v1720 = vpow.pop %v1719
        %v1721 = vmul.f32 %v1671, 1.442695
        %v1722 = vpow.pop %v1721
        %v1723 = vmul.f32 %v1672, 1.442695
        %v1724 = vpow.pop %v1723
        %v1725 = vmul.f32 %v1673, 1.442695
        %v1726 = vpow.pop %v1725
        %v1727 = vmul.f32 %v1674, 1.442695
        %v1728 = vpow.pop %v1727
        %v1729 = vmul.f32 %v1675, 1.442695
        %v1730 = vpow.pop %v1729
        %v1731 = vmul.f32 %v1676, 1.442695
        %v1732 = vpow.pop %v1731
        %v1733 = vmul.f32 %v1677, 1.442695
        %v1734 = vpow.pop %v1733
        %v1735 = vmul.f32 %v1678, 1.442695
        %v1736 = vpow.pop %v1735
        %v1737 = vmul.f32 %v1679, 1.442695
        %v1738 = vpow.pop %v1737
        %v1739 = vmul.f32 %v1680, 1.442695
        %v1740 = vpow.pop %v1739
        %v1741 = vmul.f32 %v1681, 1.442695
        %v1742 = vpow.pop %v1741
        %v1743 = vmul.f32 %v1682, 1.442695
        %v1744 = vpow.pop %v1743
        %v1745 = vmul.f32 %v1683, 1.442695
        %v1746 = vpow.pop %v1745
        %v1747 = vmul.f32 %v1684, 1.442695
        %v1748 = vpow.pop %v1747
        %v1749 = vmul.f32 %v1685, 1.442695
        %v1750 = vpow.pop %v1749
        %v1751 = vmul.f32 %v1686, 1.442695
        %v1752 = vpow.pop %v1751
        %v1753 = vmul.f32 %v1687, 1.442695
        %v1754 = vpow.pop %v1753
        %v1755 = vmul.f32 %v1688, 1.442695
        %v1756 = vpow.pop %v1755
        %v1757 = vmul.f32 %v1689, 1.442695
        %v1758 = vpow.pop %v1757
        %v1759 = vmul.f32 %v1690, 1.442695
        %v1760 = vpow.pop %v1759
        %v1761 = vmul.f32 %v1691, 1.442695
        %v1762 = vpow.pop %v1761
        %v1763 = vmul.f32 %v1692, 1.442695
        %v1764 = vpow.pop %v1763
        %v1765 = vmul.f32 %v1693, 1.442695
        %v1766 = vpow.pop %v1765
        %v1767 = vmul.f32 %v1694, 1.442695
        %v1768 = vpow.pop %v1767
        %v1769 = vmul.f32 %v1695, 1.442695
        %v1770 = vpow.pop %v1769
        %v1771 = vmul.f32 %v1696, 1.442695
        %v1772 = vpow.pop %v1771
        %v1773 = vmul.f32 %v1697, 1.442695
        %v1774 = vpow.pop %v1773
        %v1775 = vmul.f32 %v1698, 1.442695
        %v1776 = vpow.pop %v1775
        %v1777 = vmul.f32 %v1699, 1.442695
        %v1778 = vpow.pop %v1777
        %v1779 = vmul.f32 %v1700, 1.442695
        %v1780 = vpow.pop %v1779
        %v1781 = vmul.f32 %v1701, 1.442695
        %v1782 = vpow.pop %v1781
        %v1783 = vmul.f32 %v1702, 1.442695
        %v1784 = vpow.pop %v1783
        %v1785 = vmul.f32 %v1703, 1.442695
        %v1786 = vpow.pop %v1785
        %v1787 = vmul.f32 %v1704, 1.442695
        %v1788 = vpow.pop %v1787
        %v1789 = vmul.f32 %v1705, 1.442695
        %v1790 = vpow.pop %v1789
        %v1791 = vmul.f32 %v1706, 1.442695
        %v1792 = vpow.pop %v1791
        %v1793 = vmul.f32 %v1707, 1.442695
        %v1794 = vpow.pop %v1793
        %v1795 = vmul.f32 %v1708, 1.442695
        %v1796 = vpow.pop %v1795
        %v1797 = vmul.f32 %v1709, 1.442695
        %v1798 = vpow.pop %v1797
        %v1799 = vmul.f32 %v1710, 1.442695
        %v1800 = vpow.pop %v1799
        %v1801 = vmul.f32 %v1711, 1.442695
        %v1802 = vpow.pop %v1801
        %v1803 = vmul.f32 %v1712, 1.442695
        %v1804 = vpow.pop %v1803
        %v1805 = vmul.f32 %v1713, 1.442695
        %v1806 = vpow.pop %v1805
        %v1807 = vmul.f32 %v1714, 1.442695
        %v1808 = vpow.pop %v1807
        %v1809 = vmul.f32 %v1715, 1.442695
        %v1810 = vpow.pop %v1809
        %v1811 = vmul.f32 %v1716, 1.442695
        %v1812 = vpow.pop %v1811
        %v1813 = vld [vmem:[#allocation5] sm:$0xff]
        %v1814 = vld [vmem:[#allocation5 + $0x8] sm:$0xff]
        %v1815 = vld [vmem:[#allocation5 + $0x10] sm:$0xff]
        %v1816 = vld [vmem:[#allocation5 + $0x18] sm:$0xff]
        %v1817 = vld [vmem:[#allocation5 + $0x20] sm:$0xff]
        %v1818 = vld [vmem:[#allocation5 + $0x28] sm:$0xff]
        %v1819 = vld [vmem:[#allocation5 + $0x30] sm:$0xff]
        %v1820 = vld [vmem:[#allocation5 + $0x38] sm:$0xff]
        %v1821 = vld [vmem:[#allocation5 + $0x40] sm:$0xff]
        %v1822 = vld [vmem:[#allocation5 + $0x48] sm:$0xff]
        %v1823 = vld [vmem:[#allocation5 + $0x50] sm:$0xff]
        %v1824 = vld [vmem:[#allocation5 + $0x58] sm:$0xff]
        %v1825 = vld [vmem:[#allocation5 + $0x60] sm:$0xff]
        %v1826 = vld [vmem:[#allocation5 + $0x68] sm:$0xff]
        %v1827 = vld [vmem:[#allocation5 + $0x70] sm:$0xff]
        %v1828 = vld [vmem:[#allocation5 + $0x78] sm:$0xff]
        %v1829 = vmul.f32 %v1558, %v1813
        %v1830 = vmul.f32 %v1560, %v1814
        %v1831 = vmul.f32 %v1562, %v1815
        %v1832 = vmul.f32 %v1564, %v1816
        %v1833 = vmul.f32 %v1566, %v1817
        %v1834 = vmul.f32 %v1568, %v1818
        %v1835 = vmul.f32 %v1570, %v1819
        %v1836 = vmul.f32 %v1572, %v1820
        %v1837 = vmul.f32 %v1574, %v1821
        %v1838 = vmul.f32 %v1576, %v1822
        %v1839 = vmul.f32 %v1578, %v1823
        %v1840 = vmul.f32 %v1580, %v1824
        %v1841 = vmul.f32 %v1582, %v1825
        %v1842 = vmul.f32 %v1584, %v1826
        %v1843 = vmul.f32 %v1586, %v1827
        %v1844 = vmul.f32 %v1588, %v1828
        %v1845 = vadd.f32 %v1718, %v1720
        %v1846 = vadd.f32 %v1845, %v1722
        %1847 = vadd.xlane.f32.xlu0 %v1846
        %v1848 = vpop.xlane.xlu0 %1847
        %v1849 = vadd.f32 %v1724, %v1726
        %v1850 = vadd.f32 %v1849, %v1728
        %1851 = vadd.xlane.f32.xlu0 %v1850
        %v1852 = vpop.xlane.xlu0 %1851
        %v1853 = vadd.f32 %v1730, %v1732
        %v1854 = vadd.f32 %v1853, %v1734
        %1855 = vadd.xlane.f32.xlu0 %v1854
        %v1856 = vpop.xlane.xlu0 %1855
        %v1857 = vadd.f32 %v1736, %v1738
        %v1858 = vadd.f32 %v1857, %v1740
        %1859 = vadd.xlane.f32.xlu0 %v1858
        %v1860 = vpop.xlane.xlu0 %1859
        %v1861 = vadd.f32 %v1742, %v1744
        %v1862 = vadd.f32 %v1861, %v1746
        %1863 = vadd.xlane.f32.xlu0 %v1862
        %v1864 = vpop.xlane.xlu0 %1863
        %v1865 = vadd.f32 %v1748, %v1750
        %v1866 = vadd.f32 %v1865, %v1752
        %1867 = vadd.xlane.f32.xlu0 %v1866
        %v1868 = vpop.xlane.xlu0 %1867
        %v1869 = vadd.f32 %v1754, %v1756
        %v1870 = vadd.f32 %v1869, %v1758
        %1871 = vadd.xlane.f32.xlu0 %v1870
        %v1872 = vpop.xlane.xlu0 %1871
        %v1873 = vadd.f32 %v1760, %v1762
        %v1874 = vadd.f32 %v1873, %v1764
        %1875 = vadd.xlane.f32.xlu0 %v1874
        %v1876 = vpop.xlane.xlu0 %1875
        %v1877 = vadd.f32 %v1766, %v1768
        %v1878 = vadd.f32 %v1877, %v1770
        %1879 = vadd.xlane.f32.xlu0 %v1878
        %v1880 = vpop.xlane.xlu0 %1879
        %v1881 = vadd.f32 %v1772, %v1774
        %v1882 = vadd.f32 %v1881, %v1776
        %1883 = vadd.xlane.f32.xlu0 %v1882
        %v1884 = vpop.xlane.xlu0 %1883
        %v1885 = vadd.f32 %v1778, %v1780
        %v1886 = vadd.f32 %v1885, %v1782
        %1887 = vadd.xlane.f32.xlu0 %v1886
        %v1888 = vpop.xlane.xlu0 %1887
        %v1889 = vadd.f32 %v1784, %v1786
        %v1890 = vadd.f32 %v1889, %v1788
        %1891 = vadd.xlane.f32.xlu0 %v1890
        %v1892 = vpop.xlane.xlu0 %1891
        %v1893 = vadd.f32 %v1790, %v1792
        %v1894 = vadd.f32 %v1893, %v1794
        %1895 = vadd.xlane.f32.xlu0 %v1894
        %v1896 = vpop.xlane.xlu0 %1895
        %v1897 = vadd.f32 %v1796, %v1798
        %v1898 = vadd.f32 %v1897, %v1800
        %1899 = vadd.xlane.f32.xlu0 %v1898
        %v1900 = vpop.xlane.xlu0 %1899
        %v1901 = vadd.f32 %v1802, %v1804
        %v1902 = vadd.f32 %v1901, %v1806
        %1903 = vadd.xlane.f32.xlu0 %v1902
        %v1904 = vpop.xlane.xlu0 %1903
        %v1905 = vadd.f32 %v1808, %v1810
        %v1906 = vadd.f32 %v1905, %v1812
        %1907 = vadd.xlane.f32.xlu0 %v1906
        %v1908 = vpop.xlane.xlu0 %1907
        %v1909 = vadd.f32 %v1829, %v1848
        %v1910 = vadd.f32 %v1830, %v1852
        %v1911 = vadd.f32 %v1831, %v1856
        %v1912 = vadd.f32 %v1832, %v1860
        %v1913 = vadd.f32 %v1833, %v1864
        %v1914 = vadd.f32 %v1834, %v1868
        %v1915 = vadd.f32 %v1835, %v1872
        %v1916 = vadd.f32 %v1836, %v1876
        %v1917 = vadd.f32 %v1837, %v1880
        %v1918 = vadd.f32 %v1838, %v1884
        %v1919 = vadd.f32 %v1839, %v1888
        %v1920 = vadd.f32 %v1840, %v1892
        %v1921 = vadd.f32 %v1841, %v1896
        %v1922 = vadd.f32 %v1842, %v1900
        %v1923 = vadd.f32 %v1843, %v1904
        %v1924 = vadd.f32 %v1844, %v1908
        %vm1925 = vcmask 7168
        %1926 = vst.msk [vmem:[#allocation5] sm:$0xff] %vm1925, %v1909
        %1927 = vst.msk [vmem:[#allocation5 + $0x8] sm:$0xff] %vm1925, %v1910
        %1928 = vst.msk [vmem:[#allocation5 + $0x10] sm:$0xff] %vm1925, %v1911
        %1929 = vst.msk [vmem:[#allocation5 + $0x18] sm:$0xff] %vm1925, %v1912
        %1930 = vst.msk [vmem:[#allocation5 + $0x20] sm:$0xff] %vm1925, %v1913
        %1931 = vst.msk [vmem:[#allocation5 + $0x28] sm:$0xff] %vm1925, %v1914
        %1932 = vst.msk [vmem:[#allocation5 + $0x30] sm:$0xff] %vm1925, %v1915
        %1933 = vst.msk [vmem:[#allocation5 + $0x38] sm:$0xff] %vm1925, %v1916
        %1934 = vst.msk [vmem:[#allocation5 + $0x40] sm:$0xff] %vm1925, %v1917
        %1935 = vst.msk [vmem:[#allocation5 + $0x48] sm:$0xff] %vm1925, %v1918
        %1936 = vst.msk [vmem:[#allocation5 + $0x50] sm:$0xff] %vm1925, %v1919
        %1937 = vst.msk [vmem:[#allocation5 + $0x58] sm:$0xff] %vm1925, %v1920
        %1938 = vst.msk [vmem:[#allocation5 + $0x60] sm:$0xff] %vm1925, %v1921
        %1939 = vst.msk [vmem:[#allocation5 + $0x68] sm:$0xff] %vm1925, %v1922
        %1940 = vst.msk [vmem:[#allocation5 + $0x70] sm:$0xff] %vm1925, %v1923
        %1941 = vst.msk [vmem:[#allocation5 + $0x78] sm:$0xff] %vm1925, %v1924
        %v1942 = vld [vmem:[#allocation6] sm:$0xff]
        %v1943 = vld [vmem:[#allocation6 + $0x8] sm:$0xff]
        %v1944 = vld [vmem:[#allocation6 + $0x10] sm:$0xff]
        %v1945 = vld [vmem:[#allocation6 + $0x18] sm:$0xff]
        %v1946 = vld [vmem:[#allocation6 + $0x20] sm:$0xff]
        %v1947 = vld [vmem:[#allocation6 + $0x28] sm:$0xff]
        %v1948 = vld [vmem:[#allocation6 + $0x30] sm:$0xff]
        %v1949 = vld [vmem:[#allocation6 + $0x38] sm:$0xff]
        %v1950 = vld [vmem:[#allocation6 + $0x40] sm:$0xff]
        %v1951 = vld [vmem:[#allocation6 + $0x48] sm:$0xff]
        %v1952 = vld [vmem:[#allocation6 + $0x50] sm:$0xff]
        %v1953 = vld [vmem:[#allocation6 + $0x58] sm:$0xff]
        %v1954 = vld [vmem:[#allocation6 + $0x60] sm:$0xff]
        %v1955 = vld [vmem:[#allocation6 + $0x68] sm:$0xff]
        %v1956 = vld [vmem:[#allocation6 + $0x70] sm:$0xff]
        %v1957 = vld [vmem:[#allocation6 + $0x78] sm:$0xff]
        %v1958 = vmul.f32 %v1558, %v1942
        %v1959 = vmul.f32 %v1560, %v1943
        %v1960 = vmul.f32 %v1562, %v1944
        %v1961 = vmul.f32 %v1564, %v1945
        %v1962 = vmul.f32 %v1566, %v1946
        %v1963 = vmul.f32 %v1568, %v1947
        %v1964 = vmul.f32 %v1570, %v1948
        %v1965 = vmul.f32 %v1572, %v1949
        %v1966 = vmul.f32 %v1574, %v1950
        %v1967 = vmul.f32 %v1576, %v1951
        %v1968 = vmul.f32 %v1578, %v1952
        %v1969 = vmul.f32 %v1580, %v1953
        %v1970 = vmul.f32 %v1582, %v1954
        %v1971 = vmul.f32 %v1584, %v1955
        %v1972 = vmul.f32 %v1586, %v1956
        %v1973 = vmul.f32 %v1588, %v1957
        %v1974 = vsub.f32 %v1349, %v1397
        %v1975 = vsub.f32 %v1350, %v1398
        %v1976 = vsub.f32 %v1351, %v1399
        %v1977 = vsub.f32 %v1352, %v1400
        %v1978 = vsub.f32 %v1353, %v1401
        %v1979 = vsub.f32 %v1354, %v1402
        %v1980 = vsub.f32 %v1355, %v1403
        %v1981 = vsub.f32 %v1356, %v1404
        %v1982 = vsub.f32 %v1357, %v1405
        %v1983 = vsub.f32 %v1358, %v1406
        %v1984 = vsub.f32 %v1359, %v1407
        %v1985 = vsub.f32 %v1360, %v1408
        %v1986 = vsub.f32 %v1361, %v1409
        %v1987 = vsub.f32 %v1362, %v1410
        %v1988 = vsub.f32 %v1363, %v1411
        %v1989 = vsub.f32 %v1364, %v1412
        %v1990 = vsub.f32 %v1365, %v1413
        %v1991 = vsub.f32 %v1366, %v1414
        %v1992 = vsub.f32 %v1367, %v1415
        %v1993 = vsub.f32 %v1368, %v1416
        %v1994 = vsub.f32 %v1369, %v1417
        %v1995 = vsub.f32 %v1370, %v1418
        %v1996 = vsub.f32 %v1371, %v1419
        %v1997 = vsub.f32 %v1372, %v1420
        %v1998 = vsub.f32 %v1373, %v1421
        %v1999 = vsub.f32 %v1374, %v1422
        %v2000 = vsub.f32 %v1375, %v1423
        %v2001 = vsub.f32 %v1376, %v1424
        %v2002 = vsub.f32 %v1377, %v1425
        %v2003 = vsub.f32 %v1378, %v1426
        %v2004 = vsub.f32 %v1379, %v1427
        %v2005 = vsub.f32 %v1380, %v1428
        %v2006 = vsub.f32 %v1381, %v1429
        %v2007 = vsub.f32 %v1382, %v1430
        %v2008 = vsub.f32 %v1383, %v1431
        %v2009 = vsub.f32 %v1384, %v1432
        %v2010 = vsub.f32 %v1385, %v1433
        %v2011 = vsub.f32 %v1386, %v1434
        %v2012 = vsub.f32 %v1387, %v1435
        %v2013 = vsub.f32 %v1388, %v1436
        %v2014 = vsub.f32 %v1389, %v1437
        %v2015 = vsub.f32 %v1390, %v1438
        %v2016 = vsub.f32 %v1391, %v1439
        %v2017 = vsub.f32 %v1392, %v1440
        %v2018 = vsub.f32 %v1393, %v1441
        %v2019 = vsub.f32 %v1394, %v1442
        %v2020 = vsub.f32 %v1395, %v1443
        %v2021 = vsub.f32 %v1396, %v1444
        %v2022 = vmul.f32 %v1718, %v1974
        %v2023 = vmul.f32 %v1720, %v1975
        %v2024 = vmul.f32 %v1722, %v1976
        %v2025 = vmul.f32 %v1724, %v1977
        %v2026 = vmul.f32 %v1726, %v1978
        %v2027 = vmul.f32 %v1728, %v1979
        %v2028 = vmul.f32 %v1730, %v1980
        %v2029 = vmul.f32 %v1732, %v1981
        %v2030 = vmul.f32 %v1734, %v1982
        %v2031 = vmul.f32 %v1736, %v1983
        %v2032 = vmul.f32 %v1738, %v1984
        %v2033 = vmul.f32 %v1740, %v1985
        %v2034 = vmul.f32 %v1742, %v1986
        %v2035 = vmul.f32 %v1744, %v1987
        %v2036 = vmul.f32 %v1746, %v1988
        %v2037 = vmul.f32 %v1748, %v1989
        %v2038 = vmul.f32 %v1750, %v1990
        %v2039 = vmul.f32 %v1752, %v1991
        %v2040 = vmul.f32 %v1754, %v1992
        %v2041 = vmul.f32 %v1756, %v1993
        %v2042 = vmul.f32 %v1758, %v1994
        %v2043 = vmul.f32 %v1760, %v1995
        %v2044 = vmul.f32 %v1762, %v1996
        %v2045 = vmul.f32 %v1764, %v1997
        %v2046 = vmul.f32 %v1766, %v1998
        %v2047 = vmul.f32 %v1768, %v1999
        %v2048 = vmul.f32 %v1770, %v2000
        %v2049 = vmul.f32 %v1772, %v2001
        %v2050 = vmul.f32 %v1774, %v2002
        %v2051 = vmul.f32 %v1776, %v2003
        %v2052 = vmul.f32 %v1778, %v2004
        %v2053 = vmul.f32 %v1780, %v2005
        %v2054 = vmul.f32 %v1782, %v2006
        %v2055 = vmul.f32 %v1784, %v2007
        %v2056 = vmul.f32 %v1786, %v2008
        %v2057 = vmul.f32 %v1788, %v2009
        %v2058 = vmul.f32 %v1790, %v2010
        %v2059 = vmul.f32 %v1792, %v2011
        %v2060 = vmul.f32 %v1794, %v2012
        %v2061 = vmul.f32 %v1796, %v2013
        %v2062 = vmul.f32 %v1798, %v2014
        %v2063 = vmul.f32 %v1800, %v2015
        %v2064 = vmul.f32 %v1802, %v2016
        %v2065 = vmul.f32 %v1804, %v2017
        %v2066 = vmul.f32 %v1806, %v2018
        %v2067 = vmul.f32 %v1808, %v2019
        %v2068 = vmul.f32 %v1810, %v2020
        %v2069 = vmul.f32 %v1812, %v2021
        %v2070 = vadd.f32 %v2022, %v2023
        %v2071 = vadd.f32 %v2070, %v2024
        %2072 = vadd.xlane.f32.xlu0 %v2071
        %v2073 = vpop.xlane.xlu0 %2072
        %v2074 = vadd.f32 %v2025, %v2026
        %v2075 = vadd.f32 %v2074, %v2027
        %2076 = vadd.xlane.f32.xlu0 %v2075
        %v2077 = vpop.xlane.xlu0 %2076
        %v2078 = vadd.f32 %v2028, %v2029
        %v2079 = vadd.f32 %v2078, %v2030
        %2080 = vadd.xlane.f32.xlu0 %v2079
        %v2081 = vpop.xlane.xlu0 %2080
        %v2082 = vadd.f32 %v2031, %v2032
        %v2083 = vadd.f32 %v2082, %v2033
        %2084 = vadd.xlane.f32.xlu0 %v2083
        %v2085 = vpop.xlane.xlu0 %2084
        %v2086 = vadd.f32 %v2034, %v2035
        %v2087 = vadd.f32 %v2086, %v2036
        %2088 = vadd.xlane.f32.xlu0 %v2087
        %v2089 = vpop.xlane.xlu0 %2088
        %v2090 = vadd.f32 %v2037, %v2038
        %v2091 = vadd.f32 %v2090, %v2039
        %2092 = vadd.xlane.f32.xlu0 %v2091
        %v2093 = vpop.xlane.xlu0 %2092
        %v2094 = vadd.f32 %v2040, %v2041
        %v2095 = vadd.f32 %v2094, %v2042
        %2096 = vadd.xlane.f32.xlu0 %v2095
        %v2097 = vpop.xlane.xlu0 %2096
        %v2098 = vadd.f32 %v2043, %v2044
        %v2099 = vadd.f32 %v2098, %v2045
        %2100 = vadd.xlane.f32.xlu0 %v2099
        %v2101 = vpop.xlane.xlu0 %2100
        %v2102 = vadd.f32 %v2046, %v2047
        %v2103 = vadd.f32 %v2102, %v2048
        %2104 = vadd.xlane.f32.xlu0 %v2103
        %v2105 = vpop.xlane.xlu0 %2104
        %v2106 = vadd.f32 %v2049, %v2050
        %v2107 = vadd.f32 %v2106, %v2051
        %2108 = vadd.xlane.f32.xlu0 %v2107
        %v2109 = vpop.xlane.xlu0 %2108
        %v2110 = vadd.f32 %v2052, %v2053
        %v2111 = vadd.f32 %v2110, %v2054
        %2112 = vadd.xlane.f32.xlu0 %v2111
        %v2113 = vpop.xlane.xlu0 %2112
        %v2114 = vadd.f32 %v2055, %v2056
        %v2115 = vadd.f32 %v2114, %v2057
        %2116 = vadd.xlane.f32.xlu0 %v2115
        %v2117 = vpop.xlane.xlu0 %2116
        %v2118 = vadd.f32 %v2058, %v2059
        %v2119 = vadd.f32 %v2118, %v2060
        %2120 = vadd.xlane.f32.xlu0 %v2119
        %v2121 = vpop.xlane.xlu0 %2120
        %v2122 = vadd.f32 %v2061, %v2062
        %v2123 = vadd.f32 %v2122, %v2063
        %2124 = vadd.xlane.f32.xlu0 %v2123
        %v2125 = vpop.xlane.xlu0 %2124
        %v2126 = vadd.f32 %v2064, %v2065
        %v2127 = vadd.f32 %v2126, %v2066
        %2128 = vadd.xlane.f32.xlu0 %v2127
        %v2129 = vpop.xlane.xlu0 %2128
        %v2130 = vadd.f32 %v2067, %v2068
        %v2131 = vadd.f32 %v2130, %v2069
        %2132 = vadd.xlane.f32.xlu0 %v2131
        %v2133 = vpop.xlane.xlu0 %2132
        %v2134 = vadd.f32 %v1958, %v2073
        %v2135 = vadd.f32 %v1959, %v2077
        %v2136 = vadd.f32 %v1960, %v2081
        %v2137 = vadd.f32 %v1961, %v2085
        %v2138 = vadd.f32 %v1962, %v2089
        %v2139 = vadd.f32 %v1963, %v2093
        %v2140 = vadd.f32 %v1964, %v2097
        %v2141 = vadd.f32 %v1965, %v2101
        %v2142 = vadd.f32 %v1966, %v2105
        %v2143 = vadd.f32 %v1967, %v2109
        %v2144 = vadd.f32 %v1968, %v2113
        %v2145 = vadd.f32 %v1969, %v2117
        %v2146 = vadd.f32 %v1970, %v2121
        %v2147 = vadd.f32 %v1971, %v2125
        %v2148 = vadd.f32 %v1972, %v2129
        %v2149 = vadd.f32 %v1973, %v2133
        %2150 = vst.msk [vmem:[#allocation6] sm:$0xff] %vm1925, %v2134
        %2151 = vst.msk [vmem:[#allocation6 + $0x8] sm:$0xff] %vm1925, %v2135
        %2152 = vst.msk [vmem:[#allocation6 + $0x10] sm:$0xff] %vm1925, %v2136
        %2153 = vst.msk [vmem:[#allocation6 + $0x18] sm:$0xff] %vm1925, %v2137
        %2154 = vst.msk [vmem:[#allocation6 + $0x20] sm:$0xff] %vm1925, %v2138
        %2155 = vst.msk [vmem:[#allocation6 + $0x28] sm:$0xff] %vm1925, %v2139
        %2156 = vst.msk [vmem:[#allocation6 + $0x30] sm:$0xff] %vm1925, %v2140
        %2157 = vst.msk [vmem:[#allocation6 + $0x38] sm:$0xff] %vm1925, %v2141
        %2158 = vst.msk [vmem:[#allocation6 + $0x40] sm:$0xff] %vm1925, %v2142
        %2159 = vst.msk [vmem:[#allocation6 + $0x48] sm:$0xff] %vm1925, %v2143
        %2160 = vst.msk [vmem:[#allocation6 + $0x50] sm:$0xff] %vm1925, %v2144
        %2161 = vst.msk [vmem:[#allocation6 + $0x58] sm:$0xff] %vm1925, %v2145
        %2162 = vst.msk [vmem:[#allocation6 + $0x60] sm:$0xff] %vm1925, %v2146
        %2163 = vst.msk [vmem:[#allocation6 + $0x68] sm:$0xff] %vm1925, %v2147
        %2164 = vst.msk [vmem:[#allocation6 + $0x70] sm:$0xff] %vm1925, %v2148
        %2165 = vst.msk [vmem:[#allocation6 + $0x78] sm:$0xff] %vm1925, %v2149
        %2166 = vst.msk [vmem:[#allocation4] sm:$0xff] %vm1925, %v1525
        %2167 = vst.msk [vmem:[#allocation4 + $0x8] sm:$0xff] %vm1925, %v1526
        %2168 = vst.msk [vmem:[#allocation4 + $0x10] sm:$0xff] %vm1925, %v1527
        %2169 = vst.msk [vmem:[#allocation4 + $0x18] sm:$0xff] %vm1925, %v1528
        %2170 = vst.msk [vmem:[#allocation4 + $0x20] sm:$0xff] %vm1925, %v1529
        %2171 = vst.msk [vmem:[#allocation4 + $0x28] sm:$0xff] %vm1925, %v1530
        %2172 = vst.msk [vmem:[#allocation4 + $0x30] sm:$0xff] %vm1925, %v1531
        %2173 = vst.msk [vmem:[#allocation4 + $0x38] sm:$0xff] %vm1925, %v1532
        %2174 = vst.msk [vmem:[#allocation4 + $0x40] sm:$0xff] %vm1925, %v1533
        %2175 = vst.msk [vmem:[#allocation4 + $0x48] sm:$0xff] %vm1925, %v1534
        %2176 = vst.msk [vmem:[#allocation4 + $0x50] sm:$0xff] %vm1925, %v1535
        %2177 = vst.msk [vmem:[#allocation4 + $0x58] sm:$0xff] %vm1925, %v1536
        %2178 = vst.msk [vmem:[#allocation4 + $0x60] sm:$0xff] %vm1925, %v1537
        %2179 = vst.msk [vmem:[#allocation4 + $0x68] sm:$0xff] %vm1925, %v1538
        %2180 = vst.msk [vmem:[#allocation4 + $0x70] sm:$0xff] %vm1925, %v1539
        %2181 = vst.msk [vmem:[#allocation4 + $0x78] sm:$0xff] %vm1925, %v1540
        %v2182 = vld [vmem:[#allocation7] sm:$0xff]
        %v2183 = vld [vmem:[#allocation7 + $0x8] sm:$0xff]
        %v2184 = vld [vmem:[#allocation7 + $0x10] sm:$0xff]
        %v2185 = vld [vmem:[#allocation7 + $0x18] sm:$0xff]
        %v2186 = vld [vmem:[#allocation7 + $0x20] sm:$0xff]
        %v2187 = vld [vmem:[#allocation7 + $0x28] sm:$0xff]
        %v2188 = vld [vmem:[#allocation7 + $0x30] sm:$0xff]
        %v2189 = vld [vmem:[#allocation7 + $0x38] sm:$0xff]
        %v2190 = vld [vmem:[#allocation7 + $0x40] sm:$0xff]
        %v2191 = vld [vmem:[#allocation7 + $0x48] sm:$0xff]
        %v2192 = vld [vmem:[#allocation7 + $0x50] sm:$0xff]
        %v2193 = vld [vmem:[#allocation7 + $0x58] sm:$0xff]
        %v2194 = vld [vmem:[#allocation7 + $0x60] sm:$0xff]
        %v2195 = vld [vmem:[#allocation7 + $0x68] sm:$0xff]
        %v2196 = vld [vmem:[#allocation7 + $0x70] sm:$0xff]
        %v2197 = vld [vmem:[#allocation7 + $0x78] sm:$0xff]
        %v2198 = vmax.f32 %v1397, %v1398
        %v2199 = vmax.f32 %v2198, %v1399
        %2200 = vmax.xlane.f32.xlu0 %v2199
        %v2201 = vpop.xlane.xlu0 %2200
        %v2202 = vmax.f32 %v1400, %v1401
        %v2203 = vmax.f32 %v2202, %v1402
        %2204 = vmax.xlane.f32.xlu0 %v2203
        %v2205 = vpop.xlane.xlu0 %2204
        %v2206 = vmax.f32 %v1403, %v1404
        %v2207 = vmax.f32 %v2206, %v1405
        %2208 = vmax.xlane.f32.xlu0 %v2207
        %v2209 = vpop.xlane.xlu0 %2208
        %v2210 = vmax.f32 %v1406, %v1407
        %v2211 = vmax.f32 %v2210, %v1408
        %2212 = vmax.xlane.f32.xlu0 %v2211
        %v2213 = vpop.xlane.xlu0 %2212
        %v2214 = vmax.f32 %v1409, %v1410
        %v2215 = vmax.f32 %v2214, %v1411
        %2216 = vmax.xlane.f32.xlu0 %v2215
        %v2217 = vpop.xlane.xlu0 %2216
        %v2218 = vmax.f32 %v1412, %v1413
        %v2219 = vmax.f32 %v2218, %v1414
        %2220 = vmax.xlane.f32.xlu0 %v2219
        %v2221 = vpop.xlane.xlu0 %2220
        %v2222 = vmax.f32 %v1415, %v1416
        %v2223 = vmax.f32 %v2222, %v1417
        %2224 = vmax.xlane.f32.xlu0 %v2223
        %v2225 = vpop.xlane.xlu0 %2224
        %v2226 = vmax.f32 %v1418, %v1419
        %v2227 = vmax.f32 %v2226, %v1420
        %2228 = vmax.xlane.f32.xlu0 %v2227
        %v2229 = vpop.xlane.xlu0 %2228
        %v2230 = vmax.f32 %v1421, %v1422
        %v2231 = vmax.f32 %v2230, %v1423
        %2232 = vmax.xlane.f32.xlu0 %v2231
        %v2233 = vpop.xlane.xlu0 %2232
        %v2234 = vmax.f32 %v1424, %v1425
        %v2235 = vmax.f32 %v2234, %v1426
        %2236 = vmax.xlane.f32.xlu0 %v2235
        %v2237 = vpop.xlane.xlu0 %2236
        %v2238 = vmax.f32 %v1427, %v1428
        %v2239 = vmax.f32 %v2238, %v1429
        %2240 = vmax.xlane.f32.xlu0 %v2239
        %v2241 = vpop.xlane.xlu0 %2240
        %v2242 = vmax.f32 %v1430, %v1431
        %v2243 = vmax.f32 %v2242, %v1432
        %2244 = vmax.xlane.f32.xlu0 %v2243
        %v2245 = vpop.xlane.xlu0 %2244
        %v2246 = vmax.f32 %v1433, %v1434
        %v2247 = vmax.f32 %v2246, %v1435
        %2248 = vmax.xlane.f32.xlu0 %v2247
        %v2249 = vpop.xlane.xlu0 %2248
        %v2250 = vmax.f32 %v1436, %v1437
        %v2251 = vmax.f32 %v2250, %v1438
        %2252 = vmax.xlane.f32.xlu0 %v2251
        %v2253 = vpop.xlane.xlu0 %2252
        %v2254 = vmax.f32 %v1439, %v1440
        %v2255 = vmax.f32 %v2254, %v1441
        %2256 = vmax.xlane.f32.xlu0 %v2255
        %v2257 = vpop.xlane.xlu0 %2256
        %v2258 = vmax.f32 %v1442, %v1443
        %v2259 = vmax.f32 %v2258, %v1444
        %2260 = vmax.xlane.f32.xlu0 %v2259
        %v2261 = vpop.xlane.xlu0 %2260
        %v2262 = vmax.f32 %v2182, %v2201
        %v2263 = vmax.f32 %v2183, %v2205
        %v2264 = vmax.f32 %v2184, %v2209
        %v2265 = vmax.f32 %v2185, %v2213
        %v2266 = vmax.f32 %v2186, %v2217
        %v2267 = vmax.f32 %v2187, %v2221
        %v2268 = vmax.f32 %v2188, %v2225
        %v2269 = vmax.f32 %v2189, %v2229
        %v2270 = vmax.f32 %v2190, %v2233
        %v2271 = vmax.f32 %v2191, %v2237
        %v2272 = vmax.f32 %v2192, %v2241
        %v2273 = vmax.f32 %v2193, %v2245
        %v2274 = vmax.f32 %v2194, %v2249
        %v2275 = vmax.f32 %v2195, %v2253
        %v2276 = vmax.f32 %v2196, %v2257
        %v2277 = vmax.f32 %v2197, %v2261
        %v2278 = vsub.f32 %v2182, %v2262
        %v2279 = vsub.f32 %v2183, %v2263
        %v2280 = vsub.f32 %v2184, %v2264
        %v2281 = vsub.f32 %v2185, %v2265
        %v2282 = vsub.f32 %v2186, %v2266
        %v2283 = vsub.f32 %v2187, %v2267
        %v2284 = vsub.f32 %v2188, %v2268
        %v2285 = vsub.f32 %v2189, %v2269
        %v2286 = vsub.f32 %v2190, %v2270
        %v2287 = vsub.f32 %v2191, %v2271
        %v2288 = vsub.f32 %v2192, %v2272
        %v2289 = vsub.f32 %v2193, %v2273
        %v2290 = vsub.f32 %v2194, %v2274
        %v2291 = vsub.f32 %v2195, %v2275
        %v2292 = vsub.f32 %v2196, %v2276
        %v2293 = vsub.f32 %v2197, %v2277
        %v2294 = vmul.f32 %v2278, 1.442695
        %v2295 = vpow.pop %v2294
        %v2296 = vmul.f32 %v2279, 1.442695
        %v2297 = vpow.pop %v2296
        %v2298 = vmul.f32 %v2280, 1.442695
        %v2299 = vpow.pop %v2298
        %v2300 = vmul.f32 %v2281, 1.442695
        %v2301 = vpow.pop %v2300
        %v2302 = vmul.f32 %v2282, 1.442695
        %v2303 = vpow.pop %v2302
        %v2304 = vmul.f32 %v2283, 1.442695
        %v2305 = vpow.pop %v2304
        %v2306 = vmul.f32 %v2284, 1.442695
        %v2307 = vpow.pop %v2306
        %v2308 = vmul.f32 %v2285, 1.442695
        %v2309 = vpow.pop %v2308
        %v2310 = vmul.f32 %v2286, 1.442695
        %v2311 = vpow.pop %v2310
        %v2312 = vmul.f32 %v2287, 1.442695
        %v2313 = vpow.pop %v2312
        %v2314 = vmul.f32 %v2288, 1.442695
        %v2315 = vpow.pop %v2314
        %v2316 = vmul.f32 %v2289, 1.442695
        %v2317 = vpow.pop %v2316
        %v2318 = vmul.f32 %v2290, 1.442695
        %v2319 = vpow.pop %v2318
        %v2320 = vmul.f32 %v2291, 1.442695
        %v2321 = vpow.pop %v2320
        %v2322 = vmul.f32 %v2292, 1.442695
        %v2323 = vpow.pop %v2322
        %v2324 = vmul.f32 %v2293, 1.442695
        %v2325 = vpow.pop %v2324
        %v2326 = vld [vmem:[#allocation8] sm:$0xff]
        %v2327 = vld [vmem:[#allocation8 + $0x8] sm:$0xff]
        %v2328 = vld [vmem:[#allocation8 + $0x10] sm:$0xff]
        %v2329 = vld [vmem:[#allocation8 + $0x18] sm:$0xff]
        %v2330 = vld [vmem:[#allocation8 + $0x20] sm:$0xff]
        %v2331 = vld [vmem:[#allocation8 + $0x28] sm:$0xff]
        %v2332 = vld [vmem:[#allocation8 + $0x30] sm:$0xff]
        %v2333 = vld [vmem:[#allocation8 + $0x38] sm:$0xff]
        %v2334 = vld [vmem:[#allocation8 + $0x40] sm:$0xff]
        %v2335 = vld [vmem:[#allocation8 + $0x48] sm:$0xff]
        %v2336 = vld [vmem:[#allocation8 + $0x50] sm:$0xff]
        %v2337 = vld [vmem:[#allocation8 + $0x58] sm:$0xff]
        %v2338 = vld [vmem:[#allocation8 + $0x60] sm:$0xff]
        %v2339 = vld [vmem:[#allocation8 + $0x68] sm:$0xff]
        %v2340 = vld [vmem:[#allocation8 + $0x70] sm:$0xff]
        %v2341 = vld [vmem:[#allocation8 + $0x78] sm:$0xff]
        %v2342 = vmul.f32 %v2295, %v2326
        %v2343 = vmul.f32 %v2297, %v2327
        %v2344 = vmul.f32 %v2299, %v2328
        %v2345 = vmul.f32 %v2301, %v2329
        %v2346 = vmul.f32 %v2303, %v2330
        %v2347 = vmul.f32 %v2305, %v2331
        %v2348 = vmul.f32 %v2307, %v2332
        %v2349 = vmul.f32 %v2309, %v2333
        %v2350 = vmul.f32 %v2311, %v2334
        %v2351 = vmul.f32 %v2313, %v2335
        %v2352 = vmul.f32 %v2315, %v2336
        %v2353 = vmul.f32 %v2317, %v2337
        %v2354 = vmul.f32 %v2319, %v2338
        %v2355 = vmul.f32 %v2321, %v2339
        %v2356 = vmul.f32 %v2323, %v2340
        %v2357 = vmul.f32 %v2325, %v2341
        %2359 = vset.pattern.permute.xlu0 0
        %2360 = vperm.xlu0 %2359, %v2262
        %v2361 = vpop.permute.xlu0 %2360
        %2364 = vset.pattern.permute.xlu0 0
        %2365 = vperm.xlu0 %2364, %v2263
        %v2366 = vpop.permute.xlu0 %2365
        %2369 = vset.pattern.permute.xlu0 0
        %2370 = vperm.xlu0 %2369, %v2264
        %v2371 = vpop.permute.xlu0 %2370
        %2374 = vset.pattern.permute.xlu0 0
        %2375 = vperm.xlu0 %2374, %v2265
        %v2376 = vpop.permute.xlu0 %2375
        %2379 = vset.pattern.permute.xlu0 0
        %2380 = vperm.xlu0 %2379, %v2266
        %v2381 = vpop.permute.xlu0 %2380
        %2384 = vset.pattern.permute.xlu0 0
        %2385 = vperm.xlu0 %2384, %v2267
        %v2386 = vpop.permute.xlu0 %2385
        %2389 = vset.pattern.permute.xlu0 0
        %2390 = vperm.xlu0 %2389, %v2268
        %v2391 = vpop.permute.xlu0 %2390
        %2394 = vset.pattern.permute.xlu0 0
        %2395 = vperm.xlu0 %2394, %v2269
        %v2396 = vpop.permute.xlu0 %2395
        %2399 = vset.pattern.permute.xlu0 0
        %2400 = vperm.xlu0 %2399, %v2270
        %v2401 = vpop.permute.xlu0 %2400
        %2404 = vset.pattern.permute.xlu0 0
        %2405 = vperm.xlu0 %2404, %v2271
        %v2406 = vpop.permute.xlu0 %2405
        %2409 = vset.pattern.permute.xlu0 0
        %2410 = vperm.xlu0 %2409, %v2272
        %v2411 = vpop.permute.xlu0 %2410
        %2414 = vset.pattern.permute.xlu0 0
        %2415 = vperm.xlu0 %2414, %v2273
        %v2416 = vpop.permute.xlu0 %2415
        %2419 = vset.pattern.permute.xlu0 0
        %2420 = vperm.xlu0 %2419, %v2274
        %v2421 = vpop.permute.xlu0 %2420
        %2424 = vset.pattern.permute.xlu0 0
        %2425 = vperm.xlu0 %2424, %v2275
        %v2426 = vpop.permute.xlu0 %2425
        %2429 = vset.pattern.permute.xlu0 0
        %2430 = vperm.xlu0 %2429, %v2276
        %v2431 = vpop.permute.xlu0 %2430
        %2434 = vset.pattern.permute.xlu0 0
        %2435 = vperm.xlu0 %2434, %v2277
        %v2436 = vpop.permute.xlu0 %2435
        %v2438 = vsub.f32 %v1397, %v2361
        %v2439 = vsub.f32 %v1398, %v2361
        %v2440 = vsub.f32 %v1399, %v2361
        %v2441 = vsub.f32 %v1400, %v2366
        %v2442 = vsub.f32 %v1401, %v2366
        %v2443 = vsub.f32 %v1402, %v2366
        %v2444 = vsub.f32 %v1403, %v2371
        %v2445 = vsub.f32 %v1404, %v2371
        %v2446 = vsub.f32 %v1405, %v2371
        %v2447 = vsub.f32 %v1406, %v2376
        %v2448 = vsub.f32 %v1407, %v2376
        %v2449 = vsub.f32 %v1408, %v2376
        %v2450 = vsub.f32 %v1409, %v2381
        %v2451 = vsub.f32 %v1410, %v2381
        %v2452 = vsub.f32 %v1411, %v2381
        %v2453 = vsub.f32 %v1412, %v2386
        %v2454 = vsub.f32 %v1413, %v2386
        %v2455 = vsub.f32 %v1414, %v2386
        %v2456 = vsub.f32 %v1415, %v2391
        %v2457 = vsub.f32 %v1416, %v2391
        %v2458 = vsub.f32 %v1417, %v2391
        %v2459 = vsub.f32 %v1418, %v2396
        %v2460 = vsub.f32 %v1419, %v2396
        %v2461 = vsub.f32 %v1420, %v2396
        %v2462 = vsub.f32 %v1421, %v2401
        %v2463 = vsub.f32 %v1422, %v2401
        %v2464 = vsub.f32 %v1423, %v2401
        %v2465 = vsub.f32 %v1424, %v2406
        %v2466 = vsub.f32 %v1425, %v2406
        %v2467 = vsub.f32 %v1426, %v2406
        %v2468 = vsub.f32 %v1427, %v2411
        %v2469 = vsub.f32 %v1428, %v2411
        %v2470 = vsub.f32 %v1429, %v2411
        %v2471 = vsub.f32 %v1430, %v2416
        %v2472 = vsub.f32 %v1431, %v2416
        %v2473 = vsub.f32 %v1432, %v2416
        %v2474 = vsub.f32 %v1433, %v2421
        %v2475 = vsub.f32 %v1434, %v2421
        %v2476 = vsub.f32 %v1435, %v2421
        %v2477 = vsub.f32 %v1436, %v2426
        %v2478 = vsub.f32 %v1437, %v2426
        %v2479 = vsub.f32 %v1438, %v2426
        %v2480 = vsub.f32 %v1439, %v2431
        %v2481 = vsub.f32 %v1440, %v2431
        %v2482 = vsub.f32 %v1441, %v2431
        %v2483 = vsub.f32 %v1442, %v2436
        %v2484 = vsub.f32 %v1443, %v2436
        %v2485 = vsub.f32 %v1444, %v2436
        %v2486 = vmul.f32 %v2438, 1.442695
        %v2487 = vpow.pop %v2486
        %v2488 = vmul.f32 %v2439, 1.442695
        %v2489 = vpow.pop %v2488
        %v2490 = vmul.f32 %v2440, 1.442695
        %v2491 = vpow.pop %v2490
        %v2492 = vmul.f32 %v2441, 1.442695
        %v2493 = vpow.pop %v2492
        %v2494 = vmul.f32 %v2442, 1.442695
        %v2495 = vpow.pop %v2494
        %v2496 = vmul.f32 %v2443, 1.442695
        %v2497 = vpow.pop %v2496
        %v2498 = vmul.f32 %v2444, 1.442695
        %v2499 = vpow.pop %v2498
        %v2500 = vmul.f32 %v2445, 1.442695
        %v2501 = vpow.pop %v2500
        %v2502 = vmul.f32 %v2446, 1.442695
        %v2503 = vpow.pop %v2502
        %v2504 = vmul.f32 %v2447, 1.442695
        %v2505 = vpow.pop %v2504
        %v2506 = vmul.f32 %v2448, 1.442695
        %v2507 = vpow.pop %v2506
        %v2508 = vmul.f32 %v2449, 1.442695
        %v2509 = vpow.pop %v2508
        %v2510 = vmul.f32 %v2450, 1.442695
        %v2511 = vpow.pop %v2510
        %v2512 = vmul.f32 %v2451, 1.442695
        %v2513 = vpow.pop %v2512
        %v2514 = vmul.f32 %v2452, 1.442695
        %v2515 = vpow.pop %v2514
        %v2516 = vmul.f32 %v2453, 1.442695
        %v2517 = vpow.pop %v2516
        %v2518 = vmul.f32 %v2454, 1.442695
        %v2519 = vpow.pop %v2518
        %v2520 = vmul.f32 %v2455, 1.442695
        %v2521 = vpow.pop %v2520
        %v2522 = vmul.f32 %v2456, 1.442695
        %v2523 = vpow.pop %v2522
        %v2524 = vmul.f32 %v2457, 1.442695
        %v2525 = vpow.pop %v2524
        %v2526 = vmul.f32 %v2458, 1.442695
        %v2527 = vpow.pop %v2526
        %v2528 = vmul.f32 %v2459, 1.442695
        %v2529 = vpow.pop %v2528
        %v2530 = vmul.f32 %v2460, 1.442695
        %v2531 = vpow.pop %v2530
        %v2532 = vmul.f32 %v2461, 1.442695
        %v2533 = vpow.pop %v2532
        %v2534 = vmul.f32 %v2462, 1.442695
        %v2535 = vpow.pop %v2534
        %v2536 = vmul.f32 %v2463, 1.442695
        %v2537 = vpow.pop %v2536
        %v2538 = vmul.f32 %v2464, 1.442695
        %v2539 = vpow.pop %v2538
        %v2540 = vmul.f32 %v2465, 1.442695
        %v2541 = vpow.pop %v2540
        %v2542 = vmul.f32 %v2466, 1.442695
        %v2543 = vpow.pop %v2542
        %v2544 = vmul.f32 %v2467, 1.442695
        %v2545 = vpow.pop %v2544
        %v2546 = vmul.f32 %v2468, 1.442695
        %v2547 = vpow.pop %v2546
        %v2548 = vmul.f32 %v2469, 1.442695
        %v2549 = vpow.pop %v2548
        %v2550 = vmul.f32 %v2470, 1.442695
        %v2551 = vpow.pop %v2550
        %v2552 = vmul.f32 %v2471, 1.442695
        %v2553 = vpow.pop %v2552
        %v2554 = vmul.f32 %v2472, 1.442695
        %v2555 = vpow.pop %v2554
        %v2556 = vmul.f32 %v2473, 1.442695
        %v2557 = vpow.pop %v2556
        %v2558 = vmul.f32 %v2474, 1.442695
        %v2559 = vpow.pop %v2558
        %v2560 = vmul.f32 %v2475, 1.442695
        %v2561 = vpow.pop %v2560
        %v2562 = vmul.f32 %v2476, 1.442695
        %v2563 = vpow.pop %v2562
        %v2564 = vmul.f32 %v2477, 1.442695
        %v2565 = vpow.pop %v2564
        %v2566 = vmul.f32 %v2478, 1.442695
        %v2567 = vpow.pop %v2566
        %v2568 = vmul.f32 %v2479, 1.442695
        %v2569 = vpow.pop %v2568
        %v2570 = vmul.f32 %v2480, 1.442695
        %v2571 = vpow.pop %v2570
        %v2572 = vmul.f32 %v2481, 1.442695
        %v2573 = vpow.pop %v2572
        %v2574 = vmul.f32 %v2482, 1.442695
        %v2575 = vpow.pop %v2574
        %v2576 = vmul.f32 %v2483, 1.442695
        %v2577 = vpow.pop %v2576
        %v2578 = vmul.f32 %v2484, 1.442695
        %v2579 = vpow.pop %v2578
        %v2580 = vmul.f32 %v2485, 1.442695
        %v2581 = vpow.pop %v2580
        %v2582 = vadd.f32 %v2487, %v2489
        %v2583 = vadd.f32 %v2582, %v2491
        %2584 = vadd.xlane.f32.xlu0 %v2583
        %v2585 = vpop.xlane.xlu0 %2584
        %v2586 = vadd.f32 %v2493, %v2495
        %v2587 = vadd.f32 %v2586, %v2497
        %2588 = vadd.xlane.f32.xlu0 %v2587
        %v2589 = vpop.xlane.xlu0 %2588
        %v2590 = vadd.f32 %v2499, %v2501
        %v2591 = vadd.f32 %v2590, %v2503
        %2592 = vadd.xlane.f32.xlu0 %v2591
        %v2593 = vpop.xlane.xlu0 %2592
        %v2594 = vadd.f32 %v2505, %v2507
        %v2595 = vadd.f32 %v2594, %v2509
        %2596 = vadd.xlane.f32.xlu0 %v2595
        %v2597 = vpop.xlane.xlu0 %2596
        %v2598 = vadd.f32 %v2511, %v2513
        %v2599 = vadd.f32 %v2598, %v2515
        %2600 = vadd.xlane.f32.xlu0 %v2599
        %v2601 = vpop.xlane.xlu0 %2600
        %v2602 = vadd.f32 %v2517, %v2519
        %v2603 = vadd.f32 %v2602, %v2521
        %2604 = vadd.xlane.f32.xlu0 %v2603
        %v2605 = vpop.xlane.xlu0 %2604
        %v2606 = vadd.f32 %v2523, %v2525
        %v2607 = vadd.f32 %v2606, %v2527
        %2608 = vadd.xlane.f32.xlu0 %v2607
        %v2609 = vpop.xlane.xlu0 %2608
        %v2610 = vadd.f32 %v2529, %v2531
        %v2611 = vadd.f32 %v2610, %v2533
        %2612 = vadd.xlane.f32.xlu0 %v2611
        %v2613 = vpop.xlane.xlu0 %2612
        %v2614 = vadd.f32 %v2535, %v2537
        %v2615 = vadd.f32 %v2614, %v2539
        %2616 = vadd.xlane.f32.xlu0 %v2615
        %v2617 = vpop.xlane.xlu0 %2616
        %v2618 = vadd.f32 %v2541, %v2543
        %v2619 = vadd.f32 %v2618, %v2545
        %2620 = vadd.xlane.f32.xlu0 %v2619
        %v2621 = vpop.xlane.xlu0 %2620
        %v2622 = vadd.f32 %v2547, %v2549
        %v2623 = vadd.f32 %v2622, %v2551
        %2624 = vadd.xlane.f32.xlu0 %v2623
        %v2625 = vpop.xlane.xlu0 %2624
        %v2626 = vadd.f32 %v2553, %v2555
        %v2627 = vadd.f32 %v2626, %v2557
        %2628 = vadd.xlane.f32.xlu0 %v2627
        %v2629 = vpop.xlane.xlu0 %2628
        %v2630 = vadd.f32 %v2559, %v2561
        %v2631 = vadd.f32 %v2630, %v2563
        %2632 = vadd.xlane.f32.xlu0 %v2631
        %v2633 = vpop.xlane.xlu0 %2632
        %v2634 = vadd.f32 %v2565, %v2567
        %v2635 = vadd.f32 %v2634, %v2569
        %2636 = vadd.xlane.f32.xlu0 %v2635
        %v2637 = vpop.xlane.xlu0 %2636
        %v2638 = vadd.f32 %v2571, %v2573
        %v2639 = vadd.f32 %v2638, %v2575
        %2640 = vadd.xlane.f32.xlu0 %v2639
        %v2641 = vpop.xlane.xlu0 %2640
        %v2642 = vadd.f32 %v2577, %v2579
        %v2643 = vadd.f32 %v2642, %v2581
        %2644 = vadd.xlane.f32.xlu0 %v2643
        %v2645 = vpop.xlane.xlu0 %2644
        %v2646 = vadd.f32 %v2342, %v2585
        %v2647 = vadd.f32 %v2343, %v2589
        %v2648 = vadd.f32 %v2344, %v2593
        %v2649 = vadd.f32 %v2345, %v2597
        %v2650 = vadd.f32 %v2346, %v2601
        %v2651 = vadd.f32 %v2347, %v2605
        %v2652 = vadd.f32 %v2348, %v2609
        %v2653 = vadd.f32 %v2349, %v2613
        %v2654 = vadd.f32 %v2350, %v2617
        %v2655 = vadd.f32 %v2351, %v2621
        %v2656 = vadd.f32 %v2352, %v2625
        %v2657 = vadd.f32 %v2353, %v2629
        %v2658 = vadd.f32 %v2354, %v2633
        %v2659 = vadd.f32 %v2355, %v2637
        %v2660 = vadd.f32 %v2356, %v2641
        %v2661 = vadd.f32 %v2357, %v2645
        %2662 = vst.msk [vmem:[#allocation8] sm:$0xff] %vm1925, %v2646
        %2663 = vst.msk [vmem:[#allocation8 + $0x8] sm:$0xff] %vm1925, %v2647
        %2664 = vst.msk [vmem:[#allocation8 + $0x10] sm:$0xff] %vm1925, %v2648
        %2665 = vst.msk [vmem:[#allocation8 + $0x18] sm:$0xff] %vm1925, %v2649
        %2666 = vst.msk [vmem:[#allocation8 + $0x20] sm:$0xff] %vm1925, %v2650
        %2667 = vst.msk [vmem:[#allocation8 + $0x28] sm:$0xff] %vm1925, %v2651
        %2668 = vst.msk [vmem:[#allocation8 + $0x30] sm:$0xff] %vm1925, %v2652
        %2669 = vst.msk [vmem:[#allocation8 + $0x38] sm:$0xff] %vm1925, %v2653
        %2670 = vst.msk [vmem:[#allocation8 + $0x40] sm:$0xff] %vm1925, %v2654
        %2671 = vst.msk [vmem:[#allocation8 + $0x48] sm:$0xff] %vm1925, %v2655
        %2672 = vst.msk [vmem:[#allocation8 + $0x50] sm:$0xff] %vm1925, %v2656
        %2673 = vst.msk [vmem:[#allocation8 + $0x58] sm:$0xff] %vm1925, %v2657
        %2674 = vst.msk [vmem:[#allocation8 + $0x60] sm:$0xff] %vm1925, %v2658
        %2675 = vst.msk [vmem:[#allocation8 + $0x68] sm:$0xff] %vm1925, %v2659
        %2676 = vst.msk [vmem:[#allocation8 + $0x70] sm:$0xff] %vm1925, %v2660
        %2677 = vst.msk [vmem:[#allocation8 + $0x78] sm:$0xff] %vm1925, %v2661
        %2678 = vst.msk [vmem:[#allocation7] sm:$0xff] %vm1925, %v2262
        %2679 = vst.msk [vmem:[#allocation7 + $0x8] sm:$0xff] %vm1925, %v2263
        %2680 = vst.msk [vmem:[#allocation7 + $0x10] sm:$0xff] %vm1925, %v2264
        %2681 = vst.msk [vmem:[#allocation7 + $0x18] sm:$0xff] %vm1925, %v2265
        %2682 = vst.msk [vmem:[#allocation7 + $0x20] sm:$0xff] %vm1925, %v2266
        %2683 = vst.msk [vmem:[#allocation7 + $0x28] sm:$0xff] %vm1925, %v2267
        %2684 = vst.msk [vmem:[#allocation7 + $0x30] sm:$0xff] %vm1925, %v2268
        %2685 = vst.msk [vmem:[#allocation7 + $0x38] sm:$0xff] %vm1925, %v2269
        %2686 = vst.msk [vmem:[#allocation7 + $0x40] sm:$0xff] %vm1925, %v2270
        %2687 = vst.msk [vmem:[#allocation7 + $0x48] sm:$0xff] %vm1925, %v2271
        %2688 = vst.msk [vmem:[#allocation7 + $0x50] sm:$0xff] %vm1925, %v2272
        %2689 = vst.msk [vmem:[#allocation7 + $0x58] sm:$0xff] %vm1925, %v2273
        %2690 = vst.msk [vmem:[#allocation7 + $0x60] sm:$0xff] %vm1925, %v2274
        %2691 = vst.msk [vmem:[#allocation7 + $0x68] sm:$0xff] %vm1925, %v2275
        %2692 = vst.msk [vmem:[#allocation7 + $0x70] sm:$0xff] %vm1925, %v2276
        %2693 = vst.msk [vmem:[#allocation7 + $0x78] sm:$0xff] %vm1925, %v2277
        // Predicated region
        $region57: #{tpu_custom_call.1} parent=35 // pred_check
          %p2694 = pneg %p320
        $region58: #{tpu_custom_call.1} parent=35 // pred_check_branch
          %2696 = sbr.rel (%p2694) target = $region60
        $region59: #{tpu_custom_call.1} parent=35 // pred_region
          %v2697 = vld [vmem:[#allocation5] sm:$0xff]
          %v2698 = vld [vmem:[#allocation5 + $0x8] sm:$0xff]
          %v2699 = vld [vmem:[#allocation5 + $0x10] sm:$0xff]
          %v2700 = vld [vmem:[#allocation5 + $0x18] sm:$0xff]
          %v2701 = vld [vmem:[#allocation5 + $0x20] sm:$0xff]
          %v2702 = vld [vmem:[#allocation5 + $0x28] sm:$0xff]
          %v2703 = vld [vmem:[#allocation5 + $0x30] sm:$0xff]
          %v2704 = vld [vmem:[#allocation5 + $0x38] sm:$0xff]
          %v2705 = vld [vmem:[#allocation5 + $0x40] sm:$0xff]
          %v2706 = vld [vmem:[#allocation5 + $0x48] sm:$0xff]
          %v2707 = vld [vmem:[#allocation5 + $0x50] sm:$0xff]
          %v2708 = vld [vmem:[#allocation5 + $0x58] sm:$0xff]
          %v2709 = vld [vmem:[#allocation5 + $0x60] sm:$0xff]
          %v2710 = vld [vmem:[#allocation5 + $0x68] sm:$0xff]
          %v2711 = vld [vmem:[#allocation5 + $0x70] sm:$0xff]
          %v2712 = vld [vmem:[#allocation5 + $0x78] sm:$0xff]
          %v2713 = vld [vmem:[#allocation6] sm:$0xff]
          %v2714 = vld [vmem:[#allocation6 + $0x8] sm:$0xff]
          %v2715 = vld [vmem:[#allocation6 + $0x10] sm:$0xff]
          %v2716 = vld [vmem:[#allocation6 + $0x18] sm:$0xff]
          %v2717 = vld [vmem:[#allocation6 + $0x20] sm:$0xff]
          %v2718 = vld [vmem:[#allocation6 + $0x28] sm:$0xff]
          %v2719 = vld [vmem:[#allocation6 + $0x30] sm:$0xff]
          %v2720 = vld [vmem:[#allocation6 + $0x38] sm:$0xff]
          %v2721 = vld [vmem:[#allocation6 + $0x40] sm:$0xff]
          %v2722 = vld [vmem:[#allocation6 + $0x48] sm:$0xff]
          %v2723 = vld [vmem:[#allocation6 + $0x50] sm:$0xff]
          %v2724 = vld [vmem:[#allocation6 + $0x58] sm:$0xff]
          %v2725 = vld [vmem:[#allocation6 + $0x60] sm:$0xff]
          %v2726 = vld [vmem:[#allocation6 + $0x68] sm:$0xff]
          %v2727 = vld [vmem:[#allocation6 + $0x70] sm:$0xff]
          %v2728 = vld [vmem:[#allocation6 + $0x78] sm:$0xff]
          %v2729 = vrcp.pop %v2697
          %v2730 = vmul.f32 %v2713, %v2729
          %v2731 = vrcp.pop %v2698
          %v2732 = vmul.f32 %v2714, %v2731
          %v2733 = vrcp.pop %v2699
          %v2734 = vmul.f32 %v2715, %v2733
          %v2735 = vrcp.pop %v2700
          %v2736 = vmul.f32 %v2716, %v2735
          %v2737 = vrcp.pop %v2701
          %v2738 = vmul.f32 %v2717, %v2737
          %v2739 = vrcp.pop %v2702
          %v2740 = vmul.f32 %v2718, %v2739
          %v2741 = vrcp.pop %v2703
          %v2742 = vmul.f32 %v2719, %v2741
          %v2743 = vrcp.pop %v2704
          %v2744 = vmul.f32 %v2720, %v2743
          %v2745 = vrcp.pop %v2705
          %v2746 = vmul.f32 %v2721, %v2745
          %v2747 = vrcp.pop %v2706
          %v2748 = vmul.f32 %v2722, %v2747
          %v2749 = vrcp.pop %v2707
          %v2750 = vmul.f32 %v2723, %v2749
          %v2751 = vrcp.pop %v2708
          %v2752 = vmul.f32 %v2724, %v2751
          %v2753 = vrcp.pop %v2709
          %v2754 = vmul.f32 %v2725, %v2753
          %v2755 = vrcp.pop %v2710
          %v2756 = vmul.f32 %v2726, %v2755
          %v2757 = vrcp.pop %v2711
          %v2758 = vmul.f32 %v2727, %v2757
          %v2759 = vrcp.pop %v2712
          %v2760 = vmul.f32 %v2728, %v2759
          %v2761 = vld [vmem:[#allocation4] sm:$0xff]
          %v2762 = vld [vmem:[#allocation4 + $0x8] sm:$0xff]
          %v2763 = vld [vmem:[#allocation4 + $0x10] sm:$0xff]
          %v2764 = vld [vmem:[#allocation4 + $0x18] sm:$0xff]
          %v2765 = vld [vmem:[#allocation4 + $0x20] sm:$0xff]
          %v2766 = vld [vmem:[#allocation4 + $0x28] sm:$0xff]
          %v2767 = vld [vmem:[#allocation4 + $0x30] sm:$0xff]
          %v2768 = vld [vmem:[#allocation4 + $0x38] sm:$0xff]
          %v2769 = vld [vmem:[#allocation4 + $0x40] sm:$0xff]
          %v2770 = vld [vmem:[#allocation4 + $0x48] sm:$0xff]
          %v2771 = vld [vmem:[#allocation4 + $0x50] sm:$0xff]
          %v2772 = vld [vmem:[#allocation4 + $0x58] sm:$0xff]
          %v2773 = vld [vmem:[#allocation4 + $0x60] sm:$0xff]
          %v2774 = vld [vmem:[#allocation4 + $0x68] sm:$0xff]
          %v2775 = vld [vmem:[#allocation4 + $0x70] sm:$0xff]
          %v2776 = vld [vmem:[#allocation4 + $0x78] sm:$0xff]
          %v2777 = vlog2.pop %v2697
          %v2778 = vmul.f32 %v2777, 0.6931472
          %v2779 = vlog2.pop %v2698
          %v2780 = vmul.f32 %v2779, 0.6931472
          %v2781 = vlog2.pop %v2699
          %v2782 = vmul.f32 %v2781, 0.6931472
          %v2783 = vlog2.pop %v2700
          %v2784 = vmul.f32 %v2783, 0.6931472
          %v2785 = vlog2.pop %v2701
          %v2786 = vmul.f32 %v2785, 0.6931472
          %v2787 = vlog2.pop %v2702
          %v2788 = vmul.f32 %v2787, 0.6931472
          %v2789 = vlog2.pop %v2703
          %v2790 = vmul.f32 %v2789, 0.6931472
          %v2791 = vlog2.pop %v2704
          %v2792 = vmul.f32 %v2791, 0.6931472
          %v2793 = vlog2.pop %v2705
          %v2794 = vmul.f32 %v2793, 0.6931472
          %v2795 = vlog2.pop %v2706
          %v2796 = vmul.f32 %v2795, 0.6931472
          %v2797 = vlog2.pop %v2707
          %v2798 = vmul.f32 %v2797, 0.6931472
          %v2799 = vlog2.pop %v2708
          %v2800 = vmul.f32 %v2799, 0.6931472
          %v2801 = vlog2.pop %v2709
          %v2802 = vmul.f32 %v2801, 0.6931472
          %v2803 = vlog2.pop %v2710
          %v2804 = vmul.f32 %v2803, 0.6931472
          %v2805 = vlog2.pop %v2711
          %v2806 = vmul.f32 %v2805, 0.6931472
          %v2807 = vlog2.pop %v2712
          %v2808 = vmul.f32 %v2807, 0.6931472
          %v2809 = vadd.f32 %v2761, %v2778
          %v2810 = vadd.f32 %v2762, %v2780
          %v2811 = vadd.f32 %v2763, %v2782
          %v2812 = vadd.f32 %v2764, %v2784
          %v2813 = vadd.f32 %v2765, %v2786
          %v2814 = vadd.f32 %v2766, %v2788
          %v2815 = vadd.f32 %v2767, %v2790
          %v2816 = vadd.f32 %v2768, %v2792
          %v2817 = vadd.f32 %v2769, %v2794
          %v2818 = vadd.f32 %v2770, %v2796
          %v2819 = vadd.f32 %v2771, %v2798
          %v2820 = vadd.f32 %v2772, %v2800
          %v2821 = vadd.f32 %v2773, %v2802
          %v2822 = vadd.f32 %v2774, %v2804
          %v2823 = vadd.f32 %v2775, %v2806
          %v2824 = vadd.f32 %v2776, %v2808
          %v2825 = vsub.f32 %v2730, %v2809
          %v2826 = vsub.f32 %v2732, %v2810
          %v2827 = vsub.f32 %v2734, %v2811
          %v2828 = vsub.f32 %v2736, %v2812
          %v2829 = vsub.f32 %v2738, %v2813
          %v2830 = vsub.f32 %v2740, %v2814
          %v2831 = vsub.f32 %v2742, %v2815
          %v2832 = vsub.f32 %v2744, %v2816
          %v2833 = vsub.f32 %v2746, %v2817
          %v2834 = vsub.f32 %v2748, %v2818
          %v2835 = vsub.f32 %v2750, %v2819
          %v2836 = vsub.f32 %v2752, %v2820
          %v2837 = vsub.f32 %v2754, %v2821
          %v2838 = vsub.f32 %v2756, %v2822
          %v2839 = vsub.f32 %v2758, %v2823
          %v2840 = vsub.f32 %v2760, %v2824
          %v2841 = vld [vmem:[#allocation7] sm:$0xff]
          %v2842 = vld [vmem:[#allocation7 + $0x8] sm:$0xff]
          %v2843 = vld [vmem:[#allocation7 + $0x10] sm:$0xff]
          %v2844 = vld [vmem:[#allocation7 + $0x18] sm:$0xff]
          %v2845 = vld [vmem:[#allocation7 + $0x20] sm:$0xff]
          %v2846 = vld [vmem:[#allocation7 + $0x28] sm:$0xff]
          %v2847 = vld [vmem:[#allocation7 + $0x30] sm:$0xff]
          %v2848 = vld [vmem:[#allocation7 + $0x38] sm:$0xff]
          %v2849 = vld [vmem:[#allocation7 + $0x40] sm:$0xff]
          %v2850 = vld [vmem:[#allocation7 + $0x48] sm:$0xff]
          %v2851 = vld [vmem:[#allocation7 + $0x50] sm:$0xff]
          %v2852 = vld [vmem:[#allocation7 + $0x58] sm:$0xff]
          %v2853 = vld [vmem:[#allocation7 + $0x60] sm:$0xff]
          %v2854 = vld [vmem:[#allocation7 + $0x68] sm:$0xff]
          %v2855 = vld [vmem:[#allocation7 + $0x70] sm:$0xff]
          %v2856 = vld [vmem:[#allocation7 + $0x78] sm:$0xff]
          %v2857 = vld [vmem:[#allocation8] sm:$0xff]
          %v2858 = vld [vmem:[#allocation8 + $0x8] sm:$0xff]
          %v2859 = vld [vmem:[#allocation8 + $0x10] sm:$0xff]
          %v2860 = vld [vmem:[#allocation8 + $0x18] sm:$0xff]
          %v2861 = vld [vmem:[#allocation8 + $0x20] sm:$0xff]
          %v2862 = vld [vmem:[#allocation8 + $0x28] sm:$0xff]
          %v2863 = vld [vmem:[#allocation8 + $0x30] sm:$0xff]
          %v2864 = vld [vmem:[#allocation8 + $0x38] sm:$0xff]
          %v2865 = vld [vmem:[#allocation8 + $0x40] sm:$0xff]
          %v2866 = vld [vmem:[#allocation8 + $0x48] sm:$0xff]
          %v2867 = vld [vmem:[#allocation8 + $0x50] sm:$0xff]
          %v2868 = vld [vmem:[#allocation8 + $0x58] sm:$0xff]
          %v2869 = vld [vmem:[#allocation8 + $0x60] sm:$0xff]
          %v2870 = vld [vmem:[#allocation8 + $0x68] sm:$0xff]
          %v2871 = vld [vmem:[#allocation8 + $0x70] sm:$0xff]
          %v2872 = vld [vmem:[#allocation8 + $0x78] sm:$0xff]
          %v2873 = vlog2.pop %v2857
          %v2874 = vmul.f32 %v2873, 0.6931472
          %v2875 = vlog2.pop %v2858
          %v2876 = vmul.f32 %v2875, 0.6931472
          %v2877 = vlog2.pop %v2859
          %v2878 = vmul.f32 %v2877, 0.6931472
          %v2879 = vlog2.pop %v2860
          %v2880 = vmul.f32 %v2879, 0.6931472
          %v2881 = vlog2.pop %v2861
          %v2882 = vmul.f32 %v2881, 0.6931472
          %v2883 = vlog2.pop %v2862
          %v2884 = vmul.f32 %v2883, 0.6931472
          %v2885 = vlog2.pop %v2863
          %v2886 = vmul.f32 %v2885, 0.6931472
          %v2887 = vlog2.pop %v2864
          %v2888 = vmul.f32 %v2887, 0.6931472
          %v2889 = vlog2.pop %v2865
          %v2890 = vmul.f32 %v2889, 0.6931472
          %v2891 = vlog2.pop %v2866
          %v2892 = vmul.f32 %v2891, 0.6931472
          %v2893 = vlog2.pop %v2867
          %v2894 = vmul.f32 %v2893, 0.6931472
          %v2895 = vlog2.pop %v2868
          %v2896 = vmul.f32 %v2895, 0.6931472
          %v2897 = vlog2.pop %v2869
          %v2898 = vmul.f32 %v2897, 0.6931472
          %v2899 = vlog2.pop %v2870
          %v2900 = vmul.f32 %v2899, 0.6931472
          %v2901 = vlog2.pop %v2871
          %v2902 = vmul.f32 %v2901, 0.6931472
          %v2903 = vlog2.pop %v2872
          %v2904 = vmul.f32 %v2903, 0.6931472
          %v2905 = vadd.f32 %v2841, %v2874
          %v2906 = vadd.f32 %v2842, %v2876
          %v2907 = vadd.f32 %v2843, %v2878
          %v2908 = vadd.f32 %v2844, %v2880
          %v2909 = vadd.f32 %v2845, %v2882
          %v2910 = vadd.f32 %v2846, %v2884
          %v2911 = vadd.f32 %v2847, %v2886
          %v2912 = vadd.f32 %v2848, %v2888
          %v2913 = vadd.f32 %v2849, %v2890
          %v2914 = vadd.f32 %v2850, %v2892
          %v2915 = vadd.f32 %v2851, %v2894
          %v2916 = vadd.f32 %v2852, %v2896
          %v2917 = vadd.f32 %v2853, %v2898
          %v2918 = vadd.f32 %v2854, %v2900
          %v2919 = vadd.f32 %v2855, %v2902
          %v2920 = vadd.f32 %v2856, %v2904
          %v2921 = vadd.f32 %v2825, %v2905
          %v2922 = vadd.f32 %v2826, %v2906
          %v2923 = vadd.f32 %v2827, %v2907
          %v2924 = vadd.f32 %v2828, %v2908
          %v2925 = vadd.f32 %v2829, %v2909
          %v2926 = vadd.f32 %v2830, %v2910
          %v2927 = vadd.f32 %v2831, %v2911
          %v2928 = vadd.f32 %v2832, %v2912
          %v2929 = vadd.f32 %v2833, %v2913
          %v2930 = vadd.f32 %v2834, %v2914
          %v2931 = vadd.f32 %v2835, %v2915
          %v2932 = vadd.f32 %v2836, %v2916
          %v2933 = vadd.f32 %v2837, %v2917
          %v2934 = vadd.f32 %v2838, %v2918
          %v2935 = vadd.f32 %v2839, %v2919
          %v2936 = vadd.f32 %v2840, %v2920
          %2937 = vst.msk [vmem:[%s318] sm:$0xff] %vm1925, %v2921
          %2938 = vst.msk [vmem:[%s318 + $0x8] sm:$0xff] %vm1925, %v2922
          %2939 = vst.msk [vmem:[%s318 + $0x10] sm:$0xff] %vm1925, %v2923
          %2940 = vst.msk [vmem:[%s318 + $0x18] sm:$0xff] %vm1925, %v2924
          %2941 = vst.msk [vmem:[%s318 + $0x20] sm:$0xff] %vm1925, %v2925
          %2942 = vst.msk [vmem:[%s318 + $0x28] sm:$0xff] %vm1925, %v2926
          %2943 = vst.msk [vmem:[%s318 + $0x30] sm:$0xff] %vm1925, %v2927
          %2944 = vst.msk [vmem:[%s318 + $0x38] sm:$0xff] %vm1925, %v2928
          %2945 = vst.msk [vmem:[%s318 + $0x40] sm:$0xff] %vm1925, %v2929
          %2946 = vst.msk [vmem:[%s318 + $0x48] sm:$0xff] %vm1925, %v2930
          %2947 = vst.msk [vmem:[%s318 + $0x50] sm:$0xff] %vm1925, %v2931
          %2948 = vst.msk [vmem:[%s318 + $0x58] sm:$0xff] %vm1925, %v2932
          %2949 = vst.msk [vmem:[%s318 + $0x60] sm:$0xff] %vm1925, %v2933
          %2950 = vst.msk [vmem:[%s318 + $0x68] sm:$0xff] %vm1925, %v2934
          %2951 = vst.msk [vmem:[%s318 + $0x70] sm:$0xff] %vm1925, %v2935
          %2952 = vst.msk [vmem:[%s318 + $0x78] sm:$0xff] %vm1925, %v2936
        $region60: #{tpu_custom_call.1} parent=35 // pred_fallthru
          _
        %s2953 = smul.u32 16, %s26
        %p2954 = scmp.lt.s32.totalorder %s2953, 31
        %s2955 = scalar_select %p2954, %s2953, 31
        %s2956 = smul.addr %s2955, 8
        %s2957 = scalar_lea.vmem %s4, %s2956
        // Predicated region
        $region61: #{tpu_custom_call.1} parent=35 // pred_check
          %p2958 = pneg %p156
        $region62: #{tpu_custom_call.1} parent=35 // pred_check_branch
          %2960 = sbr.rel (%p2958) target = $region64
        $region63: #{tpu_custom_call.1} parent=35 // pred_region
          %s2961 = smul.u32 16, %s26
        $region64: #{tpu_custom_call.1} parent=35 // pred_fallthru
          _
      $region36: #{tpu_custom_call.1} parent=5 // pred_fallthru
        _
      %p2962 = scmp.le.s32.totalorder 2, %s17
      // Predicated region
      $region65: #{tpu_custom_call.1} parent=5 // pred_check
        %p2963 = pneg %p2962
      $region66: #{tpu_custom_call.1} parent=5 // pred_check_branch
        %2965 = sbr.rel (%p2963) target = $region68
      $region67: #{tpu_custom_call.1} parent=5 // pred_region
        %s2966 = ssub.s32 %s17, 2
        // Predicated region
        $region69: #{tpu_custom_call.1} parent=67 // pred_check
          %p2967 = pneg %p162
        $region70: #{tpu_custom_call.1} parent=67 // pred_check_branch
          %2969 = sbr.rel (%p2967) target = $region72
        $region71: #{tpu_custom_call.1} parent=67 // pred_region
          %s2970 = smul.u32 16, %s28
          %p2971 = scmp.lt.s32.totalorder %s2970, 31
          %s2972 = scalar_select %p2971, %s2970, 31
          %s2973 = smul.addr %s2972, 8
          %s2974 = scalar_lea.vmem %s4, %s2973
        $region72: #{tpu_custom_call.1} parent=67 // pred_fallthru
          _
      $region68: #{tpu_custom_call.1} parent=5 // pred_fallthru
        _
    $region6: #{tpu_custom_call.1} parent=1 // loop_footer
      %s21 = sadd.s32 1, %s17
    $region7: #{tpu_custom_call.1} parent=1 // loop_footer_branch
      %16 = sbr.rel target = $region3
    $region8: #{tpu_custom_call.1} parent=1 // loop_exit
      _
    %2975 = vsyncpa [#allocation10], 1
    %s2976 = scalar_lea.sflag [#allocation10], 1
    %2977 = vsyncpa %s2976, 1
    %2978 = vsyncpa [#allocation12], 1
    %s2979 = scalar_lea.sflag [#allocation12], 1
    %2980 = vsyncpa %s2979, 1
    %2981 = vsyncpa [#allocation15], 1

</llo_original>
